<compile_context>
chip_gen: v7x
topology: tpu7x:2x2x1
jax: 0.10.0
libtpu: 0.0.40
codegen_flags: <defaults>
</compile_context>

<pallas_src>
import math
import functools

import jax
import jax.numpy as jnp
from jax import lax
from jax.experimental import pallas as pl
from jax.experimental.pallas import tpu as pltpu


# ---------------------------------------------------------------------------
# Fused decoder-layer kernel (one pallas_call per layer, one grid step per batch)
# ---------------------------------------------------------------------------
def _layer_norm_f32(z, g, b, eps=1e-5):
    mu = jnp.mean(z, axis=-1, keepdims=True)
    zc = z - mu
    var = jnp.mean(zc * zc, axis=-1, keepdims=True)
    return zc * lax.rsqrt(var + eps) * g + b


def _decoder_layer_kernel(
    x_ref, mem_ref, mask_ref,
    sa_wqkv_ref, sa_bqkv_ref, sa_wo_ref, sa_bo_ref,
    ca_wq_ref, ca_bq_ref, ca_wkv_ref, ca_bkv_ref, ca_wo_ref, ca_bo_ref,
    ff_w1_ref, ff_b1_ref, ff_w2_ref, ff_b2_ref,
    ln1_g_ref, ln1_b_ref, ln2_g_ref, ln2_b_ref, ln3_g_ref, ln3_b_ref,
    o_ref, *, nhead):

    D = x_ref.shape[-1]
    H = nhead
    Dh = D // H
    scale = 1.0 / math.sqrt(Dh)

    x = x_ref[...].astype(jnp.float32)        # (S, D)
    mem = mem_ref[...].astype(jnp.float32)    # (Sm, D)
    mask = mask_ref[...].astype(jnp.float32)  # (S, S) additive mask

    def mha(q, k, v, wo, bo, attn_mask):
        """q: (Sq, D), k/v: (Sk, D). Per-head attention; head-concat is folded
        into the out-projection (sum of oh @ wo[h*Dh:(h+1)*Dh, :])."""
        out = None
        for h in range(H):                    # H is small & static -> unrolled
            lo, hi = h * Dh, (h + 1) * Dh
            qh = q[:, lo:hi] * scale          # scale Q, not the score tensor
            kh = k[:, lo:hi]
            vh = v[:, lo:hi]
            s = lax.dot_general(qh, kh, (((1,), (1,)), ((), ())),
                                preferred_element_type=jnp.float32)  # (Sq, Sk)
            if attn_mask is not None:
                s = s + attn_mask
            m = jnp.max(s, axis=-1, keepdims=True)
            p = jnp.exp(s - m)
            denom = jnp.sum(p, axis=-1, keepdims=True)
            p = p * pl.reciprocal(denom, approx=True)
            oh = jnp.dot(p, vh, preferred_element_type=jnp.float32)  # (Sq, Dh)
            contrib = jnp.dot(oh, wo[lo:hi, :],
                              preferred_element_type=jnp.float32)    # (Sq, D)
            out = contrib if out is None else out + contrib
        return out + bo                       # bo: (1, D) broadcasts

    # ---- self-attention (masked) + residual + LayerNorm (post-norm) ----
    qkv = jnp.dot(x, sa_wqkv_ref[...],
                  preferred_element_type=jnp.float32) + sa_bqkv_ref[...]
    sa = mha(qkv[:, 0:D], qkv[:, D:2 * D], qkv[:, 2 * D:3 * D],
             sa_wo_ref[...], sa_bo_ref[...], mask)
    x1 = _layer_norm_f32(x + sa, ln1_g_ref[...], ln1_b_ref[...])

    # ---- cross-attention to memory (no mask -> no mask DMA / add) ----
    q = jnp.dot(x1, ca_wq_ref[...],
                preferred_element_type=jnp.float32) + ca_bq_ref[...]
    kv = jnp.dot(mem, ca_wkv_ref[...],
                 preferred_element_type=jnp.float32) + ca_bkv_ref[...]
    ca = mha(q, kv[:, 0:D], kv[:, D:2 * D],
             ca_wo_ref[...], ca_bo_ref[...], None)
    x2 = _layer_norm_f32(x1 + ca, ln2_g_ref[...], ln2_b_ref[...])

    # ---- feed-forward (relu) + residual + LayerNorm ----
    hdn = jnp.maximum(
        jnp.dot(x2, ff_w1_ref[...], preferred_element_type=jnp.float32)
        + ff_b1_ref[...], 0.0)
    y = jnp.dot(hdn, ff_w2_ref[...],
                preferred_element_type=jnp.float32) + ff_b2_ref[...]
    x3 = _layer_norm_f32(x2 + y, ln3_g_ref[...], ln3_b_ref[...])

    o_ref[...] = x3.astype(o_ref.dtype)


def pallas_decoder_layer(x, memory, mask, p, nhead):
    """x: (B, S, D), memory: (B, Sm, D), mask: (S, S) additive f32."""
    B, S, D = x.shape
    Sm = memory.shape[1]

    inputs = (
        x, memory, mask.astype(jnp.float32),
        p["sa_wqkv"], p["sa_bqkv"].reshape(1, -1),
        p["sa_wo"], p["sa_bo"].reshape(1, -1),
        p["ca_wq"], p["ca_bq"].reshape(1, -1),
        p["ca_wkv"], p["ca_bkv"].reshape(1, -1),
        p["ca_wo"], p["ca_bo"].reshape(1, -1),
        p["ff_w1"], p["ff_b1"].reshape(1, -1),
        p["ff_w2"], p["ff_b2"].reshape(1, -1),
        p["ln1_g"].reshape(1, -1), p["ln1_b"].reshape(1, -1),
        p["ln2_g"].reshape(1, -1), p["ln2_b"].reshape(1, -1),
        p["ln3_g"].reshape(1, -1), p["ln3_b"].reshape(1, -1),
    )

    def full2d(shape):
        # Weights/biases: same block every grid step (index 0,0) -> no re-DMA.
        return pl.BlockSpec(shape, lambda b: (0, 0))

    in_specs = [
        pl.BlockSpec((None, S, D), lambda b: (b, 0, 0)),    # x (per-batch)
        pl.BlockSpec((None, Sm, D), lambda b: (b, 0, 0)),   # memory (per-batch)
        full2d((S, S)),                                     # additive mask
    ] + [full2d(a.shape) for a in inputs[3:]]

    kernel = functools.partial(_decoder_layer_kernel, nhead=nhead)
    return pl.pallas_call(
        kernel,
        out_shape=jax.ShapeDtypeStruct((B, S, D), x.dtype),
        grid_spec=pltpu.PrefetchScalarGridSpec(
            num_scalar_prefetch=0,
            grid=(B,),
            in_specs=in_specs,
            out_specs=pl.BlockSpec((None, S, D), lambda b: (b, 0, 0)),
        ),
        compiler_params=pltpu.CompilerParams(
            dimension_semantics=("parallel",)
        ),
    )(*inputs)


# ---------------------------------------------------------------------------
# Parameter init (fused QKV / KV weights)
# ---------------------------------------------------------------------------
def init_layer_params(key, d_model, dff):
    ks = jax.random.split(key, 16)
    it = iter(range(16))

    def w(fan_in, fan_out):
        return jax.random.normal(ks[next(it)], (fan_in, fan_out),
                                 jnp.float32) * (1.0 / math.sqrt(fan_in))

    def b(n):
        return jax.random.normal(ks[next(it)], (n,), jnp.float32) * 0.02

    p = {}
    p["sa_wqkv"] = w(d_model, 3 * d_model); p["sa_bqkv"] = b(3 * d_model)
    p["sa_wo"] = w(d_model, d_model);       p["sa_bo"] = b(d_model)
    p["ca_wq"] = w(d_model, d_model);       p["ca_bq"] = b(d_model)
    p["ca_wkv"] = w(d_model, 2 * d_model);  p["ca_bkv"] = b(2 * d_model)
    p["ca_wo"] = w(d_model, d_model);       p["ca_bo"] = b(d_model)
    p["ff_w1"] = w(d_model, dff);           p["ff_b1"] = b(dff)
    p["ff_w2"] = w(dff, d_model);           p["ff_b2"] = b(d_model)
    for n in ("ln1", "ln2", "ln3"):
        p[n + "_g"] = jnp.ones((d_model,), jnp.float32)
        p[n + "_b"] = jnp.zeros((d_model,), jnp.float32)
    return p


# ---------------------------------------------------------------------------
# Pure-JAX reference (same math, HIGHEST precision) for verification
# ---------------------------------------------------------------------------
def ref_decoder_layer(p, x, memory, mask, nhead):
    B, S, D = x.shape
    H = nhead
    Dh = D // H
    scale = 1.0 / math.sqrt(Dh)
    hp = lax.Precision.HIGHEST

    def ln(z, g, b):
        mu = jnp.mean(z, axis=-1, keepdims=True)
        zc = z - mu
        var = jnp.mean(zc * zc, axis=-1, keepdims=True)
        return zc * lax.rsqrt(var + 1e-5) * g + b

    def dense(z, wmat, bvec):
        return jnp.einsum("bsd,de->bse", z, wmat, precision=hp) + bvec

    def mha(q, k, v, wo, bo, m):
        Sq, Sk = q.shape[1], k.shape[1]
        qh = q.reshape(B, Sq, H, Dh).transpose(0, 2, 1, 3)
        kh = k.reshape(B, Sk, H, Dh).transpose(0, 2, 1, 3)
        vh = v.reshape(B, Sk, H, Dh).transpose(0, 2, 1, 3)
        s = jnp.einsum("bhqd,bhkd->bhqk", qh, kh, precision=hp) * scale
        if m is not None:
            s = s + m[None, None]
        pmat = jax.nn.softmax(s, axis=-1)
        o = jnp.einsum("bhqk,bhkd->bhqd", pmat, vh, precision=hp)
        o = o.transpose(0, 2, 1, 3).reshape(B, Sq, D)
        return jnp.einsum("bsd,de->bse", o, wo, precision=hp) + bo

    qkv = dense(x, p["sa_wqkv"], p["sa_bqkv"])
    sa = mha(qkv[..., :D], qkv[..., D:2 * D], qkv[..., 2 * D:],
             p["sa_wo"], p["sa_bo"], mask)
    x1 = ln(x + sa, p["ln1_g"], p["ln1_b"])

    q = dense(x1, p["ca_wq"], p["ca_bq"])
    kv = dense(memory, p["ca_wkv"], p["ca_bkv"])
    ca = mha(q, kv[..., :D], kv[..., D:], p["ca_wo"], p["ca_bo"], None)
    x2 = ln(x1 + ca, p["ln2_g"], p["ln2_b"])

    h = jnp.maximum(dense(x2, p["ff_w1"], p["ff_b1"]), 0.0)
    y = dense(h, p["ff_w2"], p["ff_b2"])
    return ln(x2 + y, p["ln3_g"], p["ln3_b"])


# ---------------------------------------------------------------------------
# Decoder stack (mirrors the PyTorch TransformerDecoder forward, eval mode)
# ---------------------------------------------------------------------------
class TransformerDecoderPallas:
    def __init__(self, d_model, nhead, n_layer, dim_feedforward, key):
        assert d_model % nhead == 0
        self.nhead = nhead
        keys = jax.random.split(key, n_layer)
        self.layers = [init_layer_params(k, d_model, dim_feedforward)
                       for k in keys]

    def __call__(self, inputs, mask, memory):
        x = inputs
        for p in self.layers:
            x = pallas_decoder_layer(x, memory, mask, p, self.nhead)
        return x

    def reference(self, inputs, mask, memory):
        x = inputs
        for p in self.layers:
            x = ref_decoder_layer(p, x, memory, mask, self.nhead)
        return x


if __name__ == "__main__":
    B, S, Sm = 2, 8, 8
    d_model, nhead, n_layer = 32, 4, 2
    dim_feedforward = 4 * d_model  # 128 -> lane-dense FFN hidden

    key = jax.random.PRNGKey(0)
    k_model, k_in, k_mem = jax.random.split(key, 3)

    model = TransformerDecoderPallas(d_model, nhead, n_layer,
                                     dim_feedforward, k_model)

    inputs = jax.random.normal(k_in, (B, S, d_model), jnp.float32)
    memory = jax.random.normal(k_mem, (B, Sm, d_model), jnp.float32)
    # causal additive mask for self-attention: 0 keep, -1e9 masked
    causal = jnp.tril(jnp.ones((S, S), dtype=jnp.bool_))
    mask = jnp.where(causal, 0.0, -1e9).astype(jnp.float32)

    out = model(inputs, mask, memory)
    out = jax.block_until_ready(out)

    ref = model.reference(inputs, mask, memory)
    assert out.shape == (B, S, d_model)
    max_diff = float(jnp.max(jnp.abs(out - ref)))
    assert jnp.allclose(out, ref, atol=1e-2, rtol=1e-2), \
        f"mismatch vs reference, max abs diff {max_diff}"

    print("KERNEL_OK")
</pallas_src>

<mosaic_0001>
module attributes {stable_mosaic.version = 11 : i64} {
  func.func @_decoder_layer_kernel(%arg0: i32, %arg1: memref<1x8x32xf32, #tpu.memory_space<vmem>>, %arg2: memref<1x8x32xf32, #tpu.memory_space<vmem>>, %arg3: memref<8x8xf32, #tpu.memory_space<vmem>>, %arg4: memref<32x96xf32, #tpu.memory_space<vmem>>, %arg5: memref<1x96xf32, #tpu.memory_space<vmem>>, %arg6: memref<32x32xf32, #tpu.memory_space<vmem>>, %arg7: memref<1x32xf32, #tpu.memory_space<vmem>>, %arg8: memref<32x32xf32, #tpu.memory_space<vmem>>, %arg9: memref<1x32xf32, #tpu.memory_space<vmem>>, %arg10: memref<32x64xf32, #tpu.memory_space<vmem>>, %arg11: memref<1x64xf32, #tpu.memory_space<vmem>>, %arg12: memref<32x32xf32, #tpu.memory_space<vmem>>, %arg13: memref<1x32xf32, #tpu.memory_space<vmem>>, %arg14: memref<32x128xf32, #tpu.memory_space<vmem>>, %arg15: memref<1x128xf32, #tpu.memory_space<vmem>>, %arg16: memref<128x32xf32, #tpu.memory_space<vmem>>, %arg17: memref<1x32xf32, #tpu.memory_space<vmem>>, %arg18: memref<1x32xf32, #tpu.memory_space<vmem>>, %arg19: memref<1x32xf32, #tpu.memory_space<vmem>>, %arg20: memref<1x32xf32, #tpu.memory_space<vmem>>, %arg21: memref<1x32xf32, #tpu.memory_space<vmem>>, %arg22: memref<1x32xf32, #tpu.memory_space<vmem>>, %arg23: memref<1x32xf32, #tpu.memory_space<vmem>>, %arg24: memref<1x8x32xf32, #tpu.memory_space<vmem>>) attributes {dimension_semantics = [#tpu.dimension_semantics<parallel>], iteration_bounds = array<i64: 2>, scalar_prefetch = 0 : i64, scratch_operands = 0 : i64, tpu.core_type = #tpu.core_type<tc>, window_params = [{transform_indices = @transform_0, window_bounds = array<i64: 1, 8, 32>}, {transform_indices = @transform_1, window_bounds = array<i64: 1, 8, 32>}, {pipeline_mode = #tpu.pipeline_mode<synchronous>, transform_indices = @transform_2, window_bounds = array<i64: 8, 8>}, {pipeline_mode = #tpu.pipeline_mode<synchronous>, transform_indices = @transform_3, window_bounds = array<i64: 32, 96>}, {pipeline_mode = #tpu.pipeline_mode<synchronous>, transform_indices = @transform_4, window_bounds = array<i64: 1, 96>}, {pipeline_mode = #tpu.pipeline_mode<synchronous>, transform_indices = @transform_5, window_bounds = array<i64: 32, 32>}, {pipeline_mode = #tpu.pipeline_mode<synchronous>, transform_indices = @transform_6, window_bounds = array<i64: 1, 32>}, {pipeline_mode = #tpu.pipeline_mode<synchronous>, transform_indices = @transform_7, window_bounds = array<i64: 32, 32>}, {pipeline_mode = #tpu.pipeline_mode<synchronous>, transform_indices = @transform_8, window_bounds = array<i64: 1, 32>}, {pipeline_mode = #tpu.pipeline_mode<synchronous>, transform_indices = @transform_9, window_bounds = array<i64: 32, 64>}, {pipeline_mode = #tpu.pipeline_mode<synchronous>, transform_indices = @transform_10, window_bounds = array<i64: 1, 64>}, {pipeline_mode = #tpu.pipeline_mode<synchronous>, transform_indices = @transform_11, window_bounds = array<i64: 32, 32>}, {pipeline_mode = #tpu.pipeline_mode<synchronous>, transform_indices = @transform_12, window_bounds = array<i64: 1, 32>}, {pipeline_mode = #tpu.pipeline_mode<synchronous>, transform_indices = @transform_13, window_bounds = array<i64: 32, 128>}, {pipeline_mode = #tpu.pipeline_mode<synchronous>, transform_indices = @transform_14, window_bounds = array<i64: 1, 128>}, {pipeline_mode = #tpu.pipeline_mode<synchronous>, transform_indices = @transform_15, window_bounds = array<i64: 128, 32>}, {pipeline_mode = #tpu.pipeline_mode<synchronous>, transform_indices = @transform_16, window_bounds = array<i64: 1, 32>}, {pipeline_mode = #tpu.pipeline_mode<synchronous>, transform_indices = @transform_17, window_bounds = array<i64: 1, 32>}, {pipeline_mode = #tpu.pipeline_mode<synchronous>, transform_indices = @transform_18, window_bounds = array<i64: 1, 32>}, {pipeline_mode = #tpu.pipeline_mode<synchronous>, transform_indices = @transform_19, window_bounds = array<i64: 1, 32>}, {pipeline_mode = #tpu.pipeline_mode<synchronous>, transform_indices = @transform_20, window_bounds = array<i64: 1, 32>}, {pipeline_mode = #tpu.pipeline_mode<synchronous>, transform_indices = @transform_21, window_bounds = array<i64: 1, 32>}, {pipeline_mode = #tpu.pipeline_mode<synchronous>, transform_indices = @transform_22, window_bounds = array<i64: 1, 32>}, {transform_indices = @transform_23, window_bounds = array<i64: 1, 8, 32>}]} {
    %c0 = arith.constant 0 : index
    %c0_0 = arith.constant 0 : index
    %c0_1 = arith.constant 0 : index
    %0 = vector.load %arg1[%c0, %c0_0, %c0_1] : memref<1x8x32xf32, #tpu.memory_space<vmem>>, vector<1x8x32xf32>
    %1 = vector.shape_cast %0 : vector<1x8x32xf32> to vector<8x32xf32>
    %c0_2 = arith.constant 0 : index
    %c0_3 = arith.constant 0 : index
    %c0_4 = arith.constant 0 : index
    %2 = vector.load %arg2[%c0_2, %c0_3, %c0_4] : memref<1x8x32xf32, #tpu.memory_space<vmem>>, vector<1x8x32xf32>
    %3 = vector.shape_cast %2 : vector<1x8x32xf32> to vector<8x32xf32>
    %c0_5 = arith.constant 0 : index
    %c0_6 = arith.constant 0 : index
    %4 = vector.load %arg3[%c0_5, %c0_6] : memref<8x8xf32, #tpu.memory_space<vmem>>, vector<8x8xf32>
    %c0_7 = arith.constant 0 : index
    %c0_8 = arith.constant 0 : index
    %5 = vector.load %arg4[%c0_7, %c0_8] : memref<32x96xf32, #tpu.memory_space<vmem>>, vector<32x96xf32>
    %cst = arith.constant dense<0.000000e+00> : vector<8x96xf32>
    %6 = tpu.matmul %1, %5, %cst {dimension_numbers = #tpu.dot_dimension_numbers<[1], [0], [0], [1], [0, 0, 1, 1], [], []>} : vector<8x32xf32>, vector<32x96xf32>, vector<8x96xf32> -> vector<8x96xf32>
    %c0_9 = arith.constant 0 : index
    %c0_10 = arith.constant 0 : index
    %7 = vector.load %arg5[%c0_9, %c0_10] : memref<1x96xf32, #tpu.memory_space<vmem>>, vector<1x96xf32>
    %8 = vector.broadcast %7 : vector<1x96xf32> to vector<8x96xf32>
    %9 = arith.addf %6, %8 : vector<8x96xf32>
    %10 = vector.extract_strided_slice %9 {offsets = [0, 0], sizes = [8, 32], strides = [1, 1]} : vector<8x96xf32> to vector<8x32xf32>
    %11 = vector.extract_strided_slice %9 {offsets = [0, 32], sizes = [8, 32], strides = [1, 1]} : vector<8x96xf32> to vector<8x32xf32>
    %12 = vector.extract_strided_slice %9 {offsets = [0, 64], sizes = [8, 32], strides = [1, 1]} : vector<8x96xf32> to vector<8x32xf32>
    %c0_11 = arith.constant 0 : index
    %c0_12 = arith.constant 0 : index
    %13 = vector.load %arg6[%c0_11, %c0_12] : memref<32x32xf32, #tpu.memory_space<vmem>>, vector<32x32xf32>
    %c0_13 = arith.constant 0 : index
    %c0_14 = arith.constant 0 : index
    %14 = vector.load %arg7[%c0_13, %c0_14] : memref<1x32xf32, #tpu.memory_space<vmem>>, vector<1x32xf32>
    %15 = vector.extract_strided_slice %10 {offsets = [0, 0], sizes = [8, 8], strides = [1, 1]} : vector<8x32xf32> to vector<8x8xf32>
    %cst_15 = arith.constant 0.353553385 : f32
    %16 = vector.broadcast %cst_15 : f32 to vector<8x8xf32>
    %17 = arith.mulf %15, %16 : vector<8x8xf32>
    %18 = vector.extract_strided_slice %11 {offsets = [0, 0], sizes = [8, 8], strides = [1, 1]} : vector<8x32xf32> to vector<8x8xf32>
    %19 = vector.extract_strided_slice %12 {offsets = [0, 0], sizes = [8, 8], strides = [1, 1]} : vector<8x32xf32> to vector<8x8xf32>
    %cst_16 = arith.constant dense<0.000000e+00> : vector<8x8xf32>
    %20 = tpu.matmul %17, %18, %cst_16 {dimension_numbers = #tpu.dot_dimension_numbers<[1], [1], [0], [0], [0, 0, 1, 0], [], []>} : vector<8x8xf32>, vector<8x8xf32>, vector<8x8xf32> -> vector<8x8xf32>
    %21 = arith.addf %20, %4 : vector<8x8xf32>
    %cst_17 = arith.constant dense<0xFF800000> : vector<8xf32>
    %22 = vector.multi_reduction <maximumf>, %21, %cst_17 [1] : vector<8x8xf32> to vector<8xf32>
    %23 = vector.shape_cast %22 : vector<8xf32> to vector<8x1xf32>
    %24 = vector.broadcast %23 : vector<8x1xf32> to vector<8x8xf32>
    %25 = arith.subf %21, %24 : vector<8x8xf32>
    %26 = math.exp %25 : vector<8x8xf32>
    %cst_18 = arith.constant dense<0.000000e+00> : vector<8xf32>
    %27 = vector.multi_reduction <add>, %26, %cst_18 [1] : vector<8x8xf32> to vector<8xf32>
    %28 = vector.shape_cast %27 : vector<8xf32> to vector<8x1xf32>
    %29 = tpu.reciprocal %28 {approx = true} : vector<8x1xf32> -> vector<8x1xf32>
    %30 = vector.broadcast %29 : vector<8x1xf32> to vector<8x8xf32>
    %31 = arith.mulf %26, %30 : vector<8x8xf32>
    %cst_19 = arith.constant dense<0.000000e+00> : vector<8x8xf32>
    %32 = tpu.matmul %31, %19, %cst_19 {dimension_numbers = #tpu.dot_dimension_numbers<[1], [0], [0], [1], [0, 0, 1, 1], [], []>} : vector<8x8xf32>, vector<8x8xf32>, vector<8x8xf32> -> vector<8x8xf32>
    %33 = vector.extract_strided_slice %13 {offsets = [0, 0], sizes = [8, 32], strides = [1, 1]} : vector<32x32xf32> to vector<8x32xf32>
    %cst_20 = arith.constant dense<0.000000e+00> : vector<8x32xf32>
    %34 = tpu.matmul %32, %33, %cst_20 {dimension_numbers = #tpu.dot_dimension_numbers<[1], [0], [0], [1], [0, 0, 1, 1], [], []>} : vector<8x8xf32>, vector<8x32xf32>, vector<8x32xf32> -> vector<8x32xf32>
    %35 = vector.extract_strided_slice %10 {offsets = [0, 8], sizes = [8, 8], strides = [1, 1]} : vector<8x32xf32> to vector<8x8xf32>
    %cst_21 = arith.constant 0.353553385 : f32
    %36 = vector.broadcast %cst_21 : f32 to vector<8x8xf32>
    %37 = arith.mulf %35, %36 : vector<8x8xf32>
    %38 = vector.extract_strided_slice %11 {offsets = [0, 8], sizes = [8, 8], strides = [1, 1]} : vector<8x32xf32> to vector<8x8xf32>
    %39 = vector.extract_strided_slice %12 {offsets = [0, 8], sizes = [8, 8], strides = [1, 1]} : vector<8x32xf32> to vector<8x8xf32>
    %cst_22 = arith.constant dense<0.000000e+00> : vector<8x8xf32>
    %40 = tpu.matmul %37, %38, %cst_22 {dimension_numbers = #tpu.dot_dimension_numbers<[1], [1], [0], [0], [0, 0, 1, 0], [], []>} : vector<8x8xf32>, vector<8x8xf32>, vector<8x8xf32> -> vector<8x8xf32>
    %41 = arith.addf %40, %4 : vector<8x8xf32>
    %cst_23 = arith.constant dense<0xFF800000> : vector<8xf32>
    %42 = vector.multi_reduction <maximumf>, %41, %cst_23 [1] : vector<8x8xf32> to vector<8xf32>
    %43 = vector.shape_cast %42 : vector<8xf32> to vector<8x1xf32>
    %44 = vector.broadcast %43 : vector<8x1xf32> to vector<8x8xf32>
    %45 = arith.subf %41, %44 : vector<8x8xf32>
    %46 = math.exp %45 : vector<8x8xf32>
    %cst_24 = arith.constant dense<0.000000e+00> : vector<8xf32>
    %47 = vector.multi_reduction <add>, %46, %cst_24 [1] : vector<8x8xf32> to vector<8xf32>
    %48 = vector.shape_cast %47 : vector<8xf32> to vector<8x1xf32>
    %49 = tpu.reciprocal %48 {approx = true} : vector<8x1xf32> -> vector<8x1xf32>
    %50 = vector.broadcast %49 : vector<8x1xf32> to vector<8x8xf32>
    %51 = arith.mulf %46, %50 : vector<8x8xf32>
    %cst_25 = arith.constant dense<0.000000e+00> : vector<8x8xf32>
    %52 = tpu.matmul %51, %39, %cst_25 {dimension_numbers = #tpu.dot_dimension_numbers<[1], [0], [0], [1], [0, 0, 1, 1], [], []>} : vector<8x8xf32>, vector<8x8xf32>, vector<8x8xf32> -> vector<8x8xf32>
    %53 = vector.extract_strided_slice %13 {offsets = [8, 0], sizes = [8, 32], strides = [1, 1]} : vector<32x32xf32> to vector<8x32xf32>
    %cst_26 = arith.constant dense<0.000000e+00> : vector<8x32xf32>
    %54 = tpu.matmul %52, %53, %cst_26 {dimension_numbers = #tpu.dot_dimension_numbers<[1], [0], [0], [1], [0, 0, 1, 1], [], []>} : vector<8x8xf32>, vector<8x32xf32>, vector<8x32xf32> -> vector<8x32xf32>
    %55 = arith.addf %34, %54 : vector<8x32xf32>
    %56 = vector.extract_strided_slice %10 {offsets = [0, 16], sizes = [8, 8], strides = [1, 1]} : vector<8x32xf32> to vector<8x8xf32>
    %cst_27 = arith.constant 0.353553385 : f32
    %57 = vector.broadcast %cst_27 : f32 to vector<8x8xf32>
    %58 = arith.mulf %56, %57 : vector<8x8xf32>
    %59 = vector.extract_strided_slice %11 {offsets = [0, 16], sizes = [8, 8], strides = [1, 1]} : vector<8x32xf32> to vector<8x8xf32>
    %60 = vector.extract_strided_slice %12 {offsets = [0, 16], sizes = [8, 8], strides = [1, 1]} : vector<8x32xf32> to vector<8x8xf32>
    %cst_28 = arith.constant dense<0.000000e+00> : vector<8x8xf32>
    %61 = tpu.matmul %58, %59, %cst_28 {dimension_numbers = #tpu.dot_dimension_numbers<[1], [1], [0], [0], [0, 0, 1, 0], [], []>} : vector<8x8xf32>, vector<8x8xf32>, vector<8x8xf32> -> vector<8x8xf32>
    %62 = arith.addf %61, %4 : vector<8x8xf32>
    %cst_29 = arith.constant dense<0xFF800000> : vector<8xf32>
    %63 = vector.multi_reduction <maximumf>, %62, %cst_29 [1] : vector<8x8xf32> to vector<8xf32>
    %64 = vector.shape_cast %63 : vector<8xf32> to vector<8x1xf32>
    %65 = vector.broadcast %64 : vector<8x1xf32> to vector<8x8xf32>
    %66 = arith.subf %62, %65 : vector<8x8xf32>
    %67 = math.exp %66 : vector<8x8xf32>
    %cst_30 = arith.constant dense<0.000000e+00> : vector<8xf32>
    %68 = vector.multi_reduction <add>, %67, %cst_30 [1] : vector<8x8xf32> to vector<8xf32>
    %69 = vector.shape_cast %68 : vector<8xf32> to vector<8x1xf32>
    %70 = tpu.reciprocal %69 {approx = true} : vector<8x1xf32> -> vector<8x1xf32>
    %71 = vector.broadcast %70 : vector<8x1xf32> to vector<8x8xf32>
    %72 = arith.mulf %67, %71 : vector<8x8xf32>
    %cst_31 = arith.constant dense<0.000000e+00> : vector<8x8xf32>
    %73 = tpu.matmul %72, %60, %cst_31 {dimension_numbers = #tpu.dot_dimension_numbers<[1], [0], [0], [1], [0, 0, 1, 1], [], []>} : vector<8x8xf32>, vector<8x8xf32>, vector<8x8xf32> -> vector<8x8xf32>
    %74 = vector.extract_strided_slice %13 {offsets = [16, 0], sizes = [8, 32], strides = [1, 1]} : vector<32x32xf32> to vector<8x32xf32>
    %cst_32 = arith.constant dense<0.000000e+00> : vector<8x32xf32>
    %75 = tpu.matmul %73, %74, %cst_32 {dimension_numbers = #tpu.dot_dimension_numbers<[1], [0], [0], [1], [0, 0, 1, 1], [], []>} : vector<8x8xf32>, vector<8x32xf32>, vector<8x32xf32> -> vector<8x32xf32>
    %76 = arith.addf %55, %75 : vector<8x32xf32>
    %77 = vector.extract_strided_slice %10 {offsets = [0, 24], sizes = [8, 8], strides = [1, 1]} : vector<8x32xf32> to vector<8x8xf32>
    %cst_33 = arith.constant 0.353553385 : f32
    %78 = vector.broadcast %cst_33 : f32 to vector<8x8xf32>
    %79 = arith.mulf %77, %78 : vector<8x8xf32>
    %80 = vector.extract_strided_slice %11 {offsets = [0, 24], sizes = [8, 8], strides = [1, 1]} : vector<8x32xf32> to vector<8x8xf32>
    %81 = vector.extract_strided_slice %12 {offsets = [0, 24], sizes = [8, 8], strides = [1, 1]} : vector<8x32xf32> to vector<8x8xf32>
    %cst_34 = arith.constant dense<0.000000e+00> : vector<8x8xf32>
    %82 = tpu.matmul %79, %80, %cst_34 {dimension_numbers = #tpu.dot_dimension_numbers<[1], [1], [0], [0], [0, 0, 1, 0], [], []>} : vector<8x8xf32>, vector<8x8xf32>, vector<8x8xf32> -> vector<8x8xf32>
    %83 = arith.addf %82, %4 : vector<8x8xf32>
    %cst_35 = arith.constant dense<0xFF800000> : vector<8xf32>
    %84 = vector.multi_reduction <maximumf>, %83, %cst_35 [1] : vector<8x8xf32> to vector<8xf32>
    %85 = vector.shape_cast %84 : vector<8xf32> to vector<8x1xf32>
    %86 = vector.broadcast %85 : vector<8x1xf32> to vector<8x8xf32>
    %87 = arith.subf %83, %86 : vector<8x8xf32>
    %88 = math.exp %87 : vector<8x8xf32>
    %cst_36 = arith.constant dense<0.000000e+00> : vector<8xf32>
    %89 = vector.multi_reduction <add>, %88, %cst_36 [1] : vector<8x8xf32> to vector<8xf32>
    %90 = vector.shape_cast %89 : vector<8xf32> to vector<8x1xf32>
    %91 = tpu.reciprocal %90 {approx = true} : vector<8x1xf32> -> vector<8x1xf32>
    %92 = vector.broadcast %91 : vector<8x1xf32> to vector<8x8xf32>
    %93 = arith.mulf %88, %92 : vector<8x8xf32>
    %cst_37 = arith.constant dense<0.000000e+00> : vector<8x8xf32>
    %94 = tpu.matmul %93, %81, %cst_37 {dimension_numbers = #tpu.dot_dimension_numbers<[1], [0], [0], [1], [0, 0, 1, 1], [], []>} : vector<8x8xf32>, vector<8x8xf32>, vector<8x8xf32> -> vector<8x8xf32>
    %95 = vector.extract_strided_slice %13 {offsets = [24, 0], sizes = [8, 32], strides = [1, 1]} : vector<32x32xf32> to vector<8x32xf32>
    %cst_38 = arith.constant dense<0.000000e+00> : vector<8x32xf32>
    %96 = tpu.matmul %94, %95, %cst_38 {dimension_numbers = #tpu.dot_dimension_numbers<[1], [0], [0], [1], [0, 0, 1, 1], [], []>} : vector<8x8xf32>, vector<8x32xf32>, vector<8x32xf32> -> vector<8x32xf32>
    %97 = arith.addf %76, %96 : vector<8x32xf32>
    %98 = vector.broadcast %14 : vector<1x32xf32> to vector<8x32xf32>
    %99 = arith.addf %97, %98 : vector<8x32xf32>
    %100 = arith.addf %1, %99 : vector<8x32xf32>
    %c0_39 = arith.constant 0 : index
    %c0_40 = arith.constant 0 : index
    %101 = vector.load %arg18[%c0_39, %c0_40] : memref<1x32xf32, #tpu.memory_space<vmem>>, vector<1x32xf32>
    %c0_41 = arith.constant 0 : index
    %c0_42 = arith.constant 0 : index
    %102 = vector.load %arg19[%c0_41, %c0_42] : memref<1x32xf32, #tpu.memory_space<vmem>>, vector<1x32xf32>
    %cst_43 = arith.constant dense<0.000000e+00> : vector<8xf32>
    %103 = vector.multi_reduction <add>, %100, %cst_43 [1] : vector<8x32xf32> to vector<8xf32>
    %104 = vector.shape_cast %103 : vector<8xf32> to vector<8x1xf32>
    %cst_44 = arith.constant 3.200000e+01 : f32
    %105 = vector.broadcast %cst_44 : f32 to vector<8x1xf32>
    %106 = arith.divf %104, %105 : vector<8x1xf32>
    %107 = vector.broadcast %106 : vector<8x1xf32> to vector<8x32xf32>
    %108 = arith.subf %100, %107 : vector<8x32xf32>
    %109 = arith.mulf %108, %108 : vector<8x32xf32>
    %cst_45 = arith.constant dense<0.000000e+00> : vector<8xf32>
    %110 = vector.multi_reduction <add>, %109, %cst_45 [1] : vector<8x32xf32> to vector<8xf32>
    %111 = vector.shape_cast %110 : vector<8xf32> to vector<8x1xf32>
    %cst_46 = arith.constant 3.200000e+01 : f32
    %112 = vector.broadcast %cst_46 : f32 to vector<8x1xf32>
    %113 = arith.divf %111, %112 : vector<8x1xf32>
    %cst_47 = arith.constant 9.99999974E-6 : f32
    %114 = vector.broadcast %cst_47 : f32 to vector<8x1xf32>
    %115 = arith.addf %113, %114 : vector<8x1xf32>
    %116 = math.rsqrt %115 : vector<8x1xf32>
    %117 = vector.broadcast %116 : vector<8x1xf32> to vector<8x32xf32>
    %118 = arith.mulf %108, %117 : vector<8x32xf32>
    %119 = vector.broadcast %101 : vector<1x32xf32> to vector<8x32xf32>
    %120 = arith.mulf %118, %119 : vector<8x32xf32>
    %121 = vector.broadcast %102 : vector<1x32xf32> to vector<8x32xf32>
    %122 = arith.addf %120, %121 : vector<8x32xf32>
    %c0_48 = arith.constant 0 : index
    %c0_49 = arith.constant 0 : index
    %123 = vector.load %arg8[%c0_48, %c0_49] : memref<32x32xf32, #tpu.memory_space<vmem>>, vector<32x32xf32>
    %cst_50 = arith.constant dense<0.000000e+00> : vector<8x32xf32>
    %124 = tpu.matmul %122, %123, %cst_50 {dimension_numbers = #tpu.dot_dimension_numbers<[1], [0], [0], [1], [0, 0, 1, 1], [], []>} : vector<8x32xf32>, vector<32x32xf32>, vector<8x32xf32> -> vector<8x32xf32>
    %c0_51 = arith.constant 0 : index
    %c0_52 = arith.constant 0 : index
    %125 = vector.load %arg9[%c0_51, %c0_52] : memref<1x32xf32, #tpu.memory_space<vmem>>, vector<1x32xf32>
    %126 = vector.broadcast %125 : vector<1x32xf32> to vector<8x32xf32>
    %127 = arith.addf %124, %126 : vector<8x32xf32>
    %c0_53 = arith.constant 0 : index
    %c0_54 = arith.constant 0 : index
    %128 = vector.load %arg10[%c0_53, %c0_54] : memref<32x64xf32, #tpu.memory_space<vmem>>, vector<32x64xf32>
    %cst_55 = arith.constant dense<0.000000e+00> : vector<8x64xf32>
    %129 = tpu.matmul %3, %128, %cst_55 {dimension_numbers = #tpu.dot_dimension_numbers<[1], [0], [0], [1], [0, 0, 1, 1], [], []>} : vector<8x32xf32>, vector<32x64xf32>, vector<8x64xf32> -> vector<8x64xf32>
    %c0_56 = arith.constant 0 : index
    %c0_57 = arith.constant 0 : index
    %130 = vector.load %arg11[%c0_56, %c0_57] : memref<1x64xf32, #tpu.memory_space<vmem>>, vector<1x64xf32>
    %131 = vector.broadcast %130 : vector<1x64xf32> to vector<8x64xf32>
    %132 = arith.addf %129, %131 : vector<8x64xf32>
    %133 = vector.extract_strided_slice %132 {offsets = [0, 0], sizes = [8, 32], strides = [1, 1]} : vector<8x64xf32> to vector<8x32xf32>
    %134 = vector.extract_strided_slice %132 {offsets = [0, 32], sizes = [8, 32], strides = [1, 1]} : vector<8x64xf32> to vector<8x32xf32>
    %c0_58 = arith.constant 0 : index
    %c0_59 = arith.constant 0 : index
    %135 = vector.load %arg12[%c0_58, %c0_59] : memref<32x32xf32, #tpu.memory_space<vmem>>, vector<32x32xf32>
    %c0_60 = arith.constant 0 : index
    %c0_61 = arith.constant 0 : index
    %136 = vector.load %arg13[%c0_60, %c0_61] : memref<1x32xf32, #tpu.memory_space<vmem>>, vector<1x32xf32>
    %137 = vector.extract_strided_slice %127 {offsets = [0, 0], sizes = [8, 8], strides = [1, 1]} : vector<8x32xf32> to vector<8x8xf32>
    %cst_62 = arith.constant 0.353553385 : f32
    %138 = vector.broadcast %cst_62 : f32 to vector<8x8xf32>
    %139 = arith.mulf %137, %138 : vector<8x8xf32>
    %140 = vector.extract_strided_slice %133 {offsets = [0, 0], sizes = [8, 8], strides = [1, 1]} : vector<8x32xf32> to vector<8x8xf32>
    %141 = vector.extract_strided_slice %134 {offsets = [0, 0], sizes = [8, 8], strides = [1, 1]} : vector<8x32xf32> to vector<8x8xf32>
    %cst_63 = arith.constant dense<0.000000e+00> : vector<8x8xf32>
    %142 = tpu.matmul %139, %140, %cst_63 {dimension_numbers = #tpu.dot_dimension_numbers<[1], [1], [0], [0], [0, 0, 1, 0], [], []>} : vector<8x8xf32>, vector<8x8xf32>, vector<8x8xf32> -> vector<8x8xf32>
    %cst_64 = arith.constant dense<0xFF800000> : vector<8xf32>
    %143 = vector.multi_reduction <maximumf>, %142, %cst_64 [1] : vector<8x8xf32> to vector<8xf32>
    %144 = vector.shape_cast %143 : vector<8xf32> to vector<8x1xf32>
    %145 = vector.broadcast %144 : vector<8x1xf32> to vector<8x8xf32>
    %146 = arith.subf %142, %145 : vector<8x8xf32>
    %147 = math.exp %146 : vector<8x8xf32>
    %cst_65 = arith.constant dense<0.000000e+00> : vector<8xf32>
    %148 = vector.multi_reduction <add>, %147, %cst_65 [1] : vector<8x8xf32> to vector<8xf32>
    %149 = vector.shape_cast %148 : vector<8xf32> to vector<8x1xf32>
    %150 = tpu.reciprocal %149 {approx = true} : vector<8x1xf32> -> vector<8x1xf32>
    %151 = vector.broadcast %150 : vector<8x1xf32> to vector<8x8xf32>
    %152 = arith.mulf %147, %151 : vector<8x8xf32>
    %cst_66 = arith.constant dense<0.000000e+00> : vector<8x8xf32>
    %153 = tpu.matmul %152, %141, %cst_66 {dimension_numbers = #tpu.dot_dimension_numbers<[1], [0], [0], [1], [0, 0, 1, 1], [], []>} : vector<8x8xf32>, vector<8x8xf32>, vector<8x8xf32> -> vector<8x8xf32>
    %154 = vector.extract_strided_slice %135 {offsets = [0, 0], sizes = [8, 32], strides = [1, 1]} : vector<32x32xf32> to vector<8x32xf32>
    %cst_67 = arith.constant dense<0.000000e+00> : vector<8x32xf32>
    %155 = tpu.matmul %153, %154, %cst_67 {dimension_numbers = #tpu.dot_dimension_numbers<[1], [0], [0], [1], [0, 0, 1, 1], [], []>} : vector<8x8xf32>, vector<8x32xf32>, vector<8x32xf32> -> vector<8x32xf32>
    %156 = vector.extract_strided_slice %127 {offsets = [0, 8], sizes = [8, 8], strides = [1, 1]} : vector<8x32xf32> to vector<8x8xf32>
    %cst_68 = arith.constant 0.353553385 : f32
    %157 = vector.broadcast %cst_68 : f32 to vector<8x8xf32>
    %158 = arith.mulf %156, %157 : vector<8x8xf32>
    %159 = vector.extract_strided_slice %133 {offsets = [0, 8], sizes = [8, 8], strides = [1, 1]} : vector<8x32xf32> to vector<8x8xf32>
    %160 = vector.extract_strided_slice %134 {offsets = [0, 8], sizes = [8, 8], strides = [1, 1]} : vector<8x32xf32> to vector<8x8xf32>
    %cst_69 = arith.constant dense<0.000000e+00> : vector<8x8xf32>
    %161 = tpu.matmul %158, %159, %cst_69 {dimension_numbers = #tpu.dot_dimension_numbers<[1], [1], [0], [0], [0, 0, 1, 0], [], []>} : vector<8x8xf32>, vector<8x8xf32>, vector<8x8xf32> -> vector<8x8xf32>
    %cst_70 = arith.constant dense<0xFF800000> : vector<8xf32>
    %162 = vector.multi_reduction <maximumf>, %161, %cst_70 [1] : vector<8x8xf32> to vector<8xf32>
    %163 = vector.shape_cast %162 : vector<8xf32> to vector<8x1xf32>
    %164 = vector.broadcast %163 : vector<8x1xf32> to vector<8x8xf32>
    %165 = arith.subf %161, %164 : vector<8x8xf32>
    %166 = math.exp %165 : vector<8x8xf32>
    %cst_71 = arith.constant dense<0.000000e+00> : vector<8xf32>
    %167 = vector.multi_reduction <add>, %166, %cst_71 [1] : vector<8x8xf32> to vector<8xf32>
    %168 = vector.shape_cast %167 : vector<8xf32> to vector<8x1xf32>
    %169 = tpu.reciprocal %168 {approx = true} : vector<8x1xf32> -> vector<8x1xf32>
    %170 = vector.broadcast %169 : vector<8x1xf32> to vector<8x8xf32>
    %171 = arith.mulf %166, %170 : vector<8x8xf32>
    %cst_72 = arith.constant dense<0.000000e+00> : vector<8x8xf32>
    %172 = tpu.matmul %171, %160, %cst_72 {dimension_numbers = #tpu.dot_dimension_numbers<[1], [0], [0], [1], [0, 0, 1, 1], [], []>} : vector<8x8xf32>, vector<8x8xf32>, vector<8x8xf32> -> vector<8x8xf32>
    %173 = vector.extract_strided_slice %135 {offsets = [8, 0], sizes = [8, 32], strides = [1, 1]} : vector<32x32xf32> to vector<8x32xf32>
    %cst_73 = arith.constant dense<0.000000e+00> : vector<8x32xf32>
    %174 = tpu.matmul %172, %173, %cst_73 {dimension_numbers = #tpu.dot_dimension_numbers<[1], [0], [0], [1], [0, 0, 1, 1], [], []>} : vector<8x8xf32>, vector<8x32xf32>, vector<8x32xf32> -> vector<8x32xf32>
    %175 = arith.addf %155, %174 : vector<8x32xf32>
    %176 = vector.extract_strided_slice %127 {offsets = [0, 16], sizes = [8, 8], strides = [1, 1]} : vector<8x32xf32> to vector<8x8xf32>
    %cst_74 = arith.constant 0.353553385 : f32
    %177 = vector.broadcast %cst_74 : f32 to vector<8x8xf32>
    %178 = arith.mulf %176, %177 : vector<8x8xf32>
    %179 = vector.extract_strided_slice %133 {offsets = [0, 16], sizes = [8, 8], strides = [1, 1]} : vector<8x32xf32> to vector<8x8xf32>
    %180 = vector.extract_strided_slice %134 {offsets = [0, 16], sizes = [8, 8], strides = [1, 1]} : vector<8x32xf32> to vector<8x8xf32>
    %cst_75 = arith.constant dense<0.000000e+00> : vector<8x8xf32>
    %181 = tpu.matmul %178, %179, %cst_75 {dimension_numbers = #tpu.dot_dimension_numbers<[1], [1], [0], [0], [0, 0, 1, 0], [], []>} : vector<8x8xf32>, vector<8x8xf32>, vector<8x8xf32> -> vector<8x8xf32>
    %cst_76 = arith.constant dense<0xFF800000> : vector<8xf32>
    %182 = vector.multi_reduction <maximumf>, %181, %cst_76 [1] : vector<8x8xf32> to vector<8xf32>
    %183 = vector.shape_cast %182 : vector<8xf32> to vector<8x1xf32>
    %184 = vector.broadcast %183 : vector<8x1xf32> to vector<8x8xf32>
    %185 = arith.subf %181, %184 : vector<8x8xf32>
    %186 = math.exp %185 : vector<8x8xf32>
    %cst_77 = arith.constant dense<0.000000e+00> : vector<8xf32>
    %187 = vector.multi_reduction <add>, %186, %cst_77 [1] : vector<8x8xf32> to vector<8xf32>
    %188 = vector.shape_cast %187 : vector<8xf32> to vector<8x1xf32>
    %189 = tpu.reciprocal %188 {approx = true} : vector<8x1xf32> -> vector<8x1xf32>
    %190 = vector.broadcast %189 : vector<8x1xf32> to vector<8x8xf32>
    %191 = arith.mulf %186, %190 : vector<8x8xf32>
    %cst_78 = arith.constant dense<0.000000e+00> : vector<8x8xf32>
    %192 = tpu.matmul %191, %180, %cst_78 {dimension_numbers = #tpu.dot_dimension_numbers<[1], [0], [0], [1], [0, 0, 1, 1], [], []>} : vector<8x8xf32>, vector<8x8xf32>, vector<8x8xf32> -> vector<8x8xf32>
    %193 = vector.extract_strided_slice %135 {offsets = [16, 0], sizes = [8, 32], strides = [1, 1]} : vector<32x32xf32> to vector<8x32xf32>
    %cst_79 = arith.constant dense<0.000000e+00> : vector<8x32xf32>
    %194 = tpu.matmul %192, %193, %cst_79 {dimension_numbers = #tpu.dot_dimension_numbers<[1], [0], [0], [1], [0, 0, 1, 1], [], []>} : vector<8x8xf32>, vector<8x32xf32>, vector<8x32xf32> -> vector<8x32xf32>
    %195 = arith.addf %175, %194 : vector<8x32xf32>
    %196 = vector.extract_strided_slice %127 {offsets = [0, 24], sizes = [8, 8], strides = [1, 1]} : vector<8x32xf32> to vector<8x8xf32>
    %cst_80 = arith.constant 0.353553385 : f32
    %197 = vector.broadcast %cst_80 : f32 to vector<8x8xf32>
    %198 = arith.mulf %196, %197 : vector<8x8xf32>
    %199 = vector.extract_strided_slice %133 {offsets = [0, 24], sizes = [8, 8], strides = [1, 1]} : vector<8x32xf32> to vector<8x8xf32>
    %200 = vector.extract_strided_slice %134 {offsets = [0, 24], sizes = [8, 8], strides = [1, 1]} : vector<8x32xf32> to vector<8x8xf32>
    %cst_81 = arith.constant dense<0.000000e+00> : vector<8x8xf32>
    %201 = tpu.matmul %198, %199, %cst_81 {dimension_numbers = #tpu.dot_dimension_numbers<[1], [1], [0], [0], [0, 0, 1, 0], [], []>} : vector<8x8xf32>, vector<8x8xf32>, vector<8x8xf32> -> vector<8x8xf32>
    %cst_82 = arith.constant dense<0xFF800000> : vector<8xf32>
    %202 = vector.multi_reduction <maximumf>, %201, %cst_82 [1] : vector<8x8xf32> to vector<8xf32>
    %203 = vector.shape_cast %202 : vector<8xf32> to vector<8x1xf32>
    %204 = vector.broadcast %203 : vector<8x1xf32> to vector<8x8xf32>
    %205 = arith.subf %201, %204 : vector<8x8xf32>
    %206 = math.exp %205 : vector<8x8xf32>
    %cst_83 = arith.constant dense<0.000000e+00> : vector<8xf32>
    %207 = vector.multi_reduction <add>, %206, %cst_83 [1] : vector<8x8xf32> to vector<8xf32>
    %208 = vector.shape_cast %207 : vector<8xf32> to vector<8x1xf32>
    %209 = tpu.reciprocal %208 {approx = true} : vector<8x1xf32> -> vector<8x1xf32>
    %210 = vector.broadcast %209 : vector<8x1xf32> to vector<8x8xf32>
    %211 = arith.mulf %206, %210 : vector<8x8xf32>
    %cst_84 = arith.constant dense<0.000000e+00> : vector<8x8xf32>
    %212 = tpu.matmul %211, %200, %cst_84 {dimension_numbers = #tpu.dot_dimension_numbers<[1], [0], [0], [1], [0, 0, 1, 1], [], []>} : vector<8x8xf32>, vector<8x8xf32>, vector<8x8xf32> -> vector<8x8xf32>
    %213 = vector.extract_strided_slice %135 {offsets = [24, 0], sizes = [8, 32], strides = [1, 1]} : vector<32x32xf32> to vector<8x32xf32>
    %cst_85 = arith.constant dense<0.000000e+00> : vector<8x32xf32>
    %214 = tpu.matmul %212, %213, %cst_85 {dimension_numbers = #tpu.dot_dimension_numbers<[1], [0], [0], [1], [0, 0, 1, 1], [], []>} : vector<8x8xf32>, vector<8x32xf32>, vector<8x32xf32> -> vector<8x32xf32>
    %215 = arith.addf %195, %214 : vector<8x32xf32>
    %216 = vector.broadcast %136 : vector<1x32xf32> to vector<8x32xf32>
    %217 = arith.addf %215, %216 : vector<8x32xf32>
    %218 = arith.addf %122, %217 : vector<8x32xf32>
    %c0_86 = arith.constant 0 : index
    %c0_87 = arith.constant 0 : index
    %219 = vector.load %arg20[%c0_86, %c0_87] : memref<1x32xf32, #tpu.memory_space<vmem>>, vector<1x32xf32>
    %c0_88 = arith.constant 0 : index
    %c0_89 = arith.constant 0 : index
    %220 = vector.load %arg21[%c0_88, %c0_89] : memref<1x32xf32, #tpu.memory_space<vmem>>, vector<1x32xf32>
    %cst_90 = arith.constant dense<0.000000e+00> : vector<8xf32>
    %221 = vector.multi_reduction <add>, %218, %cst_90 [1] : vector<8x32xf32> to vector<8xf32>
    %222 = vector.shape_cast %221 : vector<8xf32> to vector<8x1xf32>
    %cst_91 = arith.constant 3.200000e+01 : f32
    %223 = vector.broadcast %cst_91 : f32 to vector<8x1xf32>
    %224 = arith.divf %222, %223 : vector<8x1xf32>
    %225 = vector.broadcast %224 : vector<8x1xf32> to vector<8x32xf32>
    %226 = arith.subf %218, %225 : vector<8x32xf32>
    %227 = arith.mulf %226, %226 : vector<8x32xf32>
    %cst_92 = arith.constant dense<0.000000e+00> : vector<8xf32>
    %228 = vector.multi_reduction <add>, %227, %cst_92 [1] : vector<8x32xf32> to vector<8xf32>
    %229 = vector.shape_cast %228 : vector<8xf32> to vector<8x1xf32>
    %cst_93 = arith.constant 3.200000e+01 : f32
    %230 = vector.broadcast %cst_93 : f32 to vector<8x1xf32>
    %231 = arith.divf %229, %230 : vector<8x1xf32>
    %cst_94 = arith.constant 9.99999974E-6 : f32
    %232 = vector.broadcast %cst_94 : f32 to vector<8x1xf32>
    %233 = arith.addf %231, %232 : vector<8x1xf32>
    %234 = math.rsqrt %233 : vector<8x1xf32>
    %235 = vector.broadcast %234 : vector<8x1xf32> to vector<8x32xf32>
    %236 = arith.mulf %226, %235 : vector<8x32xf32>
    %237 = vector.broadcast %219 : vector<1x32xf32> to vector<8x32xf32>
    %238 = arith.mulf %236, %237 : vector<8x32xf32>
    %239 = vector.broadcast %220 : vector<1x32xf32> to vector<8x32xf32>
    %240 = arith.addf %238, %239 : vector<8x32xf32>
    %c0_95 = arith.constant 0 : index
    %c0_96 = arith.constant 0 : index
    %241 = vector.load %arg14[%c0_95, %c0_96] : memref<32x128xf32, #tpu.memory_space<vmem>>, vector<32x128xf32>
    %cst_97 = arith.constant dense<0.000000e+00> : vector<8x128xf32>
    %242 = tpu.matmul %240, %241, %cst_97 {dimension_numbers = #tpu.dot_dimension_numbers<[1], [0], [0], [1], [0, 0, 1, 1], [], []>} : vector<8x32xf32>, vector<32x128xf32>, vector<8x128xf32> -> vector<8x128xf32>
    %c0_98 = arith.constant 0 : index
    %c0_99 = arith.constant 0 : index
    %243 = vector.load %arg15[%c0_98, %c0_99] : memref<1x128xf32, #tpu.memory_space<vmem>>, vector<1x128xf32>
    %244 = vector.broadcast %243 : vector<1x128xf32> to vector<8x128xf32>
    %245 = arith.addf %242, %244 : vector<8x128xf32>
    %cst_100 = arith.constant 0.000000e+00 : f32
    %246 = vector.broadcast %cst_100 : f32 to vector<8x128xf32>
    %247 = arith.maximumf %245, %246 : vector<8x128xf32>
    %c0_101 = arith.constant 0 : index
    %c0_102 = arith.constant 0 : index
    %248 = vector.load %arg16[%c0_101, %c0_102] : memref<128x32xf32, #tpu.memory_space<vmem>>, vector<128x32xf32>
    %cst_103 = arith.constant dense<0.000000e+00> : vector<8x32xf32>
    %249 = tpu.matmul %247, %248, %cst_103 {dimension_numbers = #tpu.dot_dimension_numbers<[1], [0], [0], [1], [0, 0, 1, 1], [], []>} : vector<8x128xf32>, vector<128x32xf32>, vector<8x32xf32> -> vector<8x32xf32>
    %c0_104 = arith.constant 0 : index
    %c0_105 = arith.constant 0 : index
    %250 = vector.load %arg17[%c0_104, %c0_105] : memref<1x32xf32, #tpu.memory_space<vmem>>, vector<1x32xf32>
    %251 = vector.broadcast %250 : vector<1x32xf32> to vector<8x32xf32>
    %252 = arith.addf %249, %251 : vector<8x32xf32>
    %253 = arith.addf %240, %252 : vector<8x32xf32>
    %c0_106 = arith.constant 0 : index
    %c0_107 = arith.constant 0 : index
    %254 = vector.load %arg22[%c0_106, %c0_107] : memref<1x32xf32, #tpu.memory_space<vmem>>, vector<1x32xf32>
    %c0_108 = arith.constant 0 : index
    %c0_109 = arith.constant 0 : index
    %255 = vector.load %arg23[%c0_108, %c0_109] : memref<1x32xf32, #tpu.memory_space<vmem>>, vector<1x32xf32>
    %cst_110 = arith.constant dense<0.000000e+00> : vector<8xf32>
    %256 = vector.multi_reduction <add>, %253, %cst_110 [1] : vector<8x32xf32> to vector<8xf32>
    %257 = vector.shape_cast %256 : vector<8xf32> to vector<8x1xf32>
    %cst_111 = arith.constant 3.200000e+01 : f32
    %258 = vector.broadcast %cst_111 : f32 to vector<8x1xf32>
    %259 = arith.divf %257, %258 : vector<8x1xf32>
    %260 = vector.broadcast %259 : vector<8x1xf32> to vector<8x32xf32>
    %261 = arith.subf %253, %260 : vector<8x32xf32>
    %262 = arith.mulf %261, %261 : vector<8x32xf32>
    %cst_112 = arith.constant dense<0.000000e+00> : vector<8xf32>
    %263 = vector.multi_reduction <add>, %262, %cst_112 [1] : vector<8x32xf32> to vector<8xf32>
    %264 = vector.shape_cast %263 : vector<8xf32> to vector<8x1xf32>
    %cst_113 = arith.constant 3.200000e+01 : f32
    %265 = vector.broadcast %cst_113 : f32 to vector<8x1xf32>
    %266 = arith.divf %264, %265 : vector<8x1xf32>
    %cst_114 = arith.constant 9.99999974E-6 : f32
    %267 = vector.broadcast %cst_114 : f32 to vector<8x1xf32>
    %268 = arith.addf %266, %267 : vector<8x1xf32>
    %269 = math.rsqrt %268 : vector<8x1xf32>
    %270 = vector.broadcast %269 : vector<8x1xf32> to vector<8x32xf32>
    %271 = arith.mulf %261, %270 : vector<8x32xf32>
    %272 = vector.broadcast %254 : vector<1x32xf32> to vector<8x32xf32>
    %273 = arith.mulf %271, %272 : vector<8x32xf32>
    %274 = vector.broadcast %255 : vector<1x32xf32> to vector<8x32xf32>
    %275 = arith.addf %273, %274 : vector<8x32xf32>
    %c0_115 = arith.constant 0 : index
    %c0_116 = arith.constant 0 : index
    %c0_117 = arith.constant 0 : index
    %276 = vector.load %arg24[%c0_115, %c0_116, %c0_117] : memref<1x8x32xf32, #tpu.memory_space<vmem>>, vector<1x8x32xf32>
    %277 = vector.shape_cast %276 : vector<1x8x32xf32> to vector<8x32xf32>
    %278 = vector.shape_cast %275 : vector<8x32xf32> to vector<1x8x32xf32>
    tpu.vector_store %arg24[%c0_115, %c0_116, %c0_117], %278 {strides = array<i32>} : memref<1x8x32xf32, #tpu.memory_space<vmem>>, vector<1x8x32xf32>,
    return
  }
  func.func @transform_0(%arg0: i32) -> (i32, i32, i32) {
    %c0_i32 = arith.constant 0 : i32
    %c0_i32_0 = arith.constant 0 : i32
    %c0_i32_1 = arith.constant 0 : i32
    return %arg0, %c0_i32, %c0_i32_0 : i32, i32, i32
  }
  func.func @transform_1(%arg0: i32) -> (i32, i32, i32) {
    %c0_i32 = arith.constant 0 : i32
    %c0_i32_0 = arith.constant 0 : i32
    %c0_i32_1 = arith.constant 0 : i32
    return %arg0, %c0_i32, %c0_i32_0 : i32, i32, i32
  }
  func.func @transform_2(%arg0: i32) -> (i32, i32) {
    %c0_i32 = arith.constant 0 : i32
    %c0_i32_0 = arith.constant 0 : i32
    %c0_i32_1 = arith.constant 0 : i32
    return %c0_i32, %c0_i32_0 : i32, i32
  }
  func.func @transform_3(%arg0: i32) -> (i32, i32) {
    %c0_i32 = arith.constant 0 : i32
    %c0_i32_0 = arith.constant 0 : i32
    %c0_i32_1 = arith.constant 0 : i32
    return %c0_i32, %c0_i32_0 : i32, i32
  }
  func.func @transform_4(%arg0: i32) -> (i32, i32) {
    %c0_i32 = arith.constant 0 : i32
    %c0_i32_0 = arith.constant 0 : i32
    %c0_i32_1 = arith.constant 0 : i32
    return %c0_i32, %c0_i32_0 : i32, i32
  }
  func.func @transform_5(%arg0: i32) -> (i32, i32) {
    %c0_i32 = arith.constant 0 : i32
    %c0_i32_0 = arith.constant 0 : i32
    %c0_i32_1 = arith.constant 0 : i32
    return %c0_i32, %c0_i32_0 : i32, i32
  }
  func.func @transform_6(%arg0: i32) -> (i32, i32) {
    %c0_i32 = arith.constant 0 : i32
    %c0_i32_0 = arith.constant 0 : i32
    %c0_i32_1 = arith.constant 0 : i32
    return %c0_i32, %c0_i32_0 : i32, i32
  }
  func.func @transform_7(%arg0: i32) -> (i32, i32) {
    %c0_i32 = arith.constant 0 : i32
    %c0_i32_0 = arith.constant 0 : i32
    %c0_i32_1 = arith.constant 0 : i32
    return %c0_i32, %c0_i32_0 : i32, i32
  }
  func.func @transform_8(%arg0: i32) -> (i32, i32) {
    %c0_i32 = arith.constant 0 : i32
    %c0_i32_0 = arith.constant 0 : i32
    %c0_i32_1 = arith.constant 0 : i32
    return %c0_i32, %c0_i32_0 : i32, i32
  }
  func.func @transform_9(%arg0: i32) -> (i32, i32) {
    %c0_i32 = arith.constant 0 : i32
    %c0_i32_0 = arith.constant 0 : i32
    %c0_i32_1 = arith.constant 0 : i32
    return %c0_i32, %c0_i32_0 : i32, i32
  }
  func.func @transform_10(%arg0: i32) -> (i32, i32) {
    %c0_i32 = arith.constant 0 : i32
    %c0_i32_0 = arith.constant 0 : i32
    %c0_i32_1 = arith.constant 0 : i32
    return %c0_i32, %c0_i32_0 : i32, i32
  }
  func.func @transform_11(%arg0: i32) -> (i32, i32) {
    %c0_i32 = arith.constant 0 : i32
    %c0_i32_0 = arith.constant 0 : i32
    %c0_i32_1 = arith.constant 0 : i32
    return %c0_i32, %c0_i32_0 : i32, i32
  }
  func.func @transform_12(%arg0: i32) -> (i32, i32) {
    %c0_i32 = arith.constant 0 : i32
    %c0_i32_0 = arith.constant 0 : i32
    %c0_i32_1 = arith.constant 0 : i32
    return %c0_i32, %c0_i32_0 : i32, i32
  }
  func.func @transform_13(%arg0: i32) -> (i32, i32) {
    %c0_i32 = arith.constant 0 : i32
    %c0_i32_0 = arith.constant 0 : i32
    %c0_i32_1 = arith.constant 0 : i32
    return %c0_i32, %c0_i32_0 : i32, i32
  }
  func.func @transform_14(%arg0: i32) -> (i32, i32) {
    %c0_i32 = arith.constant 0 : i32
    %c0_i32_0 = arith.constant 0 : i32
    %c0_i32_1 = arith.constant 0 : i32
    return %c0_i32, %c0_i32_0 : i32, i32
  }
  func.func @transform_15(%arg0: i32) -> (i32, i32) {
    %c0_i32 = arith.constant 0 : i32
    %c0_i32_0 = arith.constant 0 : i32
    %c0_i32_1 = arith.constant 0 : i32
    return %c0_i32, %c0_i32_0 : i32, i32
  }
  func.func @transform_16(%arg0: i32) -> (i32, i32) {
    %c0_i32 = arith.constant 0 : i32
    %c0_i32_0 = arith.constant 0 : i32
    %c0_i32_1 = arith.constant 0 : i32
    return %c0_i32, %c0_i32_0 : i32, i32
  }
  func.func @transform_17(%arg0: i32) -> (i32, i32) {
    %c0_i32 = arith.constant 0 : i32
    %c0_i32_0 = arith.constant 0 : i32
    %c0_i32_1 = arith.constant 0 : i32
    return %c0_i32, %c0_i32_0 : i32, i32
  }
  func.func @transform_18(%arg0: i32) -> (i32, i32) {
    %c0_i32 = arith.constant 0 : i32
    %c0_i32_0 = arith.constant 0 : i32
    %c0_i32_1 = arith.constant 0 : i32
    return %c0_i32, %c0_i32_0 : i32, i32
  }
  func.func @transform_19(%arg0: i32) -> (i32, i32) {
    %c0_i32 = arith.constant 0 : i32
    %c0_i32_0 = arith.constant 0 : i32
    %c0_i32_1 = arith.constant 0 : i32
    return %c0_i32, %c0_i32_0 : i32, i32
  }
  func.func @transform_20(%arg0: i32) -> (i32, i32) {
    %c0_i32 = arith.constant 0 : i32
    %c0_i32_0 = arith.constant 0 : i32
    %c0_i32_1 = arith.constant 0 : i32
    return %c0_i32, %c0_i32_0 : i32, i32
  }
  func.func @transform_21(%arg0: i32) -> (i32, i32) {
    %c0_i32 = arith.constant 0 : i32
    %c0_i32_0 = arith.constant 0 : i32
    %c0_i32_1 = arith.constant 0 : i32
    return %c0_i32, %c0_i32_0 : i32, i32
  }
  func.func @transform_22(%arg0: i32) -> (i32, i32) {
    %c0_i32 = arith.constant 0 : i32
    %c0_i32_0 = arith.constant 0 : i32
    %c0_i32_1 = arith.constant 0 : i32
    return %c0_i32, %c0_i32_0 : i32, i32
  }
  func.func @transform_23(%arg0: i32) -> (i32, i32, i32) {
    %c0_i32 = arith.constant 0 : i32
    %c0_i32_0 = arith.constant 0 : i32
    %c0_i32_1 = arith.constant 0 : i32
    return %arg0, %c0_i32, %c0_i32_0 : i32, i32, i32
  }
}

</mosaic_0001>

<llo_original>
// kernel: tpu_custom_call.1
$region0: #{tpu_custom_call.1}
  #allocation0 [shape = 'u32[]', space=smem, size = 0x4, offset = 0x4, fixed_abs, tag = 'smem constant byte address 0x4 - core index']
  #allocation1 [shape = 'u32[144,128]{1,0:T(1,128)}', space=vmem, size = 0x12000, scoped, tag = 'internal scratch']
  %s0 = inlined_call_operand.hbm [shape: f32[2,8,32], index: 0, kind: input, shape index: {}]
  %s1 = inlined_call_operand.hbm [shape: f32[2,8,32], index: 1, kind: input, shape index: {}]
  %s2 = inlined_call_operand.hbm [shape: f32[8,8], index: 2, kind: input, shape index: {}]
  %s3 = inlined_call_operand.vmem [shape: f32[32,96], index: 3, kind: input, shape index: {}]
  %s4 = inlined_call_operand.vmem [shape: f32[1,96], index: 4, kind: input, shape index: {}]
  %s5 = inlined_call_operand.vmem [shape: f32[32,32], index: 5, kind: input, shape index: {}]
  %s6 = inlined_call_operand.vmem [shape: f32[1,32], index: 6, kind: input, shape index: {}]
  %s7 = inlined_call_operand.vmem [shape: f32[32,32], index: 7, kind: input, shape index: {}]
  %s8 = inlined_call_operand.vmem [shape: f32[1,32], index: 8, kind: input, shape index: {}]
  %s9 = inlined_call_operand.vmem [shape: f32[32,64], index: 9, kind: input, shape index: {}]
  %s10 = inlined_call_operand.vmem [shape: f32[1,64], index: 10, kind: input, shape index: {}]
  %s11 = inlined_call_operand.vmem [shape: f32[32,32], index: 11, kind: input, shape index: {}]
  %s12 = inlined_call_operand.vmem [shape: f32[1,32], index: 12, kind: input, shape index: {}]
  %s13 = inlined_call_operand.hbm [shape: f32[32,128], index: 13, kind: input, shape index: {}]
  %s14 = inlined_call_operand.vmem [shape: f32[1,128], index: 14, kind: input, shape index: {}]
  %s15 = inlined_call_operand.vmem [shape: f32[128,32], index: 15, kind: input, shape index: {}]
  %s16 = inlined_call_operand.vmem [shape: f32[1,32], index: 16, kind: input, shape index: {}]
  %s17 = inlined_call_operand.vmem [shape: f32[1,32], index: 17, kind: input, shape index: {}]
  %s18 = inlined_call_operand.vmem [shape: f32[1,32], index: 18, kind: input, shape index: {}]
  %s19 = inlined_call_operand.vmem [shape: f32[1,32], index: 19, kind: input, shape index: {}]
  %s20 = inlined_call_operand.vmem [shape: f32[1,32], index: 20, kind: input, shape index: {}]
  %s21 = inlined_call_operand.vmem [shape: f32[1,32], index: 21, kind: input, shape index: {}]
  %s22 = inlined_call_operand.vmem [shape: f32[1,32], index: 22, kind: input, shape index: {}]
  %s23 = inlined_call_operand.hbm [shape: f32[2,8,32], index: 23, kind: output, shape index: {}]
  %s24 = sld [smem:[#allocation0]]
  $region141: #{tpu_custom_call.1} parent=0
    _
  %s26 = ssub.s32 1, %s24
  %s27 = scalar_select 0, %s26, %s24
  $region1: #{tpu_custom_call.1} parent=0
    #allocation2 [shape = 'u8[8192]{0}', space=vmem, size = 0x2000, scoped, tag = 'input window, operand 0']
    #allocation3 [shape = 's32[2]{0}', space=sflag, size = 0x8, scoped, tag = 'scoped memory for tpu_custom_call.1']
    #allocation4 [shape = 's32[2]{0}', space=sflag, size = 0x8, scoped, tag = 'scoped memory for tpu_custom_call.1']
    #allocation5 [shape = 'u8[8192]{0}', space=vmem, size = 0x2000, scoped, tag = 'input window, operand 1']
    #allocation6 [shape = 's32[2]{0}', space=sflag, size = 0x8, scoped, tag = 'scoped memory for tpu_custom_call.1']
    #allocation7 [shape = 'u8[4096]{0}', space=vmem, size = 0x1000, scoped, tag = 'input window, operand 2, single buffered']
    #allocation8 [shape = 'u8[16384]{0}', space=vmem, size = 0x4000, scoped, tag = 'input window, operand 13, single buffered']
    #allocation9 [shape = 's32[1]{0}', space=sflag, size = 0x4, scoped, tag = 'scoped memory for tpu_custom_call.1']
    #allocation10 [shape = 'u8[8192]{0}', space=vmem, size = 0x2000, scoped, tag = 'output window, operand 0']
    %28 = vsyncpa [#allocation3], 0
    %s29 = scalar_lea.sflag [#allocation3], 1
    %30 = vsyncpa %s29, 0
    %31 = vsyncpa [#allocation6], 0
    %s32 = scalar_lea.sflag [#allocation6], 1
    %33 = vsyncpa %s32, 0
    %34 = vsyncpa [#allocation9], 0
    %35 = vsyncpa [#allocation4], 0
    %s36 = scalar_lea.sflag [#allocation4], 1
    %37 = vsyncpa %s36, 0
    loop: start=0, step=1, limit=4
    $region2: #{tpu_custom_call.1} parent=1 // loop_pre_header
      _
    $region3: #{tpu_custom_call.1} parent=1 // loop_header
      %s39 = sphi 0, %s43
      %p40 = scmp.ge.s32.totalorder %s39, 4
      %s49 = sphi 0, %s51
      %s52 = sphi 0, %s49
      %s53 = sphi 0, %s52
      %s69 = sphi 0, %s53
      %s75 = sphi 0, %s77
      %s78 = sphi 0, %s75
      %s79 = sphi 0, %s78
      %s95 = sphi 0, %s79
      %s99 = sphi 0, %s99
      %s101 = sphi 0, %s99
      %s102 = sphi 0, %s101
      %s116 = sphi 0, %s102
      %s120 = sphi 0, %s120
      %s122 = sphi 0, %s120
      %s123 = sphi 0, %s122
      %s137 = sphi 0, %s123
      %s141 = sphi 0, %s141
      %s143 = sphi 0, %s141
      %s144 = sphi 0, %s143
      %s158 = sphi 0, %s144
      %s162 = sphi 0, %s162
      %s164 = sphi 0, %s162
      %s165 = sphi 0, %s164
      %s179 = sphi 0, %s165
      %s183 = sphi 0, %s183
      %s185 = sphi 0, %s183
      %s186 = sphi 0, %s185
      %s200 = sphi 0, %s186
      %s204 = sphi 0, %s204
      %s206 = sphi 0, %s204
      %s207 = sphi 0, %s206
      %s221 = sphi 0, %s207
      %s225 = sphi 0, %s225
      %s227 = sphi 0, %s225
      %s228 = sphi 0, %s227
      %s242 = sphi 0, %s228
      %s246 = sphi 0, %s246
      %s248 = sphi 0, %s246
      %s249 = sphi 0, %s248
      %s263 = sphi 0, %s249
      %s267 = sphi 0, %s267
      %s269 = sphi 0, %s267
      %s270 = sphi 0, %s269
      %s284 = sphi 0, %s270
      %s288 = sphi 0, %s288
      %s290 = sphi 0, %s288
      %s291 = sphi 0, %s290
      %s305 = sphi 0, %s291
      %s309 = sphi 0, %s309
      %s311 = sphi 0, %s309
      %s312 = sphi 0, %s311
      %s326 = sphi 0, %s312
      %s330 = sphi 0, %s330
      %s332 = sphi 0, %s330
      %s333 = sphi 0, %s332
      %s347 = sphi 0, %s333
      %s351 = sphi 0, %s351
      %s353 = sphi 0, %s351
      %s354 = sphi 0, %s353
      %s368 = sphi 0, %s354
      %s372 = sphi 0, %s372
      %s374 = sphi 0, %s372
      %s375 = sphi 0, %s374
      %s389 = sphi 0, %s375
      %s393 = sphi 0, %s393
      %s395 = sphi 0, %s393
      %s396 = sphi 0, %s395
      %s410 = sphi 0, %s396
      %s414 = sphi 0, %s414
      %s416 = sphi 0, %s414
      %s417 = sphi 0, %s416
      %s431 = sphi 0, %s417
      %s435 = sphi 0, %s435
      %s437 = sphi 0, %s435
      %s438 = sphi 0, %s437
      %s452 = sphi 0, %s438
      %s456 = sphi 0, %s456
      %s458 = sphi 0, %s456
      %s459 = sphi 0, %s458
      %s473 = sphi 0, %s459
      %s477 = sphi 0, %s477
      %s479 = sphi 0, %s477
      %s480 = sphi 0, %s479
      %s494 = sphi 0, %s480
      %s498 = sphi 0, %s498
      %s500 = sphi 0, %s498
      %s501 = sphi 0, %s500
      %s515 = sphi 0, %s501
      %s519 = sphi 0, %s519
      %s521 = sphi 0, %s519
      %s522 = sphi 0, %s521
      %s536 = sphi 0, %s522
      %s542 = sphi 0, %s544
      %s545 = sphi 0, %s542
      %s546 = sphi 0, %s545
      %s562 = sphi 0, %s546
    $region4: #{tpu_custom_call.1} parent=1 // loop_header_branch
      %42 = sbr.rel (%p40) target = $region8
    $region5: #{tpu_custom_call.1} parent=1 // loop_body
      %s44 = ssub.s32 %s39, 1
      %s45 = ssub.s32 %s39, 2
      %s46 = sadd.s32 %s39, 1
      %s47 = ssub.s32 %s39, %s46
      %p48 = scmp.eq.s32.totalorder %s47, 0
      %s50 = sadd.s32 %s49, 1
      %s51 = scalar_select %p48, %s49, %s50
      %p54 = pneg %p48
      %p55 = scmp.eq.s32.totalorder %s39, 1
      %p56 = por %p54, %p55
      %p57 = scmp.ne.s32.totalorder %s49, %s52
      %p58 = scmp.eq.s32.totalorder %s39, 0
      %p59 = por %p57, %p58
      %p60 = scmp.ne.s32.totalorder %s49, %s52
      %p61 = scmp.eq.s32.totalorder %s44, 1
      %p62 = por %p60, %p61
      %p63 = scmp.ne.s32.totalorder %s52, %s53
      %p64 = scmp.eq.s32.totalorder %s44, 0
      %p65 = por %p63, %p64
      %p66 = scmp.ne.s32.totalorder %s52, %s53
      %p67 = scmp.eq.s32.totalorder %s45, 1
      %p68 = por %p66, %p67
      %p70 = scmp.ne.s32.totalorder %s53, %s69
      %p71 = scmp.eq.s32.totalorder %s45, 0
      %p72 = por %p70, %p71
      %s73 = ssub.s32 %s39, %s46
      %p74 = scmp.eq.s32.totalorder %s73, 0
      %s76 = sadd.s32 %s75, 1
      %s77 = scalar_select %p74, %s75, %s76
      %p80 = pneg %p74
      %p81 = scmp.eq.s32.totalorder %s39, 1
      %p82 = por %p80, %p81
      %p83 = scmp.ne.s32.totalorder %s75, %s78
      %p84 = scmp.eq.s32.totalorder %s39, 0
      %p85 = por %p83, %p84
      %p86 = scmp.ne.s32.totalorder %s75, %s78
      %p87 = scmp.eq.s32.totalorder %s44, 1
      %p88 = por %p86, %p87
      %p89 = scmp.ne.s32.totalorder %s78, %s79
      %p90 = scmp.eq.s32.totalorder %s44, 0
      %p91 = por %p89, %p90
      %p92 = scmp.ne.s32.totalorder %s78, %s79
      %p93 = scmp.eq.s32.totalorder %s45, 1
      %p94 = por %p92, %p93
      %p96 = scmp.ne.s32.totalorder %s79, %s95
      %p97 = scmp.eq.s32.totalorder %s45, 0
      %p98 = por %p96, %p97
      %s100 = sadd.s32 %s99, 1
      %p103 = scmp.eq.s32.totalorder %s39, 1
      %p104 = scmp.ne.s32.totalorder %s99, %s101
      %p105 = scmp.eq.s32.totalorder %s39, 0
      %p106 = por %p104, %p105
      %p107 = scmp.ne.s32.totalorder %s99, %s101
      %p108 = scmp.eq.s32.totalorder %s44, 1
      %p109 = por %p107, %p108
      %p110 = scmp.ne.s32.totalorder %s101, %s102
      %p111 = scmp.eq.s32.totalorder %s44, 0
      %p112 = por %p110, %p111
      %p113 = scmp.ne.s32.totalorder %s101, %s102
      %p114 = scmp.eq.s32.totalorder %s45, 1
      %p115 = por %p113, %p114
      %p117 = scmp.ne.s32.totalorder %s102, %s116
      %p118 = scmp.eq.s32.totalorder %s45, 0
      %p119 = por %p117, %p118
      %s121 = sadd.s32 %s120, 1
      %p124 = scmp.eq.s32.totalorder %s39, 1
      %p125 = scmp.ne.s32.totalorder %s120, %s122
      %p126 = scmp.eq.s32.totalorder %s39, 0
      %p127 = por %p125, %p126
      %p128 = scmp.ne.s32.totalorder %s120, %s122
      %p129 = scmp.eq.s32.totalorder %s44, 1
      %p130 = por %p128, %p129
      %p131 = scmp.ne.s32.totalorder %s122, %s123
      %p132 = scmp.eq.s32.totalorder %s44, 0
      %p133 = por %p131, %p132
      %p134 = scmp.ne.s32.totalorder %s122, %s123
      %p135 = scmp.eq.s32.totalorder %s45, 1
      %p136 = por %p134, %p135
      %p138 = scmp.ne.s32.totalorder %s123, %s137
      %p139 = scmp.eq.s32.totalorder %s45, 0
      %p140 = por %p138, %p139
      %s142 = sadd.s32 %s141, 1
      %p145 = scmp.eq.s32.totalorder %s39, 1
      %p146 = scmp.ne.s32.totalorder %s141, %s143
      %p147 = scmp.eq.s32.totalorder %s39, 0
      %p148 = por %p146, %p147
      %p149 = scmp.ne.s32.totalorder %s141, %s143
      %p150 = scmp.eq.s32.totalorder %s44, 1
      %p151 = por %p149, %p150
      %p152 = scmp.ne.s32.totalorder %s143, %s144
      %p153 = scmp.eq.s32.totalorder %s44, 0
      %p154 = por %p152, %p153
      %p155 = scmp.ne.s32.totalorder %s143, %s144
      %p156 = scmp.eq.s32.totalorder %s45, 1
      %p157 = por %p155, %p156
      %p159 = scmp.ne.s32.totalorder %s144, %s158
      %p160 = scmp.eq.s32.totalorder %s45, 0
      %p161 = por %p159, %p160
      %s163 = sadd.s32 %s162, 1
      %p166 = scmp.eq.s32.totalorder %s39, 1
      %p167 = scmp.ne.s32.totalorder %s162, %s164
      %p168 = scmp.eq.s32.totalorder %s39, 0
      %p169 = por %p167, %p168
      %p170 = scmp.ne.s32.totalorder %s162, %s164
      %p171 = scmp.eq.s32.totalorder %s44, 1
      %p172 = por %p170, %p171
      %p173 = scmp.ne.s32.totalorder %s164, %s165
      %p174 = scmp.eq.s32.totalorder %s44, 0
      %p175 = por %p173, %p174
      %p176 = scmp.ne.s32.totalorder %s164, %s165
      %p177 = scmp.eq.s32.totalorder %s45, 1
      %p178 = por %p176, %p177
      %p180 = scmp.ne.s32.totalorder %s165, %s179
      %p181 = scmp.eq.s32.totalorder %s45, 0
      %p182 = por %p180, %p181
      %s184 = sadd.s32 %s183, 1
      %p187 = scmp.eq.s32.totalorder %s39, 1
      %p188 = scmp.ne.s32.totalorder %s183, %s185
      %p189 = scmp.eq.s32.totalorder %s39, 0
      %p190 = por %p188, %p189
      %p191 = scmp.ne.s32.totalorder %s183, %s185
      %p192 = scmp.eq.s32.totalorder %s44, 1
      %p193 = por %p191, %p192
      %p194 = scmp.ne.s32.totalorder %s185, %s186
      %p195 = scmp.eq.s32.totalorder %s44, 0
      %p196 = por %p194, %p195
      %p197 = scmp.ne.s32.totalorder %s185, %s186
      %p198 = scmp.eq.s32.totalorder %s45, 1
      %p199 = por %p197, %p198
      %p201 = scmp.ne.s32.totalorder %s186, %s200
      %p202 = scmp.eq.s32.totalorder %s45, 0
      %p203 = por %p201, %p202
      %s205 = sadd.s32 %s204, 1
      %p208 = scmp.eq.s32.totalorder %s39, 1
      %p209 = scmp.ne.s32.totalorder %s204, %s206
      %p210 = scmp.eq.s32.totalorder %s39, 0
      %p211 = por %p209, %p210
      %p212 = scmp.ne.s32.totalorder %s204, %s206
      %p213 = scmp.eq.s32.totalorder %s44, 1
      %p214 = por %p212, %p213
      %p215 = scmp.ne.s32.totalorder %s206, %s207
      %p216 = scmp.eq.s32.totalorder %s44, 0
      %p217 = por %p215, %p216
      %p218 = scmp.ne.s32.totalorder %s206, %s207
      %p219 = scmp.eq.s32.totalorder %s45, 1
      %p220 = por %p218, %p219
      %p222 = scmp.ne.s32.totalorder %s207, %s221
      %p223 = scmp.eq.s32.totalorder %s45, 0
      %p224 = por %p222, %p223
      %s226 = sadd.s32 %s225, 1
      %p229 = scmp.eq.s32.totalorder %s39, 1
      %p230 = scmp.ne.s32.totalorder %s225, %s227
      %p231 = scmp.eq.s32.totalorder %s39, 0
      %p232 = por %p230, %p231
      %p233 = scmp.ne.s32.totalorder %s225, %s227
      %p234 = scmp.eq.s32.totalorder %s44, 1
      %p235 = por %p233, %p234
      %p236 = scmp.ne.s32.totalorder %s227, %s228
      %p237 = scmp.eq.s32.totalorder %s44, 0
      %p238 = por %p236, %p237
      %p239 = scmp.ne.s32.totalorder %s227, %s228
      %p240 = scmp.eq.s32.totalorder %s45, 1
      %p241 = por %p239, %p240
      %p243 = scmp.ne.s32.totalorder %s228, %s242
      %p244 = scmp.eq.s32.totalorder %s45, 0
      %p245 = por %p243, %p244
      %s247 = sadd.s32 %s246, 1
      %p250 = scmp.eq.s32.totalorder %s39, 1
      %p251 = scmp.ne.s32.totalorder %s246, %s248
      %p252 = scmp.eq.s32.totalorder %s39, 0
      %p253 = por %p251, %p252
      %p254 = scmp.ne.s32.totalorder %s246, %s248
      %p255 = scmp.eq.s32.totalorder %s44, 1
      %p256 = por %p254, %p255
      %p257 = scmp.ne.s32.totalorder %s248, %s249
      %p258 = scmp.eq.s32.totalorder %s44, 0
      %p259 = por %p257, %p258
      %p260 = scmp.ne.s32.totalorder %s248, %s249
      %p261 = scmp.eq.s32.totalorder %s45, 1
      %p262 = por %p260, %p261
      %p264 = scmp.ne.s32.totalorder %s249, %s263
      %p265 = scmp.eq.s32.totalorder %s45, 0
      %p266 = por %p264, %p265
      %s268 = sadd.s32 %s267, 1
      %p271 = scmp.eq.s32.totalorder %s39, 1
      %p272 = scmp.ne.s32.totalorder %s267, %s269
      %p273 = scmp.eq.s32.totalorder %s39, 0
      %p274 = por %p272, %p273
      %p275 = scmp.ne.s32.totalorder %s267, %s269
      %p276 = scmp.eq.s32.totalorder %s44, 1
      %p277 = por %p275, %p276
      %p278 = scmp.ne.s32.totalorder %s269, %s270
      %p279 = scmp.eq.s32.totalorder %s44, 0
      %p280 = por %p278, %p279
      %p281 = scmp.ne.s32.totalorder %s269, %s270
      %p282 = scmp.eq.s32.totalorder %s45, 1
      %p283 = por %p281, %p282
      %p285 = scmp.ne.s32.totalorder %s270, %s284
      %p286 = scmp.eq.s32.totalorder %s45, 0
      %p287 = por %p285, %p286
      %s289 = sadd.s32 %s288, 1
      %p292 = scmp.eq.s32.totalorder %s39, 1
      %p293 = scmp.ne.s32.totalorder %s288, %s290
      %p294 = scmp.eq.s32.totalorder %s39, 0
      %p295 = por %p293, %p294
      %p296 = scmp.ne.s32.totalorder %s288, %s290
      %p297 = scmp.eq.s32.totalorder %s44, 1
      %p298 = por %p296, %p297
      %p299 = scmp.ne.s32.totalorder %s290, %s291
      %p300 = scmp.eq.s32.totalorder %s44, 0
      %p301 = por %p299, %p300
      %p302 = scmp.ne.s32.totalorder %s290, %s291
      %p303 = scmp.eq.s32.totalorder %s45, 1
      %p304 = por %p302, %p303
      %p306 = scmp.ne.s32.totalorder %s291, %s305
      %p307 = scmp.eq.s32.totalorder %s45, 0
      %p308 = por %p306, %p307
      %s310 = sadd.s32 %s309, 1
      %p313 = scmp.eq.s32.totalorder %s39, 1
      %p314 = scmp.ne.s32.totalorder %s309, %s311
      %p315 = scmp.eq.s32.totalorder %s39, 0
      %p316 = por %p314, %p315
      %p317 = scmp.ne.s32.totalorder %s309, %s311
      %p318 = scmp.eq.s32.totalorder %s44, 1
      %p319 = por %p317, %p318
      %p320 = scmp.ne.s32.totalorder %s311, %s312
      %p321 = scmp.eq.s32.totalorder %s44, 0
      %p322 = por %p320, %p321
      %p323 = scmp.ne.s32.totalorder %s311, %s312
      %p324 = scmp.eq.s32.totalorder %s45, 1
      %p325 = por %p323, %p324
      %p327 = scmp.ne.s32.totalorder %s312, %s326
      %p328 = scmp.eq.s32.totalorder %s45, 0
      %p329 = por %p327, %p328
      %s331 = sadd.s32 %s330, 1
      %p334 = scmp.eq.s32.totalorder %s39, 1
      %p335 = scmp.ne.s32.totalorder %s330, %s332
      %p336 = scmp.eq.s32.totalorder %s39, 0
      %p337 = por %p335, %p336
      %p338 = scmp.ne.s32.totalorder %s330, %s332
      %p339 = scmp.eq.s32.totalorder %s44, 1
      %p340 = por %p338, %p339
      %p341 = scmp.ne.s32.totalorder %s332, %s333
      %p342 = scmp.eq.s32.totalorder %s44, 0
      %p343 = por %p341, %p342
      %p344 = scmp.ne.s32.totalorder %s332, %s333
      %p345 = scmp.eq.s32.totalorder %s45, 1
      %p346 = por %p344, %p345
      %p348 = scmp.ne.s32.totalorder %s333, %s347
      %p349 = scmp.eq.s32.totalorder %s45, 0
      %p350 = por %p348, %p349
      %s352 = sadd.s32 %s351, 1
      %p355 = scmp.eq.s32.totalorder %s39, 1
      %p356 = scmp.ne.s32.totalorder %s351, %s353
      %p357 = scmp.eq.s32.totalorder %s39, 0
      %p358 = por %p356, %p357
      %p359 = scmp.ne.s32.totalorder %s351, %s353
      %p360 = scmp.eq.s32.totalorder %s44, 1
      %p361 = por %p359, %p360
      %p362 = scmp.ne.s32.totalorder %s353, %s354
      %p363 = scmp.eq.s32.totalorder %s44, 0
      %p364 = por %p362, %p363
      %p365 = scmp.ne.s32.totalorder %s353, %s354
      %p366 = scmp.eq.s32.totalorder %s45, 1
      %p367 = por %p365, %p366
      %p369 = scmp.ne.s32.totalorder %s354, %s368
      %p370 = scmp.eq.s32.totalorder %s45, 0
      %p371 = por %p369, %p370
      %s373 = sadd.s32 %s372, 1
      %p376 = scmp.eq.s32.totalorder %s39, 1
      %p377 = scmp.ne.s32.totalorder %s372, %s374
      %p378 = scmp.eq.s32.totalorder %s39, 0
      %p379 = por %p377, %p378
      %p380 = scmp.ne.s32.totalorder %s372, %s374
      %p381 = scmp.eq.s32.totalorder %s44, 1
      %p382 = por %p380, %p381
      %p383 = scmp.ne.s32.totalorder %s374, %s375
      %p384 = scmp.eq.s32.totalorder %s44, 0
      %p385 = por %p383, %p384
      %p386 = scmp.ne.s32.totalorder %s374, %s375
      %p387 = scmp.eq.s32.totalorder %s45, 1
      %p388 = por %p386, %p387
      %p390 = scmp.ne.s32.totalorder %s375, %s389
      %p391 = scmp.eq.s32.totalorder %s45, 0
      %p392 = por %p390, %p391
      %s394 = sadd.s32 %s393, 1
      %p397 = scmp.eq.s32.totalorder %s39, 1
      %p398 = scmp.ne.s32.totalorder %s393, %s395
      %p399 = scmp.eq.s32.totalorder %s39, 0
      %p400 = por %p398, %p399
      %p401 = scmp.ne.s32.totalorder %s393, %s395
      %p402 = scmp.eq.s32.totalorder %s44, 1
      %p403 = por %p401, %p402
      %p404 = scmp.ne.s32.totalorder %s395, %s396
      %p405 = scmp.eq.s32.totalorder %s44, 0
      %p406 = por %p404, %p405
      %p407 = scmp.ne.s32.totalorder %s395, %s396
      %p408 = scmp.eq.s32.totalorder %s45, 1
      %p409 = por %p407, %p408
      %p411 = scmp.ne.s32.totalorder %s396, %s410
      %p412 = scmp.eq.s32.totalorder %s45, 0
      %p413 = por %p411, %p412
      %s415 = sadd.s32 %s414, 1
      %p418 = scmp.eq.s32.totalorder %s39, 1
      %p419 = scmp.ne.s32.totalorder %s414, %s416
      %p420 = scmp.eq.s32.totalorder %s39, 0
      %p421 = por %p419, %p420
      %p422 = scmp.ne.s32.totalorder %s414, %s416
      %p423 = scmp.eq.s32.totalorder %s44, 1
      %p424 = por %p422, %p423
      %p425 = scmp.ne.s32.totalorder %s416, %s417
      %p426 = scmp.eq.s32.totalorder %s44, 0
      %p427 = por %p425, %p426
      %p428 = scmp.ne.s32.totalorder %s416, %s417
      %p429 = scmp.eq.s32.totalorder %s45, 1
      %p430 = por %p428, %p429
      %p432 = scmp.ne.s32.totalorder %s417, %s431
      %p433 = scmp.eq.s32.totalorder %s45, 0
      %p434 = por %p432, %p433
      %s436 = sadd.s32 %s435, 1
      %p439 = scmp.eq.s32.totalorder %s39, 1
      %p440 = scmp.ne.s32.totalorder %s435, %s437
      %p441 = scmp.eq.s32.totalorder %s39, 0
      %p442 = por %p440, %p441
      %p443 = scmp.ne.s32.totalorder %s435, %s437
      %p444 = scmp.eq.s32.totalorder %s44, 1
      %p445 = por %p443, %p444
      %p446 = scmp.ne.s32.totalorder %s437, %s438
      %p447 = scmp.eq.s32.totalorder %s44, 0
      %p448 = por %p446, %p447
      %p449 = scmp.ne.s32.totalorder %s437, %s438
      %p450 = scmp.eq.s32.totalorder %s45, 1
      %p451 = por %p449, %p450
      %p453 = scmp.ne.s32.totalorder %s438, %s452
      %p454 = scmp.eq.s32.totalorder %s45, 0
      %p455 = por %p453, %p454
      %s457 = sadd.s32 %s456, 1
      %p460 = scmp.eq.s32.totalorder %s39, 1
      %p461 = scmp.ne.s32.totalorder %s456, %s458
      %p462 = scmp.eq.s32.totalorder %s39, 0
      %p463 = por %p461, %p462
      %p464 = scmp.ne.s32.totalorder %s456, %s458
      %p465 = scmp.eq.s32.totalorder %s44, 1
      %p466 = por %p464, %p465
      %p467 = scmp.ne.s32.totalorder %s458, %s459
      %p468 = scmp.eq.s32.totalorder %s44, 0
      %p469 = por %p467, %p468
      %p470 = scmp.ne.s32.totalorder %s458, %s459
      %p471 = scmp.eq.s32.totalorder %s45, 1
      %p472 = por %p470, %p471
      %p474 = scmp.ne.s32.totalorder %s459, %s473
      %p475 = scmp.eq.s32.totalorder %s45, 0
      %p476 = por %p474, %p475
      %s478 = sadd.s32 %s477, 1
      %p481 = scmp.eq.s32.totalorder %s39, 1
      %p482 = scmp.ne.s32.totalorder %s477, %s479
      %p483 = scmp.eq.s32.totalorder %s39, 0
      %p484 = por %p482, %p483
      %p485 = scmp.ne.s32.totalorder %s477, %s479
      %p486 = scmp.eq.s32.totalorder %s44, 1
      %p487 = por %p485, %p486
      %p488 = scmp.ne.s32.totalorder %s479, %s480
      %p489 = scmp.eq.s32.totalorder %s44, 0
      %p490 = por %p488, %p489
      %p491 = scmp.ne.s32.totalorder %s479, %s480
      %p492 = scmp.eq.s32.totalorder %s45, 1
      %p493 = por %p491, %p492
      %p495 = scmp.ne.s32.totalorder %s480, %s494
      %p496 = scmp.eq.s32.totalorder %s45, 0
      %p497 = por %p495, %p496
      %s499 = sadd.s32 %s498, 1
      %p502 = scmp.eq.s32.totalorder %s39, 1
      %p503 = scmp.ne.s32.totalorder %s498, %s500
      %p504 = scmp.eq.s32.totalorder %s39, 0
      %p505 = por %p503, %p504
      %p506 = scmp.ne.s32.totalorder %s498, %s500
      %p507 = scmp.eq.s32.totalorder %s44, 1
      %p508 = por %p506, %p507
      %p509 = scmp.ne.s32.totalorder %s500, %s501
      %p510 = scmp.eq.s32.totalorder %s44, 0
      %p511 = por %p509, %p510
      %p512 = scmp.ne.s32.totalorder %s500, %s501
      %p513 = scmp.eq.s32.totalorder %s45, 1
      %p514 = por %p512, %p513
      %p516 = scmp.ne.s32.totalorder %s501, %s515
      %p517 = scmp.eq.s32.totalorder %s45, 0
      %p518 = por %p516, %p517
      %s520 = sadd.s32 %s519, 1
      %p523 = scmp.eq.s32.totalorder %s39, 1
      %p524 = scmp.ne.s32.totalorder %s519, %s521
      %p525 = scmp.eq.s32.totalorder %s39, 0
      %p526 = por %p524, %p525
      %p527 = scmp.ne.s32.totalorder %s519, %s521
      %p528 = scmp.eq.s32.totalorder %s44, 1
      %p529 = por %p527, %p528
      %p530 = scmp.ne.s32.totalorder %s521, %s522
      %p531 = scmp.eq.s32.totalorder %s44, 0
      %p532 = por %p530, %p531
      %p533 = scmp.ne.s32.totalorder %s521, %s522
      %p534 = scmp.eq.s32.totalorder %s45, 1
      %p535 = por %p533, %p534
      %p537 = scmp.ne.s32.totalorder %s522, %s536
      %p538 = scmp.eq.s32.totalorder %s45, 0
      %p539 = por %p537, %p538
      %s540 = ssub.s32 %s39, %s46
      %p541 = scmp.eq.s32.totalorder %s540, 0
      %s543 = sadd.s32 %s542, 1
      %s544 = scalar_select %p541, %s542, %s543
      %p547 = pneg %p541
      %p548 = scmp.eq.s32.totalorder %s39, 1
      %p549 = por %p547, %p548
      %p550 = scmp.ne.s32.totalorder %s542, %s545
      %p551 = scmp.eq.s32.totalorder %s39, 0
      %p552 = por %p550, %p551
      %p553 = scmp.ne.s32.totalorder %s542, %s545
      %p554 = scmp.eq.s32.totalorder %s44, 1
      %p555 = por %p553, %p554
      %p556 = scmp.ne.s32.totalorder %s545, %s546
      %p557 = scmp.eq.s32.totalorder %s44, 0
      %p558 = por %p556, %p557
      %p559 = scmp.ne.s32.totalorder %s545, %s546
      %p560 = scmp.eq.s32.totalorder %s45, 1
      %p561 = por %p559, %p560
      %p563 = scmp.ne.s32.totalorder %s546, %s562
      %p564 = scmp.eq.s32.totalorder %s45, 0
      %p565 = por %p563, %p564
      %p566 = scmp.le.s32.totalorder 1, %s39
      %p567 = scmp.lt.s32.totalorder %s39, 3
      %p568 = pnand %p566, %p567
      %p569 = pneg %p568
      // Predicated region
      $region9: #{tpu_custom_call.1} parent=5 // pred_check
        _
      $region10: #{tpu_custom_call.1} parent=5 // pred_check_branch
        %571 = sbr.rel (%p568) target = $region12
      $region11: #{tpu_custom_call.1} parent=5 // pred_region
        %s572 = ssub.s32 %s39, 1
        // Predicated region
        $region13: #{tpu_custom_call.1} parent=11 // pred_check
          %p573 = pneg %p112
        $region14: #{tpu_custom_call.1} parent=11 // pred_check_branch
          %575 = sbr.rel (%p573) target = $region16
        $region15: #{tpu_custom_call.1} parent=11 // pred_region
          %s577 = ssub.s32 128, 128
          %578 = vsyncadd [#allocation6], %s577
          %s580 = sshll.u32 [#allocation7], 4
          %s581 = int_to_ptr.vmem [resolvable:$true] %s580
          %583 = dma.hbm_to_vmem [thread:$0]  %s2, 128, %s581, [#allocation6]
        $region16: #{tpu_custom_call.1} parent=11 // pred_fallthru
          _
        // Predicated region
        $region17: #{tpu_custom_call.1} parent=11 // pred_check
          %p584 = pneg %p133
        $region18: #{tpu_custom_call.1} parent=11 // pred_check_branch
          %586 = sbr.rel (%p584) target = $region20
        $region19: #{tpu_custom_call.1} parent=11 // pred_region
          _
        $region20: #{tpu_custom_call.1} parent=11 // pred_fallthru
          _
        // Predicated region
        $region21: #{tpu_custom_call.1} parent=11 // pred_check
          %p587 = pneg %p154
        $region22: #{tpu_custom_call.1} parent=11 // pred_check_branch
          %589 = sbr.rel (%p587) target = $region24
        $region23: #{tpu_custom_call.1} parent=11 // pred_region
          _
        $region24: #{tpu_custom_call.1} parent=11 // pred_fallthru
          _
        // Predicated region
        $region25: #{tpu_custom_call.1} parent=11 // pred_check
          %p590 = pneg %p175
        $region26: #{tpu_custom_call.1} parent=11 // pred_check_branch
          %592 = sbr.rel (%p590) target = $region28
        $region27: #{tpu_custom_call.1} parent=11 // pred_region
          _
        $region28: #{tpu_custom_call.1} parent=11 // pred_fallthru
          _
        // Predicated region
        $region29: #{tpu_custom_call.1} parent=11 // pred_check
          %p593 = pneg %p196
        $region30: #{tpu_custom_call.1} parent=11 // pred_check_branch
          %595 = sbr.rel (%p593) target = $region32
        $region31: #{tpu_custom_call.1} parent=11 // pred_region
          _
        $region32: #{tpu_custom_call.1} parent=11 // pred_fallthru
          _
        // Predicated region
        $region33: #{tpu_custom_call.1} parent=11 // pred_check
          %p596 = pneg %p217
        $region34: #{tpu_custom_call.1} parent=11 // pred_check_branch
          %598 = sbr.rel (%p596) target = $region36
        $region35: #{tpu_custom_call.1} parent=11 // pred_region
          _
        $region36: #{tpu_custom_call.1} parent=11 // pred_fallthru
          _
        // Predicated region
        $region37: #{tpu_custom_call.1} parent=11 // pred_check
          %p599 = pneg %p238
        $region38: #{tpu_custom_call.1} parent=11 // pred_check_branch
          %601 = sbr.rel (%p599) target = $region40
        $region39: #{tpu_custom_call.1} parent=11 // pred_region
          _
        $region40: #{tpu_custom_call.1} parent=11 // pred_fallthru
          _
        // Predicated region
        $region41: #{tpu_custom_call.1} parent=11 // pred_check
          %p602 = pneg %p259
        $region42: #{tpu_custom_call.1} parent=11 // pred_check_branch
          %604 = sbr.rel (%p602) target = $region44
        $region43: #{tpu_custom_call.1} parent=11 // pred_region
          _
        $region44: #{tpu_custom_call.1} parent=11 // pred_fallthru
          _
        // Predicated region
        $region45: #{tpu_custom_call.1} parent=11 // pred_check
          %p605 = pneg %p280
        $region46: #{tpu_custom_call.1} parent=11 // pred_check_branch
          %607 = sbr.rel (%p605) target = $region48
        $region47: #{tpu_custom_call.1} parent=11 // pred_region
          _
        $region48: #{tpu_custom_call.1} parent=11 // pred_fallthru
          _
        // Predicated region
        $region49: #{tpu_custom_call.1} parent=11 // pred_check
          %p608 = pneg %p301
        $region50: #{tpu_custom_call.1} parent=11 // pred_check_branch
          %610 = sbr.rel (%p608) target = $region52
        $region51: #{tpu_custom_call.1} parent=11 // pred_region
          _
        $region52: #{tpu_custom_call.1} parent=11 // pred_fallthru
          _
        // Predicated region
        $region53: #{tpu_custom_call.1} parent=11 // pred_check
          %p611 = pneg %p322
        $region54: #{tpu_custom_call.1} parent=11 // pred_check_branch
          %613 = sbr.rel (%p611) target = $region56
        $region55: #{tpu_custom_call.1} parent=11 // pred_region
          _
        $region56: #{tpu_custom_call.1} parent=11 // pred_fallthru
          _
        // Predicated region
        $region57: #{tpu_custom_call.1} parent=11 // pred_check
          %p614 = pneg %p343
        $region58: #{tpu_custom_call.1} parent=11 // pred_check_branch
          %616 = sbr.rel (%p614) target = $region60
        $region59: #{tpu_custom_call.1} parent=11 // pred_region
          %s618 = ssub.s32 512, 512
          %619 = vsyncadd [#allocation9], %s618
          %s620 = sshll.u32 [#allocation8], 4
          %s621 = int_to_ptr.vmem [resolvable:$true] %s620
          %626 = dma.hbm_to_vmem [thread:$0]  %s13, 512, %s621, [#allocation9], 128, 128, 8
        $region60: #{tpu_custom_call.1} parent=11 // pred_fallthru
          _
        // Predicated region
        $region61: #{tpu_custom_call.1} parent=11 // pred_check
          %p627 = pneg %p364
        $region62: #{tpu_custom_call.1} parent=11 // pred_check_branch
          %629 = sbr.rel (%p627) target = $region64
        $region63: #{tpu_custom_call.1} parent=11 // pred_region
          _
        $region64: #{tpu_custom_call.1} parent=11 // pred_fallthru
          _
        // Predicated region
        $region65: #{tpu_custom_call.1} parent=11 // pred_check
          %p630 = pneg %p385
        $region66: #{tpu_custom_call.1} parent=11 // pred_check_branch
          %632 = sbr.rel (%p630) target = $region68
        $region67: #{tpu_custom_call.1} parent=11 // pred_region
          _
        $region68: #{tpu_custom_call.1} parent=11 // pred_fallthru
          _
        // Predicated region
        $region69: #{tpu_custom_call.1} parent=11 // pred_check
          %p633 = pneg %p406
        $region70: #{tpu_custom_call.1} parent=11 // pred_check_branch
          %635 = sbr.rel (%p633) target = $region72
        $region71: #{tpu_custom_call.1} parent=11 // pred_region
          _
        $region72: #{tpu_custom_call.1} parent=11 // pred_fallthru
          _
        // Predicated region
        $region73: #{tpu_custom_call.1} parent=11 // pred_check
          %p636 = pneg %p427
        $region74: #{tpu_custom_call.1} parent=11 // pred_check_branch
          %638 = sbr.rel (%p636) target = $region76
        $region75: #{tpu_custom_call.1} parent=11 // pred_region
          _
        $region76: #{tpu_custom_call.1} parent=11 // pred_fallthru
          _
        // Predicated region
        $region77: #{tpu_custom_call.1} parent=11 // pred_check
          %p639 = pneg %p448
        $region78: #{tpu_custom_call.1} parent=11 // pred_check_branch
          %641 = sbr.rel (%p639) target = $region80
        $region79: #{tpu_custom_call.1} parent=11 // pred_region
          _
        $region80: #{tpu_custom_call.1} parent=11 // pred_fallthru
          _
        // Predicated region
        $region81: #{tpu_custom_call.1} parent=11 // pred_check
          %p642 = pneg %p469
        $region82: #{tpu_custom_call.1} parent=11 // pred_check_branch
          %644 = sbr.rel (%p642) target = $region84
        $region83: #{tpu_custom_call.1} parent=11 // pred_region
          _
        $region84: #{tpu_custom_call.1} parent=11 // pred_fallthru
          _
        // Predicated region
        $region85: #{tpu_custom_call.1} parent=11 // pred_check
          %p645 = pneg %p490
        $region86: #{tpu_custom_call.1} parent=11 // pred_check_branch
          %647 = sbr.rel (%p645) target = $region88
        $region87: #{tpu_custom_call.1} parent=11 // pred_region
          _
        $region88: #{tpu_custom_call.1} parent=11 // pred_fallthru
          _
        // Predicated region
        $region89: #{tpu_custom_call.1} parent=11 // pred_check
          %p648 = pneg %p511
        $region90: #{tpu_custom_call.1} parent=11 // pred_check_branch
          %650 = sbr.rel (%p648) target = $region92
        $region91: #{tpu_custom_call.1} parent=11 // pred_region
          _
        $region92: #{tpu_custom_call.1} parent=11 // pred_fallthru
          _
        // Predicated region
        $region93: #{tpu_custom_call.1} parent=11 // pred_check
          %p651 = pneg %p532
        $region94: #{tpu_custom_call.1} parent=11 // pred_check_branch
          %653 = sbr.rel (%p651) target = $region96
        $region95: #{tpu_custom_call.1} parent=11 // pred_region
          _
        $region96: #{tpu_custom_call.1} parent=11 // pred_fallthru
          _
      $region12: #{tpu_custom_call.1} parent=5 // pred_fallthru
        _
      %p654 = scmp.lt.s32.totalorder %s39, 2
      // Predicated region
      $region97: #{tpu_custom_call.1} parent=5 // pred_check
        %p655 = pneg %p654
      $region98: #{tpu_custom_call.1} parent=5 // pred_check_branch
        %657 = sbr.rel (%p655) target = $region100
      $region99: #{tpu_custom_call.1} parent=5 // pred_region
        // Predicated region
        $region101: #{tpu_custom_call.1} parent=99 // pred_check
          %p658 = pneg %p59
        $region102: #{tpu_custom_call.1} parent=99 // pred_check_branch
          %660 = sbr.rel (%p658) target = $region104
        $region103: #{tpu_custom_call.1} parent=99 // pred_region
          %s661 = sand.u32 %s49, 1
          %s662 = scalar_lea.sflag [#allocation3], %s661
          %s663 = sand.u32 %s49, 1
          %s664 = smul.addr %s663, 8
          %s665 = scalar_lea.vmem [#allocation2], %s664
          %s667 = ssub.s32 128, 128
          %668 = vsyncadd %s662, %s667
          %s669 = smul.addr %s39, 128
          %s670 = scalar_lea.hbm %s0, %s669
          %s672 = sshll.u32 %s665, 4
          %s673 = int_to_ptr.vmem [resolvable:$true] %s672
          %675 = dma.hbm_to_vmem [thread:$0]  %s670, 128, %s673, %s662
        $region104: #{tpu_custom_call.1} parent=99 // pred_fallthru
          _
        // Predicated region
        $region105: #{tpu_custom_call.1} parent=99 // pred_check
          %p676 = pneg %p85
        $region106: #{tpu_custom_call.1} parent=99 // pred_check_branch
          %678 = sbr.rel (%p676) target = $region108
        $region107: #{tpu_custom_call.1} parent=99 // pred_region
          %s679 = sand.u32 %s39, 1
          %s680 = scalar_lea.sflag [#allocation6], %s679
          %s681 = sand.u32 %s75, 1
          %s682 = smul.addr %s681, 8
          %s683 = scalar_lea.vmem [#allocation5], %s682
          %s685 = ssub.s32 128, 128
          %686 = vsyncadd %s680, %s685
          %s687 = smul.addr %s39, 128
          %s688 = scalar_lea.hbm %s1, %s687
          %s690 = sshll.u32 %s683, 4
          %s691 = int_to_ptr.vmem [resolvable:$true] %s690
          %693 = dma.hbm_to_vmem [thread:$0]  %s688, 128, %s691, %s680
        $region108: #{tpu_custom_call.1} parent=99 // pred_fallthru
          _
      $region100: #{tpu_custom_call.1} parent=5 // pred_fallthru
        _
      %p694 = scmp.le.s32.totalorder 1, %s39
      %p695 = scmp.lt.s32.totalorder %s39, 3
      %p696 = pnand %p694, %p695
      %p697 = pneg %p696
      // Predicated region
      $region109: #{tpu_custom_call.1} parent=5 // pred_check
        _
      $region110: #{tpu_custom_call.1} parent=5 // pred_check_branch
        %699 = sbr.rel (%p696) target = $region112
      $region111: #{tpu_custom_call.1} parent=5 // pred_region
        %s700 = ssub.s32 %s39, 1
        %s701 = sand.u32 %s52, 1
        %s702 = scalar_lea.sflag [#allocation3], %s701
        %s703 = sand.u32 %s52, 1
        %s704 = smul.addr %s703, 8
        %s705 = scalar_lea.vmem [#allocation2], %s704
        // Predicated region
        $region113: #{tpu_custom_call.1} parent=111 // pred_check
          %p706 = pneg %p65
        $region114: #{tpu_custom_call.1} parent=111 // pred_check_branch
          %708 = sbr.rel (%p706) target = $region116
        $region115: #{tpu_custom_call.1} parent=111 // pred_region
          %709 = dma.done %s702, 128
        $region116: #{tpu_custom_call.1} parent=111 // pred_fallthru
          _
        %s710 = sand.u32 %s44, 1
        %s711 = scalar_lea.sflag [#allocation6], %s710
        %s712 = sand.u32 %s78, 1
        %s713 = smul.addr %s712, 8
        %s714 = scalar_lea.vmem [#allocation5], %s713
        // Predicated region
        $region117: #{tpu_custom_call.1} parent=111 // pred_check
          %p715 = pneg %p91
        $region118: #{tpu_custom_call.1} parent=111 // pred_check_branch
          %717 = sbr.rel (%p715) target = $region120
        $region119: #{tpu_custom_call.1} parent=111 // pred_region
          %718 = dma.done %s711, 128
        $region120: #{tpu_custom_call.1} parent=111 // pred_fallthru
          _
        // Predicated region
        $region121: #{tpu_custom_call.1} parent=111 // pred_check
          %p719 = pneg %p112
        $region122: #{tpu_custom_call.1} parent=111 // pred_check_branch
          %721 = sbr.rel (%p719) target = $region124
        $region123: #{tpu_custom_call.1} parent=111 // pred_region
          %722 = dma.done [#allocation6], 128
        $region124: #{tpu_custom_call.1} parent=111 // pred_fallthru
          _
        // Predicated region
        $region125: #{tpu_custom_call.1} parent=111 // pred_check
          %p723 = pneg %p343
        $region126: #{tpu_custom_call.1} parent=111 // pred_check_branch
          %725 = sbr.rel (%p723) target = $region128
        $region127: #{tpu_custom_call.1} parent=111 // pred_region
          %726 = dma.done [#allocation9], 512
        $region128: #{tpu_custom_call.1} parent=111 // pred_fallthru
          _
        %s727 = sand.u32 %s52, 1
        %s728 = scalar_lea.sflag [#allocation3], %s727
        %s729 = sand.u32 %s52, 1
        %s730 = smul.addr %s729, 8
        %s731 = scalar_lea.vmem [#allocation2], %s730
        %p732 = pneg %p65
        %p733 = pneg %p62
        %s734 = sand.u32 %s44, 1
        %s735 = scalar_lea.sflag [#allocation6], %s734
        %s736 = sand.u32 %s78, 1
        %s737 = smul.addr %s736, 8
        %s738 = scalar_lea.vmem [#allocation5], %s737
        %p739 = pneg %p91
        %p740 = pneg %p88
        %p741 = pneg %p112
        %p742 = pneg %p109
        %p743 = pneg %p133
        %p744 = pneg %p130
        %p745 = pneg %p154
        %p746 = pneg %p151
        %p747 = pneg %p175
        %p748 = pneg %p172
        %p749 = pneg %p196
        %p750 = pneg %p193
        %p751 = pneg %p217
        %p752 = pneg %p214
        %p753 = pneg %p238
        %p754 = pneg %p235
        %p755 = pneg %p259
        %p756 = pneg %p256
        %p757 = pneg %p280
        %p758 = pneg %p277
        %p759 = pneg %p301
        %p760 = pneg %p298
        %p761 = pneg %p322
        %p762 = pneg %p319
        %p763 = pneg %p343
        %p764 = pneg %p340
        %p765 = pneg %p364
        %p766 = pneg %p361
        %p767 = pneg %p385
        %p768 = pneg %p382
        %p769 = pneg %p406
        %p770 = pneg %p403
        %p771 = pneg %p427
        %p772 = pneg %p424
        %p773 = pneg %p448
        %p774 = pneg %p445
        %p775 = pneg %p469
        %p776 = pneg %p466
        %p777 = pneg %p490
        %p778 = pneg %p487
        %p779 = pneg %p511
        %p780 = pneg %p508
        %p781 = pneg %p532
        %p782 = pneg %p529
        %p783 = pneg %p558
        %p784 = pneg %p555
        %s785 = sand.u32 %s545, 1
        %s786 = scalar_lea.sflag [#allocation4], %s785
        %s787 = sand.u32 %s545, 1
        %s788 = smul.addr %s787, 8
        %s789 = scalar_lea.vmem [#allocation10], %s788
        %v790 = vld [vmem:[%s705] sm:$0xff]
        %v791 = vld [vmem:[%s714] sm:$0xff]
        %v792 = vld [vmem:[#allocation7] sm:$0xff]
        %v793 = vld [vmem:[%s3] sm:$0xff]
        %v794 = vld [vmem:[%s3 + $0x8] sm:$0xff]
        %v795 = vld [vmem:[%s3 + $0x10] sm:$0xff]
        %v796 = vld [vmem:[%s3 + $0x18] sm:$0xff]
        %v797 = vld [vmem:[%s4] sm:$0x1]
        %v799 = vlaneseq
        %v800 = vshrl.u32 %v799, 7
        %v801 = vsub.s32 0, %v800
        %v802 = vrot.slane %v797, %v801
        %vm804 = vcmask 261120
        %v806 = vsel %vm804, %v790, 0
        %808 = vmatprep.subr.mxu0 0.0
        %809 = vmatpush1.msra.mxu0 %v793
        %810 = vmatprep.subr.mxu0 0.0
        %811 = vmatpush1.msra.mxu0 %v794
        %812 = vmatprep.subr.mxu0 0.0
        %813 = vmatpush1.msra.mxu0 %v795
        %814 = vmatprep.subr.mxu0 0.0
        %815 = vmatpush1.msra.mxu0 %v796
        %816 = vmatprep.subr.mxu0 0.0
        %817 = vmatpush1.msra.mxu0 0.0
        %818 = vmatprep.subr.mxu0 0.0
        %819 = vmatpush1.msra.mxu0 0.0
        %820 = vmatprep.subr.mxu0 0.0
        %821 = vmatpush1.msra.mxu0 0.0
        %822 = vmatprep.subr.mxu0 0.0
        %823 = vmatpush1.msra.mxu0 0.0
        %824 = vmatprep.subr.mxu0 0.0
        %825 = vmatpush1.msra.mxu0 0.0
        %826 = vmatprep.subr.mxu0 0.0
        %827 = vmatpush1.msra.mxu0 0.0
        %828 = vmatprep.subr.mxu0 0.0
        %829 = vmatpush1.msra.mxu0 0.0
        %830 = vmatprep.subr.mxu0 0.0
        %831 = vmatpush1.msra.mxu0 0.0
        %832 = vmatprep.subr.mxu0 0.0
        %833 = vmatpush1.msra.mxu0 0.0
        %834 = vmatprep.subr.mxu0 0.0
        %835 = vmatpush1.msra.mxu0 0.0
        %836 = vmatprep.subr.mxu0 0.0
        %837 = vmatpush1.msra.mxu0 0.0
        %838 = vmatprep.subr.mxu0 0.0
        %839 = vmatpush1.msra.mxu0 0.0
        %840 = vmatprep.subr.mxu0 0.0
        %841 = vmatpush1.msra.mxu0 0.0
        %842 = vmatprep.subr.mxu0 0.0
        %843 = vmatpush1.msra.mxu0 0.0
        %844 = vmatprep.subr.mxu0 0.0
        %845 = vmatpush1.msra.mxu0 0.0
        %846 = vmatprep.subr.mxu0 0.0
        %847 = vmatpush1.msra.mxu0 0.0
        %848 = vmatprep.subr.mxu0 0.0
        %849 = vmatpush1.msra.mxu0 0.0
        %850 = vmatprep.subr.mxu0 0.0
        %851 = vmatpush1.msra.mxu0 0.0
        %852 = vmatprep.subr.mxu0 0.0
        %853 = vmatpush1.msra.mxu0 0.0
        %854 = vmatprep.subr.mxu0 0.0
        %855 = vmatpush1.msra.mxu0 0.0
        %856 = vmatprep.subr.mxu0 0.0
        %857 = vmatpush1.msra.mxu0 0.0
        %858 = vmatprep.subr.mxu0 0.0
        %859 = vmatpush1.msra.mxu0 0.0
        %860 = vmatprep.subr.mxu0 0.0
        %861 = vmatpush1.msra.mxu0 0.0
        %862 = vmatprep.subr.mxu0 0.0
        %863 = vmatpush1.msra.mxu0 0.0
        %864 = vmatprep.subr.mxu0 0.0
        %865 = vmatpush1.msra.mxu0 0.0
        %866 = vmatprep.subr.mxu0 0.0
        %867 = vmatpush1.msra.mxu0 0.0
        %868 = vmatprep.subr.mxu0 0.0
        %869 = vmatpush1.msra.mxu0 0.0
        %870 = vmatprep.subr.mxu0 0.0
        %871 = vmatpush1.msra.mxu0 0.0
        %872 = vmatprep.mubr.f32.mxu0 0.0
        %873 = vmatmul.mubr.f32.gmra.mrb[0].mxu0 %v806
        %v874 = vpop.f32.mrb[0].mxu0
        %v875 = vadd.f32 %v802, %v874
        %v876 = vpop.f32.mrb[0].mxu0
        %877 = vdwg.mxu0
        %v878 = vld [vmem:[%s5] sm:$0xff]
        %v879 = vld [vmem:[%s5 + $0x8] sm:$0xff]
        %v880 = vld [vmem:[%s5 + $0x10] sm:$0xff]
        %v881 = vld [vmem:[%s5 + $0x18] sm:$0xff]
        %v882 = vld [vmem:[%s6] sm:$0x1]
        %v883 = vmul.f32 %v875, 0.35355338
        %885 = vrot.lane.b32.xlu0 %v875, 96
        %v886 = vpop.permute.xlu0 %885
        %vm887 = vcmask 64512
        %v889 = vsel %vm887, %v883, 0
        %v891 = vsel %vm887, %v886, 0
        %893 = vmatprep.subr.mxu0 0.0
        %894 = vmatpush1.xpose.msra.mxu0 %v891
        %895 = vmatprep.subr.mxu0 0.0
        %896 = vmatpush1.xpose.msra.mxu0 0.0
        %897 = vmatprep.subr.mxu0 0.0
        %898 = vmatpush1.xpose.msra.mxu0 0.0
        %899 = vmatprep.subr.mxu0 0.0
        %900 = vmatpush1.xpose.msra.mxu0 0.0
        %901 = vmatprep.subr.mxu0 0.0
        %902 = vmatpush1.xpose.msra.mxu0 0.0
        %903 = vmatprep.subr.mxu0 0.0
        %904 = vmatpush1.xpose.msra.mxu0 0.0
        %905 = vmatprep.subr.mxu0 0.0
        %906 = vmatpush1.xpose.msra.mxu0 0.0
        %907 = vmatprep.subr.mxu0 0.0
        %908 = vmatpush1.xpose.msra.mxu0 0.0
        %909 = vmatprep.subr.mxu0 0.0
        %910 = vmatpush1.xpose.msra.mxu0 0.0
        %911 = vmatprep.subr.mxu0 0.0
        %912 = vmatpush1.xpose.msra.mxu0 0.0
        %913 = vmatprep.subr.mxu0 0.0
        %914 = vmatpush1.xpose.msra.mxu0 0.0
        %915 = vmatprep.subr.mxu0 0.0
        %916 = vmatpush1.xpose.msra.mxu0 0.0
        %917 = vmatprep.subr.mxu0 0.0
        %918 = vmatpush1.xpose.msra.mxu0 0.0
        %919 = vmatprep.subr.mxu0 0.0
        %920 = vmatpush1.xpose.msra.mxu0 0.0
        %921 = vmatprep.subr.mxu0 0.0
        %922 = vmatpush1.xpose.msra.mxu0 0.0
        %923 = vmatprep.subr.mxu0 0.0
        %924 = vmatpush1.xpose.msra.mxu0 0.0
        %925 = vmatprep.subr.mxu0 0.0
        %926 = vmatpush1.xpose.msra.mxu0 0.0
        %927 = vmatprep.subr.mxu0 0.0
        %928 = vmatpush1.xpose.msra.mxu0 0.0
        %929 = vmatprep.subr.mxu0 0.0
        %930 = vmatpush1.xpose.msra.mxu0 0.0
        %931 = vmatprep.subr.mxu0 0.0
        %932 = vmatpush1.xpose.msra.mxu0 0.0
        %933 = vmatprep.subr.mxu0 0.0
        %934 = vmatpush1.xpose.msra.mxu0 0.0
        %935 = vmatprep.subr.mxu0 0.0
        %936 = vmatpush1.xpose.msra.mxu0 0.0
        %937 = vmatprep.subr.mxu0 0.0
        %938 = vmatpush1.xpose.msra.mxu0 0.0
        %939 = vmatprep.subr.mxu0 0.0
        %940 = vmatpush1.xpose.msra.mxu0 0.0
        %941 = vmatprep.subr.mxu0 0.0
        %942 = vmatpush1.xpose.msra.mxu0 0.0
        %943 = vmatprep.subr.mxu0 0.0
        %944 = vmatpush1.xpose.msra.mxu0 0.0
        %945 = vmatprep.subr.mxu0 0.0
        %946 = vmatpush1.xpose.msra.mxu0 0.0
        %947 = vmatprep.subr.mxu0 0.0
        %948 = vmatpush1.xpose.msra.mxu0 0.0
        %949 = vmatprep.subr.mxu0 0.0
        %950 = vmatpush1.xpose.msra.mxu0 0.0
        %951 = vmatprep.subr.mxu0 0.0
        %952 = vmatpush1.xpose.msra.mxu0 0.0
        %953 = vmatprep.subr.mxu0 0.0
        %954 = vmatpush1.xpose.msra.mxu0 0.0
        %955 = vmatprep.subr.mxu0 0.0
        %956 = vmatpush1.xpose.msra.mxu0 0.0
        %957 = vmatprep.mubr.f32.mxu0 0.0
        %958 = vmatmul.mubr.f32.gmra.mrb[0].mxu0 %v889
        %v959 = vpop.f32.mrb[0].mxu0
        %v960 = vadd.f32 %v792, %v959
        %v961 = vpop.f32.mrb[0].mxu0
        %962 = vdwg.mxu0
        %v963 = vsel %vm887, %v960, -inf
        %964 = vmax.xlane.f32.xlu0 %v963
        %v965 = vpop.xlane.xlu0 %964
        %v966 = vsub.f32 %v960, %v965
        %v967 = vmul.f32 %v966, 1.442695
        %v968 = vpow.pop %v967
        %v969 = vsel %vm887, %v968, 0.0
        %970 = vadd.xlane.f32.xlu0 %v969
        %v971 = vpop.xlane.xlu0 %970
        %v972 = vrcp.pop %v971
        %v973 = vmul.f32 %v968, %v972
        %974 = vrot.lane.b32.xlu0 %v875, 64
        %v975 = vpop.permute.xlu0 %974
        %v978 = vsel %vm887, %v973, 0
        %980 = vmatprep.subr.mxu0 0.0
        %981 = vmatpush1.msra.mxu0 %v975
        %982 = vmatprep.subr.mxu0 0.0
        %983 = vmatpush1.msra.mxu0 0.0
        %984 = vmatprep.subr.mxu0 0.0
        %985 = vmatpush1.msra.mxu0 0.0
        %986 = vmatprep.subr.mxu0 0.0
        %987 = vmatpush1.msra.mxu0 0.0
        %988 = vmatprep.subr.mxu0 0.0
        %989 = vmatpush1.msra.mxu0 0.0
        %990 = vmatprep.subr.mxu0 0.0
        %991 = vmatpush1.msra.mxu0 0.0
        %992 = vmatprep.subr.mxu0 0.0
        %993 = vmatpush1.msra.mxu0 0.0
        %994 = vmatprep.subr.mxu0 0.0
        %995 = vmatpush1.msra.mxu0 0.0
        %996 = vmatprep.subr.mxu0 0.0
        %997 = vmatpush1.msra.mxu0 0.0
        %998 = vmatprep.subr.mxu0 0.0
        %999 = vmatpush1.msra.mxu0 0.0
        %1000 = vmatprep.subr.mxu0 0.0
        %1001 = vmatpush1.msra.mxu0 0.0
        %1002 = vmatprep.subr.mxu0 0.0
        %1003 = vmatpush1.msra.mxu0 0.0
        %1004 = vmatprep.subr.mxu0 0.0
        %1005 = vmatpush1.msra.mxu0 0.0
        %1006 = vmatprep.subr.mxu0 0.0
        %1007 = vmatpush1.msra.mxu0 0.0
        %1008 = vmatprep.subr.mxu0 0.0
        %1009 = vmatpush1.msra.mxu0 0.0
        %1010 = vmatprep.subr.mxu0 0.0
        %1011 = vmatpush1.msra.mxu0 0.0
        %1012 = vmatprep.subr.mxu0 0.0
        %1013 = vmatpush1.msra.mxu0 0.0
        %1014 = vmatprep.subr.mxu0 0.0
        %1015 = vmatpush1.msra.mxu0 0.0
        %1016 = vmatprep.subr.mxu0 0.0
        %1017 = vmatpush1.msra.mxu0 0.0
        %1018 = vmatprep.subr.mxu0 0.0
        %1019 = vmatpush1.msra.mxu0 0.0
        %1020 = vmatprep.subr.mxu0 0.0
        %1021 = vmatpush1.msra.mxu0 0.0
        %1022 = vmatprep.subr.mxu0 0.0
        %1023 = vmatpush1.msra.mxu0 0.0
        %1024 = vmatprep.subr.mxu0 0.0
        %1025 = vmatpush1.msra.mxu0 0.0
        %1026 = vmatprep.subr.mxu0 0.0
        %1027 = vmatpush1.msra.mxu0 0.0
        %1028 = vmatprep.subr.mxu0 0.0
        %1029 = vmatpush1.msra.mxu0 0.0
        %1030 = vmatprep.subr.mxu0 0.0
        %1031 = vmatpush1.msra.mxu0 0.0
        %1032 = vmatprep.subr.mxu0 0.0
        %1033 = vmatpush1.msra.mxu0 0.0
        %1034 = vmatprep.subr.mxu0 0.0
        %1035 = vmatpush1.msra.mxu0 0.0
        %1036 = vmatprep.subr.mxu0 0.0
        %1037 = vmatpush1.msra.mxu0 0.0
        %1038 = vmatprep.subr.mxu0 0.0
        %1039 = vmatpush1.msra.mxu0 0.0
        %1040 = vmatprep.subr.mxu0 0.0
        %1041 = vmatpush1.msra.mxu0 0.0
        %1042 = vmatprep.subr.mxu0 0.0
        %1043 = vmatpush1.msra.mxu0 0.0
        %1044 = vmatprep.mubr.f32.mxu0 0.0
        %1045 = vmatmul.mubr.f32.gmra.mrb[0].mxu0 %v978
        %v1046 = vpop.f32.mrb[0].mxu0
        %v1047 = vadd.f32 0.0, %v1046
        %v1048 = vpop.f32.mrb[0].mxu0
        %1049 = vdwg.mxu0
        %1050 = vrot.lane.b32.xlu0 %v883, 120
        %v1051 = vpop.permute.xlu0 %1050
        %1052 = vrot.lane.b32.xlu0 %v875, 88
        %v1053 = vpop.permute.xlu0 %1052
        %v1054 = vsel %vm887, %v1051, 0
        %v1056 = vsel %vm887, %v1053, 0
        %1058 = vmatprep.subr.mxu0 0.0
        %1059 = vmatpush1.xpose.msra.mxu0 %v1056
        %1060 = vmatprep.subr.mxu0 0.0
        %1061 = vmatpush1.xpose.msra.mxu0 0.0
        %1062 = vmatprep.subr.mxu0 0.0
        %1063 = vmatpush1.xpose.msra.mxu0 0.0
        %1064 = vmatprep.subr.mxu0 0.0
        %1065 = vmatpush1.xpose.msra.mxu0 0.0
        %1066 = vmatprep.subr.mxu0 0.0
        %1067 = vmatpush1.xpose.msra.mxu0 0.0
        %1068 = vmatprep.subr.mxu0 0.0
        %1069 = vmatpush1.xpose.msra.mxu0 0.0
        %1070 = vmatprep.subr.mxu0 0.0
        %1071 = vmatpush1.xpose.msra.mxu0 0.0
        %1072 = vmatprep.subr.mxu0 0.0
        %1073 = vmatpush1.xpose.msra.mxu0 0.0
        %1074 = vmatprep.subr.mxu0 0.0
        %1075 = vmatpush1.xpose.msra.mxu0 0.0
        %1076 = vmatprep.subr.mxu0 0.0
        %1077 = vmatpush1.xpose.msra.mxu0 0.0
        %1078 = vmatprep.subr.mxu0 0.0
        %1079 = vmatpush1.xpose.msra.mxu0 0.0
        %1080 = vmatprep.subr.mxu0 0.0
        %1081 = vmatpush1.xpose.msra.mxu0 0.0
        %1082 = vmatprep.subr.mxu0 0.0
        %1083 = vmatpush1.xpose.msra.mxu0 0.0
        %1084 = vmatprep.subr.mxu0 0.0
        %1085 = vmatpush1.xpose.msra.mxu0 0.0
        %1086 = vmatprep.subr.mxu0 0.0
        %1087 = vmatpush1.xpose.msra.mxu0 0.0
        %1088 = vmatprep.subr.mxu0 0.0
        %1089 = vmatpush1.xpose.msra.mxu0 0.0
        %1090 = vmatprep.subr.mxu0 0.0
        %1091 = vmatpush1.xpose.msra.mxu0 0.0
        %1092 = vmatprep.subr.mxu0 0.0
        %1093 = vmatpush1.xpose.msra.mxu0 0.0
        %1094 = vmatprep.subr.mxu0 0.0
        %1095 = vmatpush1.xpose.msra.mxu0 0.0
        %1096 = vmatprep.subr.mxu0 0.0
        %1097 = vmatpush1.xpose.msra.mxu0 0.0
        %1098 = vmatprep.subr.mxu0 0.0
        %1099 = vmatpush1.xpose.msra.mxu0 0.0
        %1100 = vmatprep.subr.mxu0 0.0
        %1101 = vmatpush1.xpose.msra.mxu0 0.0
        %1102 = vmatprep.subr.mxu0 0.0
        %1103 = vmatpush1.xpose.msra.mxu0 0.0
        %1104 = vmatprep.subr.mxu0 0.0
        %1105 = vmatpush1.xpose.msra.mxu0 0.0
        %1106 = vmatprep.subr.mxu0 0.0
        %1107 = vmatpush1.xpose.msra.mxu0 0.0
        %1108 = vmatprep.subr.mxu0 0.0
        %1109 = vmatpush1.xpose.msra.mxu0 0.0
        %1110 = vmatprep.subr.mxu0 0.0
        %1111 = vmatpush1.xpose.msra.mxu0 0.0
        %1112 = vmatprep.subr.mxu0 0.0
        %1113 = vmatpush1.xpose.msra.mxu0 0.0
        %1114 = vmatprep.subr.mxu0 0.0
        %1115 = vmatpush1.xpose.msra.mxu0 0.0
        %1116 = vmatprep.subr.mxu0 0.0
        %1117 = vmatpush1.xpose.msra.mxu0 0.0
        %1118 = vmatprep.subr.mxu0 0.0
        %1119 = vmatpush1.xpose.msra.mxu0 0.0
        %1120 = vmatprep.subr.mxu0 0.0
        %1121 = vmatpush1.xpose.msra.mxu0 0.0
        %1122 = vmatprep.mubr.f32.mxu0 0.0
        %1123 = vmatmul.mubr.f32.gmra.mrb[0].mxu0 %v1054
        %v1124 = vpop.f32.mrb[0].mxu0
        %v1125 = vadd.f32 %v792, %v1124
        %v1126 = vpop.f32.mrb[0].mxu0
        %1127 = vdwg.mxu0
        %v1128 = vsel %vm887, %v1125, -inf
        %1129 = vmax.xlane.f32.xlu0 %v1128
        %v1130 = vpop.xlane.xlu0 %1129
        %v1131 = vsub.f32 %v1125, %v1130
        %v1132 = vmul.f32 %v1131, 1.442695
        %v1133 = vpow.pop %v1132
        %v1134 = vsel %vm887, %v1133, 0.0
        %1135 = vadd.xlane.f32.xlu0 %v1134
        %v1136 = vpop.xlane.xlu0 %1135
        %v1137 = vrcp.pop %v1136
        %v1138 = vmul.f32 %v1133, %v1137
        %1139 = vrot.lane.b32.xlu0 %v875, 56
        %v1140 = vpop.permute.xlu0 %1139
        %v1143 = vsel %vm887, %v1138, 0
        %1145 = vmatprep.subr.mxu0 0.0
        %1146 = vmatpush1.msra.mxu0 %v1140
        %1147 = vmatprep.subr.mxu0 0.0
        %1148 = vmatpush1.msra.mxu0 0.0
        %1149 = vmatprep.subr.mxu0 0.0
        %1150 = vmatpush1.msra.mxu0 0.0
        %1151 = vmatprep.subr.mxu0 0.0
        %1152 = vmatpush1.msra.mxu0 0.0
        %1153 = vmatprep.subr.mxu0 0.0
        %1154 = vmatpush1.msra.mxu0 0.0
        %1155 = vmatprep.subr.mxu0 0.0
        %1156 = vmatpush1.msra.mxu0 0.0
        %1157 = vmatprep.subr.mxu0 0.0
        %1158 = vmatpush1.msra.mxu0 0.0
        %1159 = vmatprep.subr.mxu0 0.0
        %1160 = vmatpush1.msra.mxu0 0.0
        %1161 = vmatprep.subr.mxu0 0.0
        %1162 = vmatpush1.msra.mxu0 0.0
        %1163 = vmatprep.subr.mxu0 0.0
        %1164 = vmatpush1.msra.mxu0 0.0
        %1165 = vmatprep.subr.mxu0 0.0
        %1166 = vmatpush1.msra.mxu0 0.0
        %1167 = vmatprep.subr.mxu0 0.0
        %1168 = vmatpush1.msra.mxu0 0.0
        %1169 = vmatprep.subr.mxu0 0.0
        %1170 = vmatpush1.msra.mxu0 0.0
        %1171 = vmatprep.subr.mxu0 0.0
        %1172 = vmatpush1.msra.mxu0 0.0
        %1173 = vmatprep.subr.mxu0 0.0
        %1174 = vmatpush1.msra.mxu0 0.0
        %1175 = vmatprep.subr.mxu0 0.0
        %1176 = vmatpush1.msra.mxu0 0.0
        %1177 = vmatprep.subr.mxu0 0.0
        %1178 = vmatpush1.msra.mxu0 0.0
        %1179 = vmatprep.subr.mxu0 0.0
        %1180 = vmatpush1.msra.mxu0 0.0
        %1181 = vmatprep.subr.mxu0 0.0
        %1182 = vmatpush1.msra.mxu0 0.0
        %1183 = vmatprep.subr.mxu0 0.0
        %1184 = vmatpush1.msra.mxu0 0.0
        %1185 = vmatprep.subr.mxu0 0.0
        %1186 = vmatpush1.msra.mxu0 0.0
        %1187 = vmatprep.subr.mxu0 0.0
        %1188 = vmatpush1.msra.mxu0 0.0
        %1189 = vmatprep.subr.mxu0 0.0
        %1190 = vmatpush1.msra.mxu0 0.0
        %1191 = vmatprep.subr.mxu0 0.0
        %1192 = vmatpush1.msra.mxu0 0.0
        %1193 = vmatprep.subr.mxu0 0.0
        %1194 = vmatpush1.msra.mxu0 0.0
        %1195 = vmatprep.subr.mxu0 0.0
        %1196 = vmatpush1.msra.mxu0 0.0
        %1197 = vmatprep.subr.mxu0 0.0
        %1198 = vmatpush1.msra.mxu0 0.0
        %1199 = vmatprep.subr.mxu0 0.0
        %1200 = vmatpush1.msra.mxu0 0.0
        %1201 = vmatprep.subr.mxu0 0.0
        %1202 = vmatpush1.msra.mxu0 0.0
        %1203 = vmatprep.subr.mxu0 0.0
        %1204 = vmatpush1.msra.mxu0 0.0
        %1205 = vmatprep.subr.mxu0 0.0
        %1206 = vmatpush1.msra.mxu0 0.0
        %1207 = vmatprep.subr.mxu0 0.0
        %1208 = vmatpush1.msra.mxu0 0.0
        %1209 = vmatprep.mubr.f32.mxu0 0.0
        %1210 = vmatmul.mubr.f32.gmra.mrb[0].mxu0 %v1143
        %v1211 = vpop.f32.mrb[0].mxu0
        %v1212 = vadd.f32 0.0, %v1211
        %v1213 = vpop.f32.mrb[0].mxu0
        %1214 = vdwg.mxu0
        %v1216 = vsel %vm887, %v1212, 0
        %1218 = vmatprep.subr.mxu0 0.0
        %1219 = vmatpush1.msra.mxu0 %v879
        %1220 = vmatprep.subr.mxu0 0.0
        %1221 = vmatpush1.msra.mxu0 0.0
        %1222 = vmatprep.subr.mxu0 0.0
        %1223 = vmatpush1.msra.mxu0 0.0
        %1224 = vmatprep.subr.mxu0 0.0
        %1225 = vmatpush1.msra.mxu0 0.0
        %1226 = vmatprep.subr.mxu0 0.0
        %1227 = vmatpush1.msra.mxu0 0.0
        %1228 = vmatprep.subr.mxu0 0.0
        %1229 = vmatpush1.msra.mxu0 0.0
        %1230 = vmatprep.subr.mxu0 0.0
        %1231 = vmatpush1.msra.mxu0 0.0
        %1232 = vmatprep.subr.mxu0 0.0
        %1233 = vmatpush1.msra.mxu0 0.0
        %1234 = vmatprep.subr.mxu0 0.0
        %1235 = vmatpush1.msra.mxu0 0.0
        %1236 = vmatprep.subr.mxu0 0.0
        %1237 = vmatpush1.msra.mxu0 0.0
        %1238 = vmatprep.subr.mxu0 0.0
        %1239 = vmatpush1.msra.mxu0 0.0
        %1240 = vmatprep.subr.mxu0 0.0
        %1241 = vmatpush1.msra.mxu0 0.0
        %1242 = vmatprep.subr.mxu0 0.0
        %1243 = vmatpush1.msra.mxu0 0.0
        %1244 = vmatprep.subr.mxu0 0.0
        %1245 = vmatpush1.msra.mxu0 0.0
        %1246 = vmatprep.subr.mxu0 0.0
        %1247 = vmatpush1.msra.mxu0 0.0
        %1248 = vmatprep.subr.mxu0 0.0
        %1249 = vmatpush1.msra.mxu0 0.0
        %1250 = vmatprep.subr.mxu0 0.0
        %1251 = vmatpush1.msra.mxu0 0.0
        %1252 = vmatprep.subr.mxu0 0.0
        %1253 = vmatpush1.msra.mxu0 0.0
        %1254 = vmatprep.subr.mxu0 0.0
        %1255 = vmatpush1.msra.mxu0 0.0
        %1256 = vmatprep.subr.mxu0 0.0
        %1257 = vmatpush1.msra.mxu0 0.0
        %1258 = vmatprep.subr.mxu0 0.0
        %1259 = vmatpush1.msra.mxu0 0.0
        %1260 = vmatprep.subr.mxu0 0.0
        %1261 = vmatpush1.msra.mxu0 0.0
        %1262 = vmatprep.subr.mxu0 0.0
        %1263 = vmatpush1.msra.mxu0 0.0
        %1264 = vmatprep.subr.mxu0 0.0
        %1265 = vmatpush1.msra.mxu0 0.0
        %1266 = vmatprep.subr.mxu0 0.0
        %1267 = vmatpush1.msra.mxu0 0.0
        %1268 = vmatprep.subr.mxu0 0.0
        %1269 = vmatpush1.msra.mxu0 0.0
        %1270 = vmatprep.subr.mxu0 0.0
        %1271 = vmatpush1.msra.mxu0 0.0
        %1272 = vmatprep.subr.mxu0 0.0
        %1273 = vmatpush1.msra.mxu0 0.0
        %1274 = vmatprep.subr.mxu0 0.0
        %1275 = vmatpush1.msra.mxu0 0.0
        %1276 = vmatprep.subr.mxu0 0.0
        %1277 = vmatpush1.msra.mxu0 0.0
        %1278 = vmatprep.subr.mxu0 0.0
        %1279 = vmatpush1.msra.mxu0 0.0
        %1280 = vmatprep.subr.mxu0 0.0
        %1281 = vmatpush1.msra.mxu0 0.0
        %1282 = vmatprep.mubr.f32.mxu0 0.0
        %1283 = vmatmul.mubr.f32.gmra.mrb[0].mxu0 %v1216
        %v1284 = vpop.f32.mrb[0].mxu0
        %v1285 = vadd.f32 0.0, %v1284
        %v1286 = vpop.f32.mrb[0].mxu0
        %1287 = vdwg.mxu0
        %v1289 = vsel %vm887, %v1047, 0
        %1291 = vmatprep.subr.mxu0 0.0
        %1292 = vmatpush1.msra.mxu0 %v878
        %1293 = vmatprep.subr.mxu0 0.0
        %1294 = vmatpush1.msra.mxu0 0.0
        %1295 = vmatprep.subr.mxu0 0.0
        %1296 = vmatpush1.msra.mxu0 0.0
        %1297 = vmatprep.subr.mxu0 0.0
        %1298 = vmatpush1.msra.mxu0 0.0
        %1299 = vmatprep.subr.mxu0 0.0
        %1300 = vmatpush1.msra.mxu0 0.0
        %1301 = vmatprep.subr.mxu0 0.0
        %1302 = vmatpush1.msra.mxu0 0.0
        %1303 = vmatprep.subr.mxu0 0.0
        %1304 = vmatpush1.msra.mxu0 0.0
        %1305 = vmatprep.subr.mxu0 0.0
        %1306 = vmatpush1.msra.mxu0 0.0
        %1307 = vmatprep.subr.mxu0 0.0
        %1308 = vmatpush1.msra.mxu0 0.0
        %1309 = vmatprep.subr.mxu0 0.0
        %1310 = vmatpush1.msra.mxu0 0.0
        %1311 = vmatprep.subr.mxu0 0.0
        %1312 = vmatpush1.msra.mxu0 0.0
        %1313 = vmatprep.subr.mxu0 0.0
        %1314 = vmatpush1.msra.mxu0 0.0
        %1315 = vmatprep.subr.mxu0 0.0
        %1316 = vmatpush1.msra.mxu0 0.0
        %1317 = vmatprep.subr.mxu0 0.0
        %1318 = vmatpush1.msra.mxu0 0.0
        %1319 = vmatprep.subr.mxu0 0.0
        %1320 = vmatpush1.msra.mxu0 0.0
        %1321 = vmatprep.subr.mxu0 0.0
        %1322 = vmatpush1.msra.mxu0 0.0
        %1323 = vmatprep.subr.mxu0 0.0
        %1324 = vmatpush1.msra.mxu0 0.0
        %1325 = vmatprep.subr.mxu0 0.0
        %1326 = vmatpush1.msra.mxu0 0.0
        %1327 = vmatprep.subr.mxu0 0.0
        %1328 = vmatpush1.msra.mxu0 0.0
        %1329 = vmatprep.subr.mxu0 0.0
        %1330 = vmatpush1.msra.mxu0 0.0
        %1331 = vmatprep.subr.mxu0 0.0
        %1332 = vmatpush1.msra.mxu0 0.0
        %1333 = vmatprep.subr.mxu0 0.0
        %1334 = vmatpush1.msra.mxu0 0.0
        %1335 = vmatprep.subr.mxu0 0.0
        %1336 = vmatpush1.msra.mxu0 0.0
        %1337 = vmatprep.subr.mxu0 0.0
        %1338 = vmatpush1.msra.mxu0 0.0
        %1339 = vmatprep.subr.mxu0 0.0
        %1340 = vmatpush1.msra.mxu0 0.0
        %1341 = vmatprep.subr.mxu0 0.0
        %1342 = vmatpush1.msra.mxu0 0.0
        %1343 = vmatprep.subr.mxu0 0.0
        %1344 = vmatpush1.msra.mxu0 0.0
        %1345 = vmatprep.subr.mxu0 0.0
        %1346 = vmatpush1.msra.mxu0 0.0
        %1347 = vmatprep.subr.mxu0 0.0
        %1348 = vmatpush1.msra.mxu0 0.0
        %1349 = vmatprep.subr.mxu0 0.0
        %1350 = vmatpush1.msra.mxu0 0.0
        %1351 = vmatprep.subr.mxu0 0.0
        %1352 = vmatpush1.msra.mxu0 0.0
        %1353 = vmatprep.subr.mxu0 0.0
        %1354 = vmatpush1.msra.mxu0 0.0
        %1355 = vmatprep.mubr.f32.mxu0 0.0
        %1356 = vmatmul.mubr.f32.gmra.mrb[0].mxu0 %v1289
        %v1357 = vpop.f32.mrb[0].mxu0
        %v1358 = vadd.f32 %v1285, %v1357
        %v1359 = vpop.f32.mrb[0].mxu0
        %1360 = vdwg.mxu0
        %1361 = vrot.lane.b32.xlu0 %v883, 112
        %v1362 = vpop.permute.xlu0 %1361
        %1363 = vrot.lane.b32.xlu0 %v875, 80
        %v1364 = vpop.permute.xlu0 %1363
        %v1365 = vsel %vm887, %v1362, 0
        %v1367 = vsel %vm887, %v1364, 0
        %1369 = vmatprep.subr.mxu0 0.0
        %1370 = vmatpush1.xpose.msra.mxu0 %v1367
        %1371 = vmatprep.subr.mxu0 0.0
        %1372 = vmatpush1.xpose.msra.mxu0 0.0
        %1373 = vmatprep.subr.mxu0 0.0
        %1374 = vmatpush1.xpose.msra.mxu0 0.0
        %1375 = vmatprep.subr.mxu0 0.0
        %1376 = vmatpush1.xpose.msra.mxu0 0.0
        %1377 = vmatprep.subr.mxu0 0.0
        %1378 = vmatpush1.xpose.msra.mxu0 0.0
        %1379 = vmatprep.subr.mxu0 0.0
        %1380 = vmatpush1.xpose.msra.mxu0 0.0
        %1381 = vmatprep.subr.mxu0 0.0
        %1382 = vmatpush1.xpose.msra.mxu0 0.0
        %1383 = vmatprep.subr.mxu0 0.0
        %1384 = vmatpush1.xpose.msra.mxu0 0.0
        %1385 = vmatprep.subr.mxu0 0.0
        %1386 = vmatpush1.xpose.msra.mxu0 0.0
        %1387 = vmatprep.subr.mxu0 0.0
        %1388 = vmatpush1.xpose.msra.mxu0 0.0
        %1389 = vmatprep.subr.mxu0 0.0
        %1390 = vmatpush1.xpose.msra.mxu0 0.0
        %1391 = vmatprep.subr.mxu0 0.0
        %1392 = vmatpush1.xpose.msra.mxu0 0.0
        %1393 = vmatprep.subr.mxu0 0.0
        %1394 = vmatpush1.xpose.msra.mxu0 0.0
        %1395 = vmatprep.subr.mxu0 0.0
        %1396 = vmatpush1.xpose.msra.mxu0 0.0
        %1397 = vmatprep.subr.mxu0 0.0
        %1398 = vmatpush1.xpose.msra.mxu0 0.0
        %1399 = vmatprep.subr.mxu0 0.0
        %1400 = vmatpush1.xpose.msra.mxu0 0.0
        %1401 = vmatprep.subr.mxu0 0.0
        %1402 = vmatpush1.xpose.msra.mxu0 0.0
        %1403 = vmatprep.subr.mxu0 0.0
        %1404 = vmatpush1.xpose.msra.mxu0 0.0
        %1405 = vmatprep.subr.mxu0 0.0
        %1406 = vmatpush1.xpose.msra.mxu0 0.0
        %1407 = vmatprep.subr.mxu0 0.0
        %1408 = vmatpush1.xpose.msra.mxu0 0.0
        %1409 = vmatprep.subr.mxu0 0.0
        %1410 = vmatpush1.xpose.msra.mxu0 0.0
        %1411 = vmatprep.subr.mxu0 0.0
        %1412 = vmatpush1.xpose.msra.mxu0 0.0
        %1413 = vmatprep.subr.mxu0 0.0
        %1414 = vmatpush1.xpose.msra.mxu0 0.0
        %1415 = vmatprep.subr.mxu0 0.0
        %1416 = vmatpush1.xpose.msra.mxu0 0.0
        %1417 = vmatprep.subr.mxu0 0.0
        %1418 = vmatpush1.xpose.msra.mxu0 0.0
        %1419 = vmatprep.subr.mxu0 0.0
        %1420 = vmatpush1.xpose.msra.mxu0 0.0
        %1421 = vmatprep.subr.mxu0 0.0
        %1422 = vmatpush1.xpose.msra.mxu0 0.0
        %1423 = vmatprep.subr.mxu0 0.0
        %1424 = vmatpush1.xpose.msra.mxu0 0.0
        %1425 = vmatprep.subr.mxu0 0.0
        %1426 = vmatpush1.xpose.msra.mxu0 0.0
        %1427 = vmatprep.subr.mxu0 0.0
        %1428 = vmatpush1.xpose.msra.mxu0 0.0
        %1429 = vmatprep.subr.mxu0 0.0
        %1430 = vmatpush1.xpose.msra.mxu0 0.0
        %1431 = vmatprep.subr.mxu0 0.0
        %1432 = vmatpush1.xpose.msra.mxu0 0.0
        %1433 = vmatprep.mubr.f32.mxu0 0.0
        %1434 = vmatmul.mubr.f32.gmra.mrb[0].mxu0 %v1365
        %v1435 = vpop.f32.mrb[0].mxu0
        %v1436 = vadd.f32 %v792, %v1435
        %v1437 = vpop.f32.mrb[0].mxu0
        %1438 = vdwg.mxu0
        %v1439 = vsel %vm887, %v1436, -inf
        %1440 = vmax.xlane.f32.xlu0 %v1439
        %v1441 = vpop.xlane.xlu0 %1440
        %v1442 = vsub.f32 %v1436, %v1441
        %v1443 = vmul.f32 %v1442, 1.442695
        %v1444 = vpow.pop %v1443
        %v1445 = vsel %vm887, %v1444, 0.0
        %1446 = vadd.xlane.f32.xlu0 %v1445
        %v1447 = vpop.xlane.xlu0 %1446
        %v1448 = vrcp.pop %v1447
        %v1449 = vmul.f32 %v1444, %v1448
        %1450 = vrot.lane.b32.xlu0 %v875, 48
        %v1451 = vpop.permute.xlu0 %1450
        %v1454 = vsel %vm887, %v1449, 0
        %1456 = vmatprep.subr.mxu0 0.0
        %1457 = vmatpush1.msra.mxu0 %v1451
        %1458 = vmatprep.subr.mxu0 0.0
        %1459 = vmatpush1.msra.mxu0 0.0
        %1460 = vmatprep.subr.mxu0 0.0
        %1461 = vmatpush1.msra.mxu0 0.0
        %1462 = vmatprep.subr.mxu0 0.0
        %1463 = vmatpush1.msra.mxu0 0.0
        %1464 = vmatprep.subr.mxu0 0.0
        %1465 = vmatpush1.msra.mxu0 0.0
        %1466 = vmatprep.subr.mxu0 0.0
        %1467 = vmatpush1.msra.mxu0 0.0
        %1468 = vmatprep.subr.mxu0 0.0
        %1469 = vmatpush1.msra.mxu0 0.0
        %1470 = vmatprep.subr.mxu0 0.0
        %1471 = vmatpush1.msra.mxu0 0.0
        %1472 = vmatprep.subr.mxu0 0.0
        %1473 = vmatpush1.msra.mxu0 0.0
        %1474 = vmatprep.subr.mxu0 0.0
        %1475 = vmatpush1.msra.mxu0 0.0
        %1476 = vmatprep.subr.mxu0 0.0
        %1477 = vmatpush1.msra.mxu0 0.0
        %1478 = vmatprep.subr.mxu0 0.0
        %1479 = vmatpush1.msra.mxu0 0.0
        %1480 = vmatprep.subr.mxu0 0.0
        %1481 = vmatpush1.msra.mxu0 0.0
        %1482 = vmatprep.subr.mxu0 0.0
        %1483 = vmatpush1.msra.mxu0 0.0
        %1484 = vmatprep.subr.mxu0 0.0
        %1485 = vmatpush1.msra.mxu0 0.0
        %1486 = vmatprep.subr.mxu0 0.0
        %1487 = vmatpush1.msra.mxu0 0.0
        %1488 = vmatprep.subr.mxu0 0.0
        %1489 = vmatpush1.msra.mxu0 0.0
        %1490 = vmatprep.subr.mxu0 0.0
        %1491 = vmatpush1.msra.mxu0 0.0
        %1492 = vmatprep.subr.mxu0 0.0
        %1493 = vmatpush1.msra.mxu0 0.0
        %1494 = vmatprep.subr.mxu0 0.0
        %1495 = vmatpush1.msra.mxu0 0.0
        %1496 = vmatprep.subr.mxu0 0.0
        %1497 = vmatpush1.msra.mxu0 0.0
        %1498 = vmatprep.subr.mxu0 0.0
        %1499 = vmatpush1.msra.mxu0 0.0
        %1500 = vmatprep.subr.mxu0 0.0
        %1501 = vmatpush1.msra.mxu0 0.0
        %1502 = vmatprep.subr.mxu0 0.0
        %1503 = vmatpush1.msra.mxu0 0.0
        %1504 = vmatprep.subr.mxu0 0.0
        %1505 = vmatpush1.msra.mxu0 0.0
        %1506 = vmatprep.subr.mxu0 0.0
        %1507 = vmatpush1.msra.mxu0 0.0
        %1508 = vmatprep.subr.mxu0 0.0
        %1509 = vmatpush1.msra.mxu0 0.0
        %1510 = vmatprep.subr.mxu0 0.0
        %1511 = vmatpush1.msra.mxu0 0.0
        %1512 = vmatprep.subr.mxu0 0.0
        %1513 = vmatpush1.msra.mxu0 0.0
        %1514 = vmatprep.subr.mxu0 0.0
        %1515 = vmatpush1.msra.mxu0 0.0
        %1516 = vmatprep.subr.mxu0 0.0
        %1517 = vmatpush1.msra.mxu0 0.0
        %1518 = vmatprep.subr.mxu0 0.0
        %1519 = vmatpush1.msra.mxu0 0.0
        %1520 = vmatprep.mubr.f32.mxu0 0.0
        %1521 = vmatmul.mubr.f32.gmra.mrb[0].mxu0 %v1454
        %v1522 = vpop.f32.mrb[0].mxu0
        %v1523 = vadd.f32 0.0, %v1522
        %v1524 = vpop.f32.mrb[0].mxu0
        %1525 = vdwg.mxu0
        %v1527 = vsel %vm887, %v1523, 0
        %1529 = vmatprep.subr.mxu0 0.0
        %1530 = vmatpush1.msra.mxu0 %v880
        %1531 = vmatprep.subr.mxu0 0.0
        %1532 = vmatpush1.msra.mxu0 0.0
        %1533 = vmatprep.subr.mxu0 0.0
        %1534 = vmatpush1.msra.mxu0 0.0
        %1535 = vmatprep.subr.mxu0 0.0
        %1536 = vmatpush1.msra.mxu0 0.0
        %1537 = vmatprep.subr.mxu0 0.0
        %1538 = vmatpush1.msra.mxu0 0.0
        %1539 = vmatprep.subr.mxu0 0.0
        %1540 = vmatpush1.msra.mxu0 0.0
        %1541 = vmatprep.subr.mxu0 0.0
        %1542 = vmatpush1.msra.mxu0 0.0
        %1543 = vmatprep.subr.mxu0 0.0
        %1544 = vmatpush1.msra.mxu0 0.0
        %1545 = vmatprep.subr.mxu0 0.0
        %1546 = vmatpush1.msra.mxu0 0.0
        %1547 = vmatprep.subr.mxu0 0.0
        %1548 = vmatpush1.msra.mxu0 0.0
        %1549 = vmatprep.subr.mxu0 0.0
        %1550 = vmatpush1.msra.mxu0 0.0
        %1551 = vmatprep.subr.mxu0 0.0
        %1552 = vmatpush1.msra.mxu0 0.0
        %1553 = vmatprep.subr.mxu0 0.0
        %1554 = vmatpush1.msra.mxu0 0.0
        %1555 = vmatprep.subr.mxu0 0.0
        %1556 = vmatpush1.msra.mxu0 0.0
        %1557 = vmatprep.subr.mxu0 0.0
        %1558 = vmatpush1.msra.mxu0 0.0
        %1559 = vmatprep.subr.mxu0 0.0
        %1560 = vmatpush1.msra.mxu0 0.0
        %1561 = vmatprep.subr.mxu0 0.0
        %1562 = vmatpush1.msra.mxu0 0.0
        %1563 = vmatprep.subr.mxu0 0.0
        %1564 = vmatpush1.msra.mxu0 0.0
        %1565 = vmatprep.subr.mxu0 0.0
        %1566 = vmatpush1.msra.mxu0 0.0
        %1567 = vmatprep.subr.mxu0 0.0
        %1568 = vmatpush1.msra.mxu0 0.0
        %1569 = vmatprep.subr.mxu0 0.0
        %1570 = vmatpush1.msra.mxu0 0.0
        %1571 = vmatprep.subr.mxu0 0.0
        %1572 = vmatpush1.msra.mxu0 0.0
        %1573 = vmatprep.subr.mxu0 0.0
        %1574 = vmatpush1.msra.mxu0 0.0
        %1575 = vmatprep.subr.mxu0 0.0
        %1576 = vmatpush1.msra.mxu0 0.0
        %1577 = vmatprep.subr.mxu0 0.0
        %1578 = vmatpush1.msra.mxu0 0.0
        %1579 = vmatprep.subr.mxu0 0.0
        %1580 = vmatpush1.msra.mxu0 0.0
        %1581 = vmatprep.subr.mxu0 0.0
        %1582 = vmatpush1.msra.mxu0 0.0
        %1583 = vmatprep.subr.mxu0 0.0
        %1584 = vmatpush1.msra.mxu0 0.0
        %1585 = vmatprep.subr.mxu0 0.0
        %1586 = vmatpush1.msra.mxu0 0.0
        %1587 = vmatprep.subr.mxu0 0.0
        %1588 = vmatpush1.msra.mxu0 0.0
        %1589 = vmatprep.subr.mxu0 0.0
        %1590 = vmatpush1.msra.mxu0 0.0
        %1591 = vmatprep.subr.mxu0 0.0
        %1592 = vmatpush1.msra.mxu0 0.0
        %1593 = vmatprep.mubr.f32.mxu0 0.0
        %1594 = vmatmul.mubr.f32.gmra.mrb[0].mxu0 %v1527
        %v1595 = vpop.f32.mrb[0].mxu0
        %v1596 = vadd.f32 0.0, %v1595
        %v1597 = vpop.f32.mrb[0].mxu0
        %1598 = vdwg.mxu0
        %v1599 = vadd.f32 %v1358, %v1596
        %1600 = vrot.lane.b32.xlu0 %v883, 104
        %v1601 = vpop.permute.xlu0 %1600
        %1602 = vrot.lane.b32.xlu0 %v875, 72
        %v1603 = vpop.permute.xlu0 %1602
        %v1604 = vsel %vm887, %v1601, 0
        %v1606 = vsel %vm887, %v1603, 0
        %1608 = vmatprep.subr.mxu0 0.0
        %1609 = vmatpush1.xpose.msra.mxu0 %v1606
        %1610 = vmatprep.subr.mxu0 0.0
        %1611 = vmatpush1.xpose.msra.mxu0 0.0
        %1612 = vmatprep.subr.mxu0 0.0
        %1613 = vmatpush1.xpose.msra.mxu0 0.0
        %1614 = vmatprep.subr.mxu0 0.0
        %1615 = vmatpush1.xpose.msra.mxu0 0.0
        %1616 = vmatprep.subr.mxu0 0.0
        %1617 = vmatpush1.xpose.msra.mxu0 0.0
        %1618 = vmatprep.subr.mxu0 0.0
        %1619 = vmatpush1.xpose.msra.mxu0 0.0
        %1620 = vmatprep.subr.mxu0 0.0
        %1621 = vmatpush1.xpose.msra.mxu0 0.0
        %1622 = vmatprep.subr.mxu0 0.0
        %1623 = vmatpush1.xpose.msra.mxu0 0.0
        %1624 = vmatprep.subr.mxu0 0.0
        %1625 = vmatpush1.xpose.msra.mxu0 0.0
        %1626 = vmatprep.subr.mxu0 0.0
        %1627 = vmatpush1.xpose.msra.mxu0 0.0
        %1628 = vmatprep.subr.mxu0 0.0
        %1629 = vmatpush1.xpose.msra.mxu0 0.0
        %1630 = vmatprep.subr.mxu0 0.0
        %1631 = vmatpush1.xpose.msra.mxu0 0.0
        %1632 = vmatprep.subr.mxu0 0.0
        %1633 = vmatpush1.xpose.msra.mxu0 0.0
        %1634 = vmatprep.subr.mxu0 0.0
        %1635 = vmatpush1.xpose.msra.mxu0 0.0
        %1636 = vmatprep.subr.mxu0 0.0
        %1637 = vmatpush1.xpose.msra.mxu0 0.0
        %1638 = vmatprep.subr.mxu0 0.0
        %1639 = vmatpush1.xpose.msra.mxu0 0.0
        %1640 = vmatprep.subr.mxu0 0.0
        %1641 = vmatpush1.xpose.msra.mxu0 0.0
        %1642 = vmatprep.subr.mxu0 0.0
        %1643 = vmatpush1.xpose.msra.mxu0 0.0
        %1644 = vmatprep.subr.mxu0 0.0
        %1645 = vmatpush1.xpose.msra.mxu0 0.0
        %1646 = vmatprep.subr.mxu0 0.0
        %1647 = vmatpush1.xpose.msra.mxu0 0.0
        %1648 = vmatprep.subr.mxu0 0.0
        %1649 = vmatpush1.xpose.msra.mxu0 0.0
        %1650 = vmatprep.subr.mxu0 0.0
        %1651 = vmatpush1.xpose.msra.mxu0 0.0
        %1652 = vmatprep.subr.mxu0 0.0
        %1653 = vmatpush1.xpose.msra.mxu0 0.0
        %1654 = vmatprep.subr.mxu0 0.0
        %1655 = vmatpush1.xpose.msra.mxu0 0.0
        %1656 = vmatprep.subr.mxu0 0.0
        %1657 = vmatpush1.xpose.msra.mxu0 0.0
        %1658 = vmatprep.subr.mxu0 0.0
        %1659 = vmatpush1.xpose.msra.mxu0 0.0
        %1660 = vmatprep.subr.mxu0 0.0
        %1661 = vmatpush1.xpose.msra.mxu0 0.0
        %1662 = vmatprep.subr.mxu0 0.0
        %1663 = vmatpush1.xpose.msra.mxu0 0.0
        %1664 = vmatprep.subr.mxu0 0.0
        %1665 = vmatpush1.xpose.msra.mxu0 0.0
        %1666 = vmatprep.subr.mxu0 0.0
        %1667 = vmatpush1.xpose.msra.mxu0 0.0
        %1668 = vmatprep.subr.mxu0 0.0
        %1669 = vmatpush1.xpose.msra.mxu0 0.0
        %1670 = vmatprep.subr.mxu0 0.0
        %1671 = vmatpush1.xpose.msra.mxu0 0.0
        %1672 = vmatprep.mubr.f32.mxu0 0.0
        %1673 = vmatmul.mubr.f32.gmra.mrb[0].mxu0 %v1604
        %v1674 = vpop.f32.mrb[0].mxu0
        %v1675 = vadd.f32 %v792, %v1674
        %v1676 = vpop.f32.mrb[0].mxu0
        %1677 = vdwg.mxu0
        %v1678 = vsel %vm887, %v1675, -inf
        %1679 = vmax.xlane.f32.xlu0 %v1678
        %v1680 = vpop.xlane.xlu0 %1679
        %v1681 = vsub.f32 %v1675, %v1680
        %v1682 = vmul.f32 %v1681, 1.442695
        %v1683 = vpow.pop %v1682
        %v1684 = vsel %vm887, %v1683, 0.0
        %1685 = vadd.xlane.f32.xlu0 %v1684
        %v1686 = vpop.xlane.xlu0 %1685
        %v1687 = vrcp.pop %v1686
        %v1688 = vmul.f32 %v1683, %v1687
        %1689 = vrot.lane.b32.xlu0 %v875, 40
        %v1690 = vpop.permute.xlu0 %1689
        %v1693 = vsel %vm887, %v1688, 0
        %1695 = vmatprep.subr.mxu0 0.0
        %1696 = vmatpush1.msra.mxu0 %v1690
        %1697 = vmatprep.subr.mxu0 0.0
        %1698 = vmatpush1.msra.mxu0 0.0
        %1699 = vmatprep.subr.mxu0 0.0
        %1700 = vmatpush1.msra.mxu0 0.0
        %1701 = vmatprep.subr.mxu0 0.0
        %1702 = vmatpush1.msra.mxu0 0.0
        %1703 = vmatprep.subr.mxu0 0.0
        %1704 = vmatpush1.msra.mxu0 0.0
        %1705 = vmatprep.subr.mxu0 0.0
        %1706 = vmatpush1.msra.mxu0 0.0
        %1707 = vmatprep.subr.mxu0 0.0
        %1708 = vmatpush1.msra.mxu0 0.0
        %1709 = vmatprep.subr.mxu0 0.0
        %1710 = vmatpush1.msra.mxu0 0.0
        %1711 = vmatprep.subr.mxu0 0.0
        %1712 = vmatpush1.msra.mxu0 0.0
        %1713 = vmatprep.subr.mxu0 0.0
        %1714 = vmatpush1.msra.mxu0 0.0
        %1715 = vmatprep.subr.mxu0 0.0
        %1716 = vmatpush1.msra.mxu0 0.0
        %1717 = vmatprep.subr.mxu0 0.0
        %1718 = vmatpush1.msra.mxu0 0.0
        %1719 = vmatprep.subr.mxu0 0.0
        %1720 = vmatpush1.msra.mxu0 0.0
        %1721 = vmatprep.subr.mxu0 0.0
        %1722 = vmatpush1.msra.mxu0 0.0
        %1723 = vmatprep.subr.mxu0 0.0
        %1724 = vmatpush1.msra.mxu0 0.0
        %1725 = vmatprep.subr.mxu0 0.0
        %1726 = vmatpush1.msra.mxu0 0.0
        %1727 = vmatprep.subr.mxu0 0.0
        %1728 = vmatpush1.msra.mxu0 0.0
        %1729 = vmatprep.subr.mxu0 0.0
        %1730 = vmatpush1.msra.mxu0 0.0
        %1731 = vmatprep.subr.mxu0 0.0
        %1732 = vmatpush1.msra.mxu0 0.0
        %1733 = vmatprep.subr.mxu0 0.0
        %1734 = vmatpush1.msra.mxu0 0.0
        %1735 = vmatprep.subr.mxu0 0.0
        %1736 = vmatpush1.msra.mxu0 0.0
        %1737 = vmatprep.subr.mxu0 0.0
        %1738 = vmatpush1.msra.mxu0 0.0
        %1739 = vmatprep.subr.mxu0 0.0
        %1740 = vmatpush1.msra.mxu0 0.0
        %1741 = vmatprep.subr.mxu0 0.0
        %1742 = vmatpush1.msra.mxu0 0.0
        %1743 = vmatprep.subr.mxu0 0.0
        %1744 = vmatpush1.msra.mxu0 0.0
        %1745 = vmatprep.subr.mxu0 0.0
        %1746 = vmatpush1.msra.mxu0 0.0
        %1747 = vmatprep.subr.mxu0 0.0
        %1748 = vmatpush1.msra.mxu0 0.0
        %1749 = vmatprep.subr.mxu0 0.0
        %1750 = vmatpush1.msra.mxu0 0.0
        %1751 = vmatprep.subr.mxu0 0.0
        %1752 = vmatpush1.msra.mxu0 0.0
        %1753 = vmatprep.subr.mxu0 0.0
        %1754 = vmatpush1.msra.mxu0 0.0
        %1755 = vmatprep.subr.mxu0 0.0
        %1756 = vmatpush1.msra.mxu0 0.0
        %1757 = vmatprep.subr.mxu0 0.0
        %1758 = vmatpush1.msra.mxu0 0.0
        %1759 = vmatprep.mubr.f32.mxu0 0.0
        %1760 = vmatmul.mubr.f32.gmra.mrb[0].mxu0 %v1693
        %v1761 = vpop.f32.mrb[0].mxu0
        %v1762 = vadd.f32 0.0, %v1761
        %v1763 = vpop.f32.mrb[0].mxu0
        %1764 = vdwg.mxu0
        %v1766 = vsel %vm887, %v1762, 0
        %1768 = vmatprep.subr.mxu0 0.0
        %1769 = vmatpush1.msra.mxu0 %v881
        %1770 = vmatprep.subr.mxu0 0.0
        %1771 = vmatpush1.msra.mxu0 0.0
        %1772 = vmatprep.subr.mxu0 0.0
        %1773 = vmatpush1.msra.mxu0 0.0
        %1774 = vmatprep.subr.mxu0 0.0
        %1775 = vmatpush1.msra.mxu0 0.0
        %1776 = vmatprep.subr.mxu0 0.0
        %1777 = vmatpush1.msra.mxu0 0.0
        %1778 = vmatprep.subr.mxu0 0.0
        %1779 = vmatpush1.msra.mxu0 0.0
        %1780 = vmatprep.subr.mxu0 0.0
        %1781 = vmatpush1.msra.mxu0 0.0
        %1782 = vmatprep.subr.mxu0 0.0
        %1783 = vmatpush1.msra.mxu0 0.0
        %1784 = vmatprep.subr.mxu0 0.0
        %1785 = vmatpush1.msra.mxu0 0.0
        %1786 = vmatprep.subr.mxu0 0.0
        %1787 = vmatpush1.msra.mxu0 0.0
        %1788 = vmatprep.subr.mxu0 0.0
        %1789 = vmatpush1.msra.mxu0 0.0
        %1790 = vmatprep.subr.mxu0 0.0
        %1791 = vmatpush1.msra.mxu0 0.0
        %1792 = vmatprep.subr.mxu0 0.0
        %1793 = vmatpush1.msra.mxu0 0.0
        %1794 = vmatprep.subr.mxu0 0.0
        %1795 = vmatpush1.msra.mxu0 0.0
        %1796 = vmatprep.subr.mxu0 0.0
        %1797 = vmatpush1.msra.mxu0 0.0
        %1798 = vmatprep.subr.mxu0 0.0
        %1799 = vmatpush1.msra.mxu0 0.0
        %1800 = vmatprep.subr.mxu0 0.0
        %1801 = vmatpush1.msra.mxu0 0.0
        %1802 = vmatprep.subr.mxu0 0.0
        %1803 = vmatpush1.msra.mxu0 0.0
        %1804 = vmatprep.subr.mxu0 0.0
        %1805 = vmatpush1.msra.mxu0 0.0
        %1806 = vmatprep.subr.mxu0 0.0
        %1807 = vmatpush1.msra.mxu0 0.0
        %1808 = vmatprep.subr.mxu0 0.0
        %1809 = vmatpush1.msra.mxu0 0.0
        %1810 = vmatprep.subr.mxu0 0.0
        %1811 = vmatpush1.msra.mxu0 0.0
        %1812 = vmatprep.subr.mxu0 0.0
        %1813 = vmatpush1.msra.mxu0 0.0
        %1814 = vmatprep.subr.mxu0 0.0
        %1815 = vmatpush1.msra.mxu0 0.0
        %1816 = vmatprep.subr.mxu0 0.0
        %1817 = vmatpush1.msra.mxu0 0.0
        %1818 = vmatprep.subr.mxu0 0.0
        %1819 = vmatpush1.msra.mxu0 0.0
        %1820 = vmatprep.subr.mxu0 0.0
        %1821 = vmatpush1.msra.mxu0 0.0
        %1822 = vmatprep.subr.mxu0 0.0
        %1823 = vmatpush1.msra.mxu0 0.0
        %1824 = vmatprep.subr.mxu0 0.0
        %1825 = vmatpush1.msra.mxu0 0.0
        %1826 = vmatprep.subr.mxu0 0.0
        %1827 = vmatpush1.msra.mxu0 0.0
        %1828 = vmatprep.subr.mxu0 0.0
        %1829 = vmatpush1.msra.mxu0 0.0
        %1830 = vmatprep.subr.mxu0 0.0
        %1831 = vmatpush1.msra.mxu0 0.0
        %1832 = vmatprep.mubr.f32.mxu0 0.0
        %1833 = vmatmul.mubr.f32.gmra.mrb[0].mxu0 %v1766
        %v1834 = vpop.f32.mrb[0].mxu0
        %v1835 = vadd.f32 0.0, %v1834
        %v1836 = vpop.f32.mrb[0].mxu0
        %1837 = vdwg.mxu0
        %v1838 = vadd.f32 %v1599, %v1835
        %v1840 = vlaneseq
        %v1841 = vshrl.u32 %v1840, 7
        %v1842 = vsub.s32 0, %v1841
        %v1843 = vrot.slane %v882, %v1842
        %v1845 = vadd.f32 %v1838, %v1843
        %v1846 = vadd.f32 %v790, %v1845
        %v1847 = vld [vmem:[%s17] sm:$0x1]
        %v1848 = vld [vmem:[%s18] sm:$0x1]
        %v1849 = vsel %vm804, %v1846, 0.0
        %1850 = vadd.xlane.f32.xlu0 %v1849
        %v1851 = vpop.xlane.xlu0 %1850
        %v1852 = vrcp.pop 32.0
        %v1853 = vmul.f32 %v1851, %v1852
        %v1854 = vsub.f32 %v1846, %v1853
        %v1855 = vmul.f32 %v1854, %v1854
        %v1856 = vsel %vm804, %v1855, 0.0
        %1857 = vadd.xlane.f32.xlu0 %v1856
        %v1858 = vpop.xlane.xlu0 %1857
        %v1859 = vmul.f32 %v1858, %v1852
        %v1860 = vadd.f32 %v1859, 1e-05
        %v1861 = vrsqrt.pop %v1860
        %v1862 = vmul.f32 %v1854, %v1861
        %v1864 = vlaneseq
        %v1865 = vshrl.u32 %v1864, 7
        %v1866 = vsub.s32 0, %v1865
        %v1867 = vrot.slane %v1847, %v1866
        %v1869 = vmul.f32 %v1862, %v1867
        %v1871 = vlaneseq
        %v1872 = vshrl.u32 %v1871, 7
        %v1873 = vsub.s32 0, %v1872
        %v1874 = vrot.slane %v1848, %v1873
        %v1876 = vadd.f32 %v1869, %v1874
        %v1877 = vld [vmem:[%s7] sm:$0xff]
        %v1878 = vld [vmem:[%s7 + $0x8] sm:$0xff]
        %v1879 = vld [vmem:[%s7 + $0x10] sm:$0xff]
        %v1880 = vld [vmem:[%s7 + $0x18] sm:$0xff]
        %v1881 = vld [vmem:[%s8] sm:$0x1]
        %v1883 = vlaneseq
        %v1884 = vshrl.u32 %v1883, 7
        %v1885 = vsub.s32 0, %v1884
        %v1886 = vrot.slane %v1881, %v1885
        %v1889 = vsel %vm804, %v1876, 0
        %1891 = vmatprep.subr.mxu0 0.0
        %1892 = vmatpush1.msra.mxu0 %v1877
        %1893 = vmatprep.subr.mxu0 0.0
        %1894 = vmatpush1.msra.mxu0 %v1878
        %1895 = vmatprep.subr.mxu0 0.0
        %1896 = vmatpush1.msra.mxu0 %v1879
        %1897 = vmatprep.subr.mxu0 0.0
        %1898 = vmatpush1.msra.mxu0 %v1880
        %1899 = vmatprep.subr.mxu0 0.0
        %1900 = vmatpush1.msra.mxu0 0.0
        %1901 = vmatprep.subr.mxu0 0.0
        %1902 = vmatpush1.msra.mxu0 0.0
        %1903 = vmatprep.subr.mxu0 0.0
        %1904 = vmatpush1.msra.mxu0 0.0
        %1905 = vmatprep.subr.mxu0 0.0
        %1906 = vmatpush1.msra.mxu0 0.0
        %1907 = vmatprep.subr.mxu0 0.0
        %1908 = vmatpush1.msra.mxu0 0.0
        %1909 = vmatprep.subr.mxu0 0.0
        %1910 = vmatpush1.msra.mxu0 0.0
        %1911 = vmatprep.subr.mxu0 0.0
        %1912 = vmatpush1.msra.mxu0 0.0
        %1913 = vmatprep.subr.mxu0 0.0
        %1914 = vmatpush1.msra.mxu0 0.0
        %1915 = vmatprep.subr.mxu0 0.0
        %1916 = vmatpush1.msra.mxu0 0.0
        %1917 = vmatprep.subr.mxu0 0.0
        %1918 = vmatpush1.msra.mxu0 0.0
        %1919 = vmatprep.subr.mxu0 0.0
        %1920 = vmatpush1.msra.mxu0 0.0
        %1921 = vmatprep.subr.mxu0 0.0
        %1922 = vmatpush1.msra.mxu0 0.0
        %1923 = vmatprep.subr.mxu0 0.0
        %1924 = vmatpush1.msra.mxu0 0.0
        %1925 = vmatprep.subr.mxu0 0.0
        %1926 = vmatpush1.msra.mxu0 0.0
        %1927 = vmatprep.subr.mxu0 0.0
        %1928 = vmatpush1.msra.mxu0 0.0
        %1929 = vmatprep.subr.mxu0 0.0
        %1930 = vmatpush1.msra.mxu0 0.0
        %1931 = vmatprep.subr.mxu0 0.0
        %1932 = vmatpush1.msra.mxu0 0.0
        %1933 = vmatprep.subr.mxu0 0.0
        %1934 = vmatpush1.msra.mxu0 0.0
        %1935 = vmatprep.subr.mxu0 0.0
        %1936 = vmatpush1.msra.mxu0 0.0
        %1937 = vmatprep.subr.mxu0 0.0
        %1938 = vmatpush1.msra.mxu0 0.0
        %1939 = vmatprep.subr.mxu0 0.0
        %1940 = vmatpush1.msra.mxu0 0.0
        %1941 = vmatprep.subr.mxu0 0.0
        %1942 = vmatpush1.msra.mxu0 0.0
        %1943 = vmatprep.subr.mxu0 0.0
        %1944 = vmatpush1.msra.mxu0 0.0
        %1945 = vmatprep.subr.mxu0 0.0
        %1946 = vmatpush1.msra.mxu0 0.0
        %1947 = vmatprep.subr.mxu0 0.0
        %1948 = vmatpush1.msra.mxu0 0.0
        %1949 = vmatprep.subr.mxu0 0.0
        %1950 = vmatpush1.msra.mxu0 0.0
        %1951 = vmatprep.subr.mxu0 0.0
        %1952 = vmatpush1.msra.mxu0 0.0
        %1953 = vmatprep.subr.mxu0 0.0
        %1954 = vmatpush1.msra.mxu0 0.0
        %1955 = vmatprep.mubr.f32.mxu0 0.0
        %1956 = vmatmul.mubr.f32.gmra.mrb[0].mxu0 %v1889
        %v1957 = vpop.f32.mrb[0].mxu0
        %v1958 = vadd.f32 %v1886, %v1957
        %v1959 = vpop.f32.mrb[0].mxu0
        %1960 = vdwg.mxu0
        %v1961 = vld [vmem:[%s9] sm:$0xff]
        %v1962 = vld [vmem:[%s9 + $0x8] sm:$0xff]
        %v1963 = vld [vmem:[%s9 + $0x10] sm:$0xff]
        %v1964 = vld [vmem:[%s9 + $0x18] sm:$0xff]
        %v1965 = vld [vmem:[%s10] sm:$0x1]
        %v1967 = vlaneseq
        %v1968 = vshrl.u32 %v1967, 7
        %v1969 = vsub.s32 0, %v1968
        %v1970 = vrot.slane %v1965, %v1969
        %v1973 = vsel %vm804, %v791, 0
        %1975 = vmatprep.subr.mxu0 0.0
        %1976 = vmatpush1.msra.mxu0 %v1961
        %1977 = vmatprep.subr.mxu0 0.0
        %1978 = vmatpush1.msra.mxu0 %v1962
        %1979 = vmatprep.subr.mxu0 0.0
        %1980 = vmatpush1.msra.mxu0 %v1963
        %1981 = vmatprep.subr.mxu0 0.0
        %1982 = vmatpush1.msra.mxu0 %v1964
        %1983 = vmatprep.subr.mxu0 0.0
        %1984 = vmatpush1.msra.mxu0 0.0
        %1985 = vmatprep.subr.mxu0 0.0
        %1986 = vmatpush1.msra.mxu0 0.0
        %1987 = vmatprep.subr.mxu0 0.0
        %1988 = vmatpush1.msra.mxu0 0.0
        %1989 = vmatprep.subr.mxu0 0.0
        %1990 = vmatpush1.msra.mxu0 0.0
        %1991 = vmatprep.subr.mxu0 0.0
        %1992 = vmatpush1.msra.mxu0 0.0
        %1993 = vmatprep.subr.mxu0 0.0
        %1994 = vmatpush1.msra.mxu0 0.0
        %1995 = vmatprep.subr.mxu0 0.0
        %1996 = vmatpush1.msra.mxu0 0.0
        %1997 = vmatprep.subr.mxu0 0.0
        %1998 = vmatpush1.msra.mxu0 0.0
        %1999 = vmatprep.subr.mxu0 0.0
        %2000 = vmatpush1.msra.mxu0 0.0
        %2001 = vmatprep.subr.mxu0 0.0
        %2002 = vmatpush1.msra.mxu0 0.0
        %2003 = vmatprep.subr.mxu0 0.0
        %2004 = vmatpush1.msra.mxu0 0.0
        %2005 = vmatprep.subr.mxu0 0.0
        %2006 = vmatpush1.msra.mxu0 0.0
        %2007 = vmatprep.subr.mxu0 0.0
        %2008 = vmatpush1.msra.mxu0 0.0
        %2009 = vmatprep.subr.mxu0 0.0
        %2010 = vmatpush1.msra.mxu0 0.0
        %2011 = vmatprep.subr.mxu0 0.0
        %2012 = vmatpush1.msra.mxu0 0.0
        %2013 = vmatprep.subr.mxu0 0.0
        %2014 = vmatpush1.msra.mxu0 0.0
        %2015 = vmatprep.subr.mxu0 0.0
        %2016 = vmatpush1.msra.mxu0 0.0
        %2017 = vmatprep.subr.mxu0 0.0
        %2018 = vmatpush1.msra.mxu0 0.0
        %2019 = vmatprep.subr.mxu0 0.0
        %2020 = vmatpush1.msra.mxu0 0.0
        %2021 = vmatprep.subr.mxu0 0.0
        %2022 = vmatpush1.msra.mxu0 0.0
        %2023 = vmatprep.subr.mxu0 0.0
        %2024 = vmatpush1.msra.mxu0 0.0
        %2025 = vmatprep.subr.mxu0 0.0
        %2026 = vmatpush1.msra.mxu0 0.0
        %2027 = vmatprep.subr.mxu0 0.0
        %2028 = vmatpush1.msra.mxu0 0.0
        %2029 = vmatprep.subr.mxu0 0.0
        %2030 = vmatpush1.msra.mxu0 0.0
        %2031 = vmatprep.subr.mxu0 0.0
        %2032 = vmatpush1.msra.mxu0 0.0
        %2033 = vmatprep.subr.mxu0 0.0
        %2034 = vmatpush1.msra.mxu0 0.0
        %2035 = vmatprep.subr.mxu0 0.0
        %2036 = vmatpush1.msra.mxu0 0.0
        %2037 = vmatprep.subr.mxu0 0.0
        %2038 = vmatpush1.msra.mxu0 0.0
        %2039 = vmatprep.mubr.f32.mxu0 0.0
        %2040 = vmatmul.mubr.f32.gmra.mrb[0].mxu0 %v1973
        %v2041 = vpop.f32.mrb[0].mxu0
        %v2042 = vadd.f32 %v1970, %v2041
        %v2043 = vpop.f32.mrb[0].mxu0
        %2044 = vdwg.mxu0
        %v2045 = vld [vmem:[%s11] sm:$0xff]
        %v2046 = vld [vmem:[%s11 + $0x8] sm:$0xff]
        %v2047 = vld [vmem:[%s11 + $0x10] sm:$0xff]
        %v2048 = vld [vmem:[%s11 + $0x18] sm:$0xff]
        %v2049 = vld [vmem:[%s12] sm:$0x1]
        %v2050 = vmul.f32 %v1958, 0.35355338
        %v2052 = vsel %vm887, %v2050, 0
        %v2055 = vsel %vm887, %v2042, 0
        %2057 = vmatprep.subr.mxu0 0.0
        %2058 = vmatpush1.xpose.msra.mxu0 %v2055
        %2059 = vmatprep.subr.mxu0 0.0
        %2060 = vmatpush1.xpose.msra.mxu0 0.0
        %2061 = vmatprep.subr.mxu0 0.0
        %2062 = vmatpush1.xpose.msra.mxu0 0.0
        %2063 = vmatprep.subr.mxu0 0.0
        %2064 = vmatpush1.xpose.msra.mxu0 0.0
        %2065 = vmatprep.subr.mxu0 0.0
        %2066 = vmatpush1.xpose.msra.mxu0 0.0
        %2067 = vmatprep.subr.mxu0 0.0
        %2068 = vmatpush1.xpose.msra.mxu0 0.0
        %2069 = vmatprep.subr.mxu0 0.0
        %2070 = vmatpush1.xpose.msra.mxu0 0.0
        %2071 = vmatprep.subr.mxu0 0.0
        %2072 = vmatpush1.xpose.msra.mxu0 0.0
        %2073 = vmatprep.subr.mxu0 0.0
        %2074 = vmatpush1.xpose.msra.mxu0 0.0
        %2075 = vmatprep.subr.mxu0 0.0
        %2076 = vmatpush1.xpose.msra.mxu0 0.0
        %2077 = vmatprep.subr.mxu0 0.0
        %2078 = vmatpush1.xpose.msra.mxu0 0.0
        %2079 = vmatprep.subr.mxu0 0.0
        %2080 = vmatpush1.xpose.msra.mxu0 0.0
        %2081 = vmatprep.subr.mxu0 0.0
        %2082 = vmatpush1.xpose.msra.mxu0 0.0
        %2083 = vmatprep.subr.mxu0 0.0
        %2084 = vmatpush1.xpose.msra.mxu0 0.0
        %2085 = vmatprep.subr.mxu0 0.0
        %2086 = vmatpush1.xpose.msra.mxu0 0.0
        %2087 = vmatprep.subr.mxu0 0.0
        %2088 = vmatpush1.xpose.msra.mxu0 0.0
        %2089 = vmatprep.subr.mxu0 0.0
        %2090 = vmatpush1.xpose.msra.mxu0 0.0
        %2091 = vmatprep.subr.mxu0 0.0
        %2092 = vmatpush1.xpose.msra.mxu0 0.0
        %2093 = vmatprep.subr.mxu0 0.0
        %2094 = vmatpush1.xpose.msra.mxu0 0.0
        %2095 = vmatprep.subr.mxu0 0.0
        %2096 = vmatpush1.xpose.msra.mxu0 0.0
        %2097 = vmatprep.subr.mxu0 0.0
        %2098 = vmatpush1.xpose.msra.mxu0 0.0
        %2099 = vmatprep.subr.mxu0 0.0
        %2100 = vmatpush1.xpose.msra.mxu0 0.0
        %2101 = vmatprep.subr.mxu0 0.0
        %2102 = vmatpush1.xpose.msra.mxu0 0.0
        %2103 = vmatprep.subr.mxu0 0.0
        %2104 = vmatpush1.xpose.msra.mxu0 0.0
        %2105 = vmatprep.subr.mxu0 0.0
        %2106 = vmatpush1.xpose.msra.mxu0 0.0
        %2107 = vmatprep.subr.mxu0 0.0
        %2108 = vmatpush1.xpose.msra.mxu0 0.0
        %2109 = vmatprep.subr.mxu0 0.0
        %2110 = vmatpush1.xpose.msra.mxu0 0.0
        %2111 = vmatprep.subr.mxu0 0.0
        %2112 = vmatpush1.xpose.msra.mxu0 0.0
        %2113 = vmatprep.subr.mxu0 0.0
        %2114 = vmatpush1.xpose.msra.mxu0 0.0
        %2115 = vmatprep.subr.mxu0 0.0
        %2116 = vmatpush1.xpose.msra.mxu0 0.0
        %2117 = vmatprep.subr.mxu0 0.0
        %2118 = vmatpush1.xpose.msra.mxu0 0.0
        %2119 = vmatprep.subr.mxu0 0.0
        %2120 = vmatpush1.xpose.msra.mxu0 0.0
        %2121 = vmatprep.mubr.f32.mxu0 0.0
        %2122 = vmatmul.mubr.f32.gmra.mrb[0].mxu0 %v2052
        %v2123 = vpop.f32.mrb[0].mxu0
        %v2124 = vadd.f32 0.0, %v2123
        %v2125 = vpop.f32.mrb[0].mxu0
        %2126 = vdwg.mxu0
        %v2127 = vsel %vm887, %v2124, -inf
        %2128 = vmax.xlane.f32.xlu0 %v2127
        %v2129 = vpop.xlane.xlu0 %2128
        %v2130 = vsub.f32 %v2124, %v2129
        %v2131 = vmul.f32 %v2130, 1.442695
        %v2132 = vpow.pop %v2131
        %v2133 = vsel %vm887, %v2132, 0.0
        %2134 = vadd.xlane.f32.xlu0 %v2133
        %v2135 = vpop.xlane.xlu0 %2134
        %v2136 = vrcp.pop %v2135
        %v2137 = vmul.f32 %v2132, %v2136
        %2138 = vrot.lane.b32.xlu0 %v2042, 96
        %v2139 = vpop.permute.xlu0 %2138
        %v2142 = vsel %vm887, %v2137, 0
        %2144 = vmatprep.subr.mxu0 0.0
        %2145 = vmatpush1.msra.mxu0 %v2139
        %2146 = vmatprep.subr.mxu0 0.0
        %2147 = vmatpush1.msra.mxu0 0.0
        %2148 = vmatprep.subr.mxu0 0.0
        %2149 = vmatpush1.msra.mxu0 0.0
        %2150 = vmatprep.subr.mxu0 0.0
        %2151 = vmatpush1.msra.mxu0 0.0
        %2152 = vmatprep.subr.mxu0 0.0
        %2153 = vmatpush1.msra.mxu0 0.0
        %2154 = vmatprep.subr.mxu0 0.0
        %2155 = vmatpush1.msra.mxu0 0.0
        %2156 = vmatprep.subr.mxu0 0.0
        %2157 = vmatpush1.msra.mxu0 0.0
        %2158 = vmatprep.subr.mxu0 0.0
        %2159 = vmatpush1.msra.mxu0 0.0
        %2160 = vmatprep.subr.mxu0 0.0
        %2161 = vmatpush1.msra.mxu0 0.0
        %2162 = vmatprep.subr.mxu0 0.0
        %2163 = vmatpush1.msra.mxu0 0.0
        %2164 = vmatprep.subr.mxu0 0.0
        %2165 = vmatpush1.msra.mxu0 0.0
        %2166 = vmatprep.subr.mxu0 0.0
        %2167 = vmatpush1.msra.mxu0 0.0
        %2168 = vmatprep.subr.mxu0 0.0
        %2169 = vmatpush1.msra.mxu0 0.0
        %2170 = vmatprep.subr.mxu0 0.0
        %2171 = vmatpush1.msra.mxu0 0.0
        %2172 = vmatprep.subr.mxu0 0.0
        %2173 = vmatpush1.msra.mxu0 0.0
        %2174 = vmatprep.subr.mxu0 0.0
        %2175 = vmatpush1.msra.mxu0 0.0
        %2176 = vmatprep.subr.mxu0 0.0
        %2177 = vmatpush1.msra.mxu0 0.0
        %2178 = vmatprep.subr.mxu0 0.0
        %2179 = vmatpush1.msra.mxu0 0.0
        %2180 = vmatprep.subr.mxu0 0.0
        %2181 = vmatpush1.msra.mxu0 0.0
        %2182 = vmatprep.subr.mxu0 0.0
        %2183 = vmatpush1.msra.mxu0 0.0
        %2184 = vmatprep.subr.mxu0 0.0
        %2185 = vmatpush1.msra.mxu0 0.0
        %2186 = vmatprep.subr.mxu0 0.0
        %2187 = vmatpush1.msra.mxu0 0.0
        %2188 = vmatprep.subr.mxu0 0.0
        %2189 = vmatpush1.msra.mxu0 0.0
        %2190 = vmatprep.subr.mxu0 0.0
        %2191 = vmatpush1.msra.mxu0 0.0
        %2192 = vmatprep.subr.mxu0 0.0
        %2193 = vmatpush1.msra.mxu0 0.0
        %2194 = vmatprep.subr.mxu0 0.0
        %2195 = vmatpush1.msra.mxu0 0.0
        %2196 = vmatprep.subr.mxu0 0.0
        %2197 = vmatpush1.msra.mxu0 0.0
        %2198 = vmatprep.subr.mxu0 0.0
        %2199 = vmatpush1.msra.mxu0 0.0
        %2200 = vmatprep.subr.mxu0 0.0
        %2201 = vmatpush1.msra.mxu0 0.0
        %2202 = vmatprep.subr.mxu0 0.0
        %2203 = vmatpush1.msra.mxu0 0.0
        %2204 = vmatprep.subr.mxu0 0.0
        %2205 = vmatpush1.msra.mxu0 0.0
        %2206 = vmatprep.subr.mxu0 0.0
        %2207 = vmatpush1.msra.mxu0 0.0
        %2208 = vmatprep.mubr.f32.mxu0 0.0
        %2209 = vmatmul.mubr.f32.gmra.mrb[0].mxu0 %v2142
        %v2210 = vpop.f32.mrb[0].mxu0
        %v2211 = vadd.f32 0.0, %v2210
        %v2212 = vpop.f32.mrb[0].mxu0
        %2213 = vdwg.mxu0
        %2214 = vrot.lane.b32.xlu0 %v2050, 120
        %v2215 = vpop.permute.xlu0 %2214
        %2216 = vrot.lane.b32.xlu0 %v2042, 120
        %v2217 = vpop.permute.xlu0 %2216
        %v2218 = vsel %vm887, %v2215, 0
        %v2220 = vsel %vm887, %v2217, 0
        %2222 = vmatprep.subr.mxu0 0.0
        %2223 = vmatpush1.xpose.msra.mxu0 %v2220
        %2224 = vmatprep.subr.mxu0 0.0
        %2225 = vmatpush1.xpose.msra.mxu0 0.0
        %2226 = vmatprep.subr.mxu0 0.0
        %2227 = vmatpush1.xpose.msra.mxu0 0.0
        %2228 = vmatprep.subr.mxu0 0.0
        %2229 = vmatpush1.xpose.msra.mxu0 0.0
        %2230 = vmatprep.subr.mxu0 0.0
        %2231 = vmatpush1.xpose.msra.mxu0 0.0
        %2232 = vmatprep.subr.mxu0 0.0
        %2233 = vmatpush1.xpose.msra.mxu0 0.0
        %2234 = vmatprep.subr.mxu0 0.0
        %2235 = vmatpush1.xpose.msra.mxu0 0.0
        %2236 = vmatprep.subr.mxu0 0.0
        %2237 = vmatpush1.xpose.msra.mxu0 0.0
        %2238 = vmatprep.subr.mxu0 0.0
        %2239 = vmatpush1.xpose.msra.mxu0 0.0
        %2240 = vmatprep.subr.mxu0 0.0
        %2241 = vmatpush1.xpose.msra.mxu0 0.0
        %2242 = vmatprep.subr.mxu0 0.0
        %2243 = vmatpush1.xpose.msra.mxu0 0.0
        %2244 = vmatprep.subr.mxu0 0.0
        %2245 = vmatpush1.xpose.msra.mxu0 0.0
        %2246 = vmatprep.subr.mxu0 0.0
        %2247 = vmatpush1.xpose.msra.mxu0 0.0
        %2248 = vmatprep.subr.mxu0 0.0
        %2249 = vmatpush1.xpose.msra.mxu0 0.0
        %2250 = vmatprep.subr.mxu0 0.0
        %2251 = vmatpush1.xpose.msra.mxu0 0.0
        %2252 = vmatprep.subr.mxu0 0.0
        %2253 = vmatpush1.xpose.msra.mxu0 0.0
        %2254 = vmatprep.subr.mxu0 0.0
        %2255 = vmatpush1.xpose.msra.mxu0 0.0
        %2256 = vmatprep.subr.mxu0 0.0
        %2257 = vmatpush1.xpose.msra.mxu0 0.0
        %2258 = vmatprep.subr.mxu0 0.0
        %2259 = vmatpush1.xpose.msra.mxu0 0.0
        %2260 = vmatprep.subr.mxu0 0.0
        %2261 = vmatpush1.xpose.msra.mxu0 0.0
        %2262 = vmatprep.subr.mxu0 0.0
        %2263 = vmatpush1.xpose.msra.mxu0 0.0
        %2264 = vmatprep.subr.mxu0 0.0
        %2265 = vmatpush1.xpose.msra.mxu0 0.0
        %2266 = vmatprep.subr.mxu0 0.0
        %2267 = vmatpush1.xpose.msra.mxu0 0.0
        %2268 = vmatprep.subr.mxu0 0.0
        %2269 = vmatpush1.xpose.msra.mxu0 0.0
        %2270 = vmatprep.subr.mxu0 0.0
        %2271 = vmatpush1.xpose.msra.mxu0 0.0
        %2272 = vmatprep.subr.mxu0 0.0
        %2273 = vmatpush1.xpose.msra.mxu0 0.0
        %2274 = vmatprep.subr.mxu0 0.0
        %2275 = vmatpush1.xpose.msra.mxu0 0.0
        %2276 = vmatprep.subr.mxu0 0.0
        %2277 = vmatpush1.xpose.msra.mxu0 0.0
        %2278 = vmatprep.subr.mxu0 0.0
        %2279 = vmatpush1.xpose.msra.mxu0 0.0
        %2280 = vmatprep.subr.mxu0 0.0
        %2281 = vmatpush1.xpose.msra.mxu0 0.0
        %2282 = vmatprep.subr.mxu0 0.0
        %2283 = vmatpush1.xpose.msra.mxu0 0.0
        %2284 = vmatprep.subr.mxu0 0.0
        %2285 = vmatpush1.xpose.msra.mxu0 0.0
        %2286 = vmatprep.mubr.f32.mxu0 0.0
        %2287 = vmatmul.mubr.f32.gmra.mrb[0].mxu0 %v2218
        %v2288 = vpop.f32.mrb[0].mxu0
        %v2289 = vadd.f32 0.0, %v2288
        %v2290 = vpop.f32.mrb[0].mxu0
        %2291 = vdwg.mxu0
        %v2292 = vsel %vm887, %v2289, -inf
        %2293 = vmax.xlane.f32.xlu0 %v2292
        %v2294 = vpop.xlane.xlu0 %2293
        %v2295 = vsub.f32 %v2289, %v2294
        %v2296 = vmul.f32 %v2295, 1.442695
        %v2297 = vpow.pop %v2296
        %v2298 = vsel %vm887, %v2297, 0.0
        %2299 = vadd.xlane.f32.xlu0 %v2298
        %v2300 = vpop.xlane.xlu0 %2299
        %v2301 = vrcp.pop %v2300
        %v2302 = vmul.f32 %v2297, %v2301
        %2303 = vrot.lane.b32.xlu0 %v2042, 88
        %v2304 = vpop.permute.xlu0 %2303
        %v2307 = vsel %vm887, %v2302, 0
        %2309 = vmatprep.subr.mxu0 0.0
        %2310 = vmatpush1.msra.mxu0 %v2304
        %2311 = vmatprep.subr.mxu0 0.0
        %2312 = vmatpush1.msra.mxu0 0.0
        %2313 = vmatprep.subr.mxu0 0.0
        %2314 = vmatpush1.msra.mxu0 0.0
        %2315 = vmatprep.subr.mxu0 0.0
        %2316 = vmatpush1.msra.mxu0 0.0
        %2317 = vmatprep.subr.mxu0 0.0
        %2318 = vmatpush1.msra.mxu0 0.0
        %2319 = vmatprep.subr.mxu0 0.0
        %2320 = vmatpush1.msra.mxu0 0.0
        %2321 = vmatprep.subr.mxu0 0.0
        %2322 = vmatpush1.msra.mxu0 0.0
        %2323 = vmatprep.subr.mxu0 0.0
        %2324 = vmatpush1.msra.mxu0 0.0
        %2325 = vmatprep.subr.mxu0 0.0
        %2326 = vmatpush1.msra.mxu0 0.0
        %2327 = vmatprep.subr.mxu0 0.0
        %2328 = vmatpush1.msra.mxu0 0.0
        %2329 = vmatprep.subr.mxu0 0.0
        %2330 = vmatpush1.msra.mxu0 0.0
        %2331 = vmatprep.subr.mxu0 0.0
        %2332 = vmatpush1.msra.mxu0 0.0
        %2333 = vmatprep.subr.mxu0 0.0
        %2334 = vmatpush1.msra.mxu0 0.0
        %2335 = vmatprep.subr.mxu0 0.0
        %2336 = vmatpush1.msra.mxu0 0.0
        %2337 = vmatprep.subr.mxu0 0.0
        %2338 = vmatpush1.msra.mxu0 0.0
        %2339 = vmatprep.subr.mxu0 0.0
        %2340 = vmatpush1.msra.mxu0 0.0
        %2341 = vmatprep.subr.mxu0 0.0
        %2342 = vmatpush1.msra.mxu0 0.0
        %2343 = vmatprep.subr.mxu0 0.0
        %2344 = vmatpush1.msra.mxu0 0.0
        %2345 = vmatprep.subr.mxu0 0.0
        %2346 = vmatpush1.msra.mxu0 0.0
        %2347 = vmatprep.subr.mxu0 0.0
        %2348 = vmatpush1.msra.mxu0 0.0
        %2349 = vmatprep.subr.mxu0 0.0
        %2350 = vmatpush1.msra.mxu0 0.0
        %2351 = vmatprep.subr.mxu0 0.0
        %2352 = vmatpush1.msra.mxu0 0.0
        %2353 = vmatprep.subr.mxu0 0.0
        %2354 = vmatpush1.msra.mxu0 0.0
        %2355 = vmatprep.subr.mxu0 0.0
        %2356 = vmatpush1.msra.mxu0 0.0
        %2357 = vmatprep.subr.mxu0 0.0
        %2358 = vmatpush1.msra.mxu0 0.0
        %2359 = vmatprep.subr.mxu0 0.0
        %2360 = vmatpush1.msra.mxu0 0.0
        %2361 = vmatprep.subr.mxu0 0.0
        %2362 = vmatpush1.msra.mxu0 0.0
        %2363 = vmatprep.subr.mxu0 0.0
        %2364 = vmatpush1.msra.mxu0 0.0
        %2365 = vmatprep.subr.mxu0 0.0
        %2366 = vmatpush1.msra.mxu0 0.0
        %2367 = vmatprep.subr.mxu0 0.0
        %2368 = vmatpush1.msra.mxu0 0.0
        %2369 = vmatprep.subr.mxu0 0.0
        %2370 = vmatpush1.msra.mxu0 0.0
        %2371 = vmatprep.subr.mxu0 0.0
        %2372 = vmatpush1.msra.mxu0 0.0
        %2373 = vmatprep.mubr.f32.mxu0 0.0
        %2374 = vmatmul.mubr.f32.gmra.mrb[0].mxu0 %v2307
        %v2375 = vpop.f32.mrb[0].mxu0
        %v2376 = vadd.f32 0.0, %v2375
        %v2377 = vpop.f32.mrb[0].mxu0
        %2378 = vdwg.mxu0
        %v2380 = vsel %vm887, %v2376, 0
        %2382 = vmatprep.subr.mxu0 0.0
        %2383 = vmatpush1.msra.mxu0 %v2046
        %2384 = vmatprep.subr.mxu0 0.0
        %2385 = vmatpush1.msra.mxu0 0.0
        %2386 = vmatprep.subr.mxu0 0.0
        %2387 = vmatpush1.msra.mxu0 0.0
        %2388 = vmatprep.subr.mxu0 0.0
        %2389 = vmatpush1.msra.mxu0 0.0
        %2390 = vmatprep.subr.mxu0 0.0
        %2391 = vmatpush1.msra.mxu0 0.0
        %2392 = vmatprep.subr.mxu0 0.0
        %2393 = vmatpush1.msra.mxu0 0.0
        %2394 = vmatprep.subr.mxu0 0.0
        %2395 = vmatpush1.msra.mxu0 0.0
        %2396 = vmatprep.subr.mxu0 0.0
        %2397 = vmatpush1.msra.mxu0 0.0
        %2398 = vmatprep.subr.mxu0 0.0
        %2399 = vmatpush1.msra.mxu0 0.0
        %2400 = vmatprep.subr.mxu0 0.0
        %2401 = vmatpush1.msra.mxu0 0.0
        %2402 = vmatprep.subr.mxu0 0.0
        %2403 = vmatpush1.msra.mxu0 0.0
        %2404 = vmatprep.subr.mxu0 0.0
        %2405 = vmatpush1.msra.mxu0 0.0
        %2406 = vmatprep.subr.mxu0 0.0
        %2407 = vmatpush1.msra.mxu0 0.0
        %2408 = vmatprep.subr.mxu0 0.0
        %2409 = vmatpush1.msra.mxu0 0.0
        %2410 = vmatprep.subr.mxu0 0.0
        %2411 = vmatpush1.msra.mxu0 0.0
        %2412 = vmatprep.subr.mxu0 0.0
        %2413 = vmatpush1.msra.mxu0 0.0
        %2414 = vmatprep.subr.mxu0 0.0
        %2415 = vmatpush1.msra.mxu0 0.0
        %2416 = vmatprep.subr.mxu0 0.0
        %2417 = vmatpush1.msra.mxu0 0.0
        %2418 = vmatprep.subr.mxu0 0.0
        %2419 = vmatpush1.msra.mxu0 0.0
        %2420 = vmatprep.subr.mxu0 0.0
        %2421 = vmatpush1.msra.mxu0 0.0
        %2422 = vmatprep.subr.mxu0 0.0
        %2423 = vmatpush1.msra.mxu0 0.0
        %2424 = vmatprep.subr.mxu0 0.0
        %2425 = vmatpush1.msra.mxu0 0.0
        %2426 = vmatprep.subr.mxu0 0.0
        %2427 = vmatpush1.msra.mxu0 0.0
        %2428 = vmatprep.subr.mxu0 0.0
        %2429 = vmatpush1.msra.mxu0 0.0
        %2430 = vmatprep.subr.mxu0 0.0
        %2431 = vmatpush1.msra.mxu0 0.0
        %2432 = vmatprep.subr.mxu0 0.0
        %2433 = vmatpush1.msra.mxu0 0.0
        %2434 = vmatprep.subr.mxu0 0.0
        %2435 = vmatpush1.msra.mxu0 0.0
        %2436 = vmatprep.subr.mxu0 0.0
        %2437 = vmatpush1.msra.mxu0 0.0
        %2438 = vmatprep.subr.mxu0 0.0
        %2439 = vmatpush1.msra.mxu0 0.0
        %2440 = vmatprep.subr.mxu0 0.0
        %2441 = vmatpush1.msra.mxu0 0.0
        %2442 = vmatprep.subr.mxu0 0.0
        %2443 = vmatpush1.msra.mxu0 0.0
        %2444 = vmatprep.subr.mxu0 0.0
        %2445 = vmatpush1.msra.mxu0 0.0
        %2446 = vmatprep.mubr.f32.mxu0 0.0
        %2447 = vmatmul.mubr.f32.gmra.mrb[0].mxu0 %v2380
        %v2448 = vpop.f32.mrb[0].mxu0
        %v2449 = vadd.f32 0.0, %v2448
        %v2450 = vpop.f32.mrb[0].mxu0
        %2451 = vdwg.mxu0
        %v2453 = vsel %vm887, %v2211, 0
        %2455 = vmatprep.subr.mxu0 0.0
        %2456 = vmatpush1.msra.mxu0 %v2045
        %2457 = vmatprep.subr.mxu0 0.0
        %2458 = vmatpush1.msra.mxu0 0.0
        %2459 = vmatprep.subr.mxu0 0.0
        %2460 = vmatpush1.msra.mxu0 0.0
        %2461 = vmatprep.subr.mxu0 0.0
        %2462 = vmatpush1.msra.mxu0 0.0
        %2463 = vmatprep.subr.mxu0 0.0
        %2464 = vmatpush1.msra.mxu0 0.0
        %2465 = vmatprep.subr.mxu0 0.0
        %2466 = vmatpush1.msra.mxu0 0.0
        %2467 = vmatprep.subr.mxu0 0.0
        %2468 = vmatpush1.msra.mxu0 0.0
        %2469 = vmatprep.subr.mxu0 0.0
        %2470 = vmatpush1.msra.mxu0 0.0
        %2471 = vmatprep.subr.mxu0 0.0
        %2472 = vmatpush1.msra.mxu0 0.0
        %2473 = vmatprep.subr.mxu0 0.0
        %2474 = vmatpush1.msra.mxu0 0.0
        %2475 = vmatprep.subr.mxu0 0.0
        %2476 = vmatpush1.msra.mxu0 0.0
        %2477 = vmatprep.subr.mxu0 0.0
        %2478 = vmatpush1.msra.mxu0 0.0
        %2479 = vmatprep.subr.mxu0 0.0
        %2480 = vmatpush1.msra.mxu0 0.0
        %2481 = vmatprep.subr.mxu0 0.0
        %2482 = vmatpush1.msra.mxu0 0.0
        %2483 = vmatprep.subr.mxu0 0.0
        %2484 = vmatpush1.msra.mxu0 0.0
        %2485 = vmatprep.subr.mxu0 0.0
        %2486 = vmatpush1.msra.mxu0 0.0
        %2487 = vmatprep.subr.mxu0 0.0
        %2488 = vmatpush1.msra.mxu0 0.0
        %2489 = vmatprep.subr.mxu0 0.0
        %2490 = vmatpush1.msra.mxu0 0.0
        %2491 = vmatprep.subr.mxu0 0.0
        %2492 = vmatpush1.msra.mxu0 0.0
        %2493 = vmatprep.subr.mxu0 0.0
        %2494 = vmatpush1.msra.mxu0 0.0
        %2495 = vmatprep.subr.mxu0 0.0
        %2496 = vmatpush1.msra.mxu0 0.0
        %2497 = vmatprep.subr.mxu0 0.0
        %2498 = vmatpush1.msra.mxu0 0.0
        %2499 = vmatprep.subr.mxu0 0.0
        %2500 = vmatpush1.msra.mxu0 0.0
        %2501 = vmatprep.subr.mxu0 0.0
        %2502 = vmatpush1.msra.mxu0 0.0
        %2503 = vmatprep.subr.mxu0 0.0
        %2504 = vmatpush1.msra.mxu0 0.0
        %2505 = vmatprep.subr.mxu0 0.0
        %2506 = vmatpush1.msra.mxu0 0.0
        %2507 = vmatprep.subr.mxu0 0.0
        %2508 = vmatpush1.msra.mxu0 0.0
        %2509 = vmatprep.subr.mxu0 0.0
        %2510 = vmatpush1.msra.mxu0 0.0
        %2511 = vmatprep.subr.mxu0 0.0
        %2512 = vmatpush1.msra.mxu0 0.0
        %2513 = vmatprep.subr.mxu0 0.0
        %2514 = vmatpush1.msra.mxu0 0.0
        %2515 = vmatprep.subr.mxu0 0.0
        %2516 = vmatpush1.msra.mxu0 0.0
        %2517 = vmatprep.subr.mxu0 0.0
        %2518 = vmatpush1.msra.mxu0 0.0
        %2519 = vmatprep.mubr.f32.mxu0 0.0
        %2520 = vmatmul.mubr.f32.gmra.mrb[0].mxu0 %v2453
        %v2521 = vpop.f32.mrb[0].mxu0
        %v2522 = vadd.f32 %v2449, %v2521
        %v2523 = vpop.f32.mrb[0].mxu0
        %2524 = vdwg.mxu0
        %2525 = vrot.lane.b32.xlu0 %v2050, 112
        %v2526 = vpop.permute.xlu0 %2525
        %2527 = vrot.lane.b32.xlu0 %v2042, 112
        %v2528 = vpop.permute.xlu0 %2527
        %v2529 = vsel %vm887, %v2526, 0
        %v2531 = vsel %vm887, %v2528, 0
        %2533 = vmatprep.subr.mxu0 0.0
        %2534 = vmatpush1.xpose.msra.mxu0 %v2531
        %2535 = vmatprep.subr.mxu0 0.0
        %2536 = vmatpush1.xpose.msra.mxu0 0.0
        %2537 = vmatprep.subr.mxu0 0.0
        %2538 = vmatpush1.xpose.msra.mxu0 0.0
        %2539 = vmatprep.subr.mxu0 0.0
        %2540 = vmatpush1.xpose.msra.mxu0 0.0
        %2541 = vmatprep.subr.mxu0 0.0
        %2542 = vmatpush1.xpose.msra.mxu0 0.0
        %2543 = vmatprep.subr.mxu0 0.0
        %2544 = vmatpush1.xpose.msra.mxu0 0.0
        %2545 = vmatprep.subr.mxu0 0.0
        %2546 = vmatpush1.xpose.msra.mxu0 0.0
        %2547 = vmatprep.subr.mxu0 0.0
        %2548 = vmatpush1.xpose.msra.mxu0 0.0
        %2549 = vmatprep.subr.mxu0 0.0
        %2550 = vmatpush1.xpose.msra.mxu0 0.0
        %2551 = vmatprep.subr.mxu0 0.0
        %2552 = vmatpush1.xpose.msra.mxu0 0.0
        %2553 = vmatprep.subr.mxu0 0.0
        %2554 = vmatpush1.xpose.msra.mxu0 0.0
        %2555 = vmatprep.subr.mxu0 0.0
        %2556 = vmatpush1.xpose.msra.mxu0 0.0
        %2557 = vmatprep.subr.mxu0 0.0
        %2558 = vmatpush1.xpose.msra.mxu0 0.0
        %2559 = vmatprep.subr.mxu0 0.0
        %2560 = vmatpush1.xpose.msra.mxu0 0.0
        %2561 = vmatprep.subr.mxu0 0.0
        %2562 = vmatpush1.xpose.msra.mxu0 0.0
        %2563 = vmatprep.subr.mxu0 0.0
        %2564 = vmatpush1.xpose.msra.mxu0 0.0
        %2565 = vmatprep.subr.mxu0 0.0
        %2566 = vmatpush1.xpose.msra.mxu0 0.0
        %2567 = vmatprep.subr.mxu0 0.0
        %2568 = vmatpush1.xpose.msra.mxu0 0.0
        %2569 = vmatprep.subr.mxu0 0.0
        %2570 = vmatpush1.xpose.msra.mxu0 0.0
        %2571 = vmatprep.subr.mxu0 0.0
        %2572 = vmatpush1.xpose.msra.mxu0 0.0
        %2573 = vmatprep.subr.mxu0 0.0
        %2574 = vmatpush1.xpose.msra.mxu0 0.0
        %2575 = vmatprep.subr.mxu0 0.0
        %2576 = vmatpush1.xpose.msra.mxu0 0.0
        %2577 = vmatprep.subr.mxu0 0.0
        %2578 = vmatpush1.xpose.msra.mxu0 0.0
        %2579 = vmatprep.subr.mxu0 0.0
        %2580 = vmatpush1.xpose.msra.mxu0 0.0
        %2581 = vmatprep.subr.mxu0 0.0
        %2582 = vmatpush1.xpose.msra.mxu0 0.0
        %2583 = vmatprep.subr.mxu0 0.0
        %2584 = vmatpush1.xpose.msra.mxu0 0.0
        %2585 = vmatprep.subr.mxu0 0.0
        %2586 = vmatpush1.xpose.msra.mxu0 0.0
        %2587 = vmatprep.subr.mxu0 0.0
        %2588 = vmatpush1.xpose.msra.mxu0 0.0
        %2589 = vmatprep.subr.mxu0 0.0
        %2590 = vmatpush1.xpose.msra.mxu0 0.0
        %2591 = vmatprep.subr.mxu0 0.0
        %2592 = vmatpush1.xpose.msra.mxu0 0.0
        %2593 = vmatprep.subr.mxu0 0.0
        %2594 = vmatpush1.xpose.msra.mxu0 0.0
        %2595 = vmatprep.subr.mxu0 0.0
        %2596 = vmatpush1.xpose.msra.mxu0 0.0
        %2597 = vmatprep.mubr.f32.mxu0 0.0
        %2598 = vmatmul.mubr.f32.gmra.mrb[0].mxu0 %v2529
        %v2599 = vpop.f32.mrb[0].mxu0
        %v2600 = vadd.f32 0.0, %v2599
        %v2601 = vpop.f32.mrb[0].mxu0
        %2602 = vdwg.mxu0
        %v2603 = vsel %vm887, %v2600, -inf
        %2604 = vmax.xlane.f32.xlu0 %v2603
        %v2605 = vpop.xlane.xlu0 %2604
        %v2606 = vsub.f32 %v2600, %v2605
        %v2607 = vmul.f32 %v2606, 1.442695
        %v2608 = vpow.pop %v2607
        %v2609 = vsel %vm887, %v2608, 0.0
        %2610 = vadd.xlane.f32.xlu0 %v2609
        %v2611 = vpop.xlane.xlu0 %2610
        %v2612 = vrcp.pop %v2611
        %v2613 = vmul.f32 %v2608, %v2612
        %2614 = vrot.lane.b32.xlu0 %v2042, 80
        %v2615 = vpop.permute.xlu0 %2614
        %v2618 = vsel %vm887, %v2613, 0
        %2620 = vmatprep.subr.mxu0 0.0
        %2621 = vmatpush1.msra.mxu0 %v2615
        %2622 = vmatprep.subr.mxu0 0.0
        %2623 = vmatpush1.msra.mxu0 0.0
        %2624 = vmatprep.subr.mxu0 0.0
        %2625 = vmatpush1.msra.mxu0 0.0
        %2626 = vmatprep.subr.mxu0 0.0
        %2627 = vmatpush1.msra.mxu0 0.0
        %2628 = vmatprep.subr.mxu0 0.0
        %2629 = vmatpush1.msra.mxu0 0.0
        %2630 = vmatprep.subr.mxu0 0.0
        %2631 = vmatpush1.msra.mxu0 0.0
        %2632 = vmatprep.subr.mxu0 0.0
        %2633 = vmatpush1.msra.mxu0 0.0
        %2634 = vmatprep.subr.mxu0 0.0
        %2635 = vmatpush1.msra.mxu0 0.0
        %2636 = vmatprep.subr.mxu0 0.0
        %2637 = vmatpush1.msra.mxu0 0.0
        %2638 = vmatprep.subr.mxu0 0.0
        %2639 = vmatpush1.msra.mxu0 0.0
        %2640 = vmatprep.subr.mxu0 0.0
        %2641 = vmatpush1.msra.mxu0 0.0
        %2642 = vmatprep.subr.mxu0 0.0
        %2643 = vmatpush1.msra.mxu0 0.0
        %2644 = vmatprep.subr.mxu0 0.0
        %2645 = vmatpush1.msra.mxu0 0.0
        %2646 = vmatprep.subr.mxu0 0.0
        %2647 = vmatpush1.msra.mxu0 0.0
        %2648 = vmatprep.subr.mxu0 0.0
        %2649 = vmatpush1.msra.mxu0 0.0
        %2650 = vmatprep.subr.mxu0 0.0
        %2651 = vmatpush1.msra.mxu0 0.0
        %2652 = vmatprep.subr.mxu0 0.0
        %2653 = vmatpush1.msra.mxu0 0.0
        %2654 = vmatprep.subr.mxu0 0.0
        %2655 = vmatpush1.msra.mxu0 0.0
        %2656 = vmatprep.subr.mxu0 0.0
        %2657 = vmatpush1.msra.mxu0 0.0
        %2658 = vmatprep.subr.mxu0 0.0
        %2659 = vmatpush1.msra.mxu0 0.0
        %2660 = vmatprep.subr.mxu0 0.0
        %2661 = vmatpush1.msra.mxu0 0.0
        %2662 = vmatprep.subr.mxu0 0.0
        %2663 = vmatpush1.msra.mxu0 0.0
        %2664 = vmatprep.subr.mxu0 0.0
        %2665 = vmatpush1.msra.mxu0 0.0
        %2666 = vmatprep.subr.mxu0 0.0
        %2667 = vmatpush1.msra.mxu0 0.0
        %2668 = vmatprep.subr.mxu0 0.0
        %2669 = vmatpush1.msra.mxu0 0.0
        %2670 = vmatprep.subr.mxu0 0.0
        %2671 = vmatpush1.msra.mxu0 0.0
        %2672 = vmatprep.subr.mxu0 0.0
        %2673 = vmatpush1.msra.mxu0 0.0
        %2674 = vmatprep.subr.mxu0 0.0
        %2675 = vmatpush1.msra.mxu0 0.0
        %2676 = vmatprep.subr.mxu0 0.0
        %2677 = vmatpush1.msra.mxu0 0.0
        %2678 = vmatprep.subr.mxu0 0.0
        %2679 = vmatpush1.msra.mxu0 0.0
        %2680 = vmatprep.subr.mxu0 0.0
        %2681 = vmatpush1.msra.mxu0 0.0
        %2682 = vmatprep.subr.mxu0 0.0
        %2683 = vmatpush1.msra.mxu0 0.0
        %2684 = vmatprep.mubr.f32.mxu0 0.0
        %2685 = vmatmul.mubr.f32.gmra.mrb[0].mxu0 %v2618
        %v2686 = vpop.f32.mrb[0].mxu0
        %v2687 = vadd.f32 0.0, %v2686
        %v2688 = vpop.f32.mrb[0].mxu0
        %2689 = vdwg.mxu0
        %v2691 = vsel %vm887, %v2687, 0
        %2693 = vmatprep.subr.mxu0 0.0
        %2694 = vmatpush1.msra.mxu0 %v2047
        %2695 = vmatprep.subr.mxu0 0.0
        %2696 = vmatpush1.msra.mxu0 0.0
        %2697 = vmatprep.subr.mxu0 0.0
        %2698 = vmatpush1.msra.mxu0 0.0
        %2699 = vmatprep.subr.mxu0 0.0
        %2700 = vmatpush1.msra.mxu0 0.0
        %2701 = vmatprep.subr.mxu0 0.0
        %2702 = vmatpush1.msra.mxu0 0.0
        %2703 = vmatprep.subr.mxu0 0.0
        %2704 = vmatpush1.msra.mxu0 0.0
        %2705 = vmatprep.subr.mxu0 0.0
        %2706 = vmatpush1.msra.mxu0 0.0
        %2707 = vmatprep.subr.mxu0 0.0
        %2708 = vmatpush1.msra.mxu0 0.0
        %2709 = vmatprep.subr.mxu0 0.0
        %2710 = vmatpush1.msra.mxu0 0.0
        %2711 = vmatprep.subr.mxu0 0.0
        %2712 = vmatpush1.msra.mxu0 0.0
        %2713 = vmatprep.subr.mxu0 0.0
        %2714 = vmatpush1.msra.mxu0 0.0
        %2715 = vmatprep.subr.mxu0 0.0
        %2716 = vmatpush1.msra.mxu0 0.0
        %2717 = vmatprep.subr.mxu0 0.0
        %2718 = vmatpush1.msra.mxu0 0.0
        %2719 = vmatprep.subr.mxu0 0.0
        %2720 = vmatpush1.msra.mxu0 0.0
        %2721 = vmatprep.subr.mxu0 0.0
        %2722 = vmatpush1.msra.mxu0 0.0
        %2723 = vmatprep.subr.mxu0 0.0
        %2724 = vmatpush1.msra.mxu0 0.0
        %2725 = vmatprep.subr.mxu0 0.0
        %2726 = vmatpush1.msra.mxu0 0.0
        %2727 = vmatprep.subr.mxu0 0.0
        %2728 = vmatpush1.msra.mxu0 0.0
        %2729 = vmatprep.subr.mxu0 0.0
        %2730 = vmatpush1.msra.mxu0 0.0
        %2731 = vmatprep.subr.mxu0 0.0
        %2732 = vmatpush1.msra.mxu0 0.0
        %2733 = vmatprep.subr.mxu0 0.0
        %2734 = vmatpush1.msra.mxu0 0.0
        %2735 = vmatprep.subr.mxu0 0.0
        %2736 = vmatpush1.msra.mxu0 0.0
        %2737 = vmatprep.subr.mxu0 0.0
        %2738 = vmatpush1.msra.mxu0 0.0
        %2739 = vmatprep.subr.mxu0 0.0
        %2740 = vmatpush1.msra.mxu0 0.0
        %2741 = vmatprep.subr.mxu0 0.0
        %2742 = vmatpush1.msra.mxu0 0.0
        %2743 = vmatprep.subr.mxu0 0.0
        %2744 = vmatpush1.msra.mxu0 0.0
        %2745 = vmatprep.subr.mxu0 0.0
        %2746 = vmatpush1.msra.mxu0 0.0
        %2747 = vmatprep.subr.mxu0 0.0
        %2748 = vmatpush1.msra.mxu0 0.0
        %2749 = vmatprep.subr.mxu0 0.0
        %2750 = vmatpush1.msra.mxu0 0.0
        %2751 = vmatprep.subr.mxu0 0.0
        %2752 = vmatpush1.msra.mxu0 0.0
        %2753 = vmatprep.subr.mxu0 0.0
        %2754 = vmatpush1.msra.mxu0 0.0
        %2755 = vmatprep.subr.mxu0 0.0
        %2756 = vmatpush1.msra.mxu0 0.0
        %2757 = vmatprep.mubr.f32.mxu0 0.0
        %2758 = vmatmul.mubr.f32.gmra.mrb[0].mxu0 %v2691
        %v2759 = vpop.f32.mrb[0].mxu0
        %v2760 = vadd.f32 0.0, %v2759
        %v2761 = vpop.f32.mrb[0].mxu0
        %2762 = vdwg.mxu0
        %v2763 = vadd.f32 %v2522, %v2760
        %2764 = vrot.lane.b32.xlu0 %v2050, 104
        %v2765 = vpop.permute.xlu0 %2764
        %2766 = vrot.lane.b32.xlu0 %v2042, 104
        %v2767 = vpop.permute.xlu0 %2766
        %v2768 = vsel %vm887, %v2765, 0
        %v2770 = vsel %vm887, %v2767, 0
        %2772 = vmatprep.subr.mxu0 0.0
        %2773 = vmatpush1.xpose.msra.mxu0 %v2770
        %2774 = vmatprep.subr.mxu0 0.0
        %2775 = vmatpush1.xpose.msra.mxu0 0.0
        %2776 = vmatprep.subr.mxu0 0.0
        %2777 = vmatpush1.xpose.msra.mxu0 0.0
        %2778 = vmatprep.subr.mxu0 0.0
        %2779 = vmatpush1.xpose.msra.mxu0 0.0
        %2780 = vmatprep.subr.mxu0 0.0
        %2781 = vmatpush1.xpose.msra.mxu0 0.0
        %2782 = vmatprep.subr.mxu0 0.0
        %2783 = vmatpush1.xpose.msra.mxu0 0.0
        %2784 = vmatprep.subr.mxu0 0.0
        %2785 = vmatpush1.xpose.msra.mxu0 0.0
        %2786 = vmatprep.subr.mxu0 0.0
        %2787 = vmatpush1.xpose.msra.mxu0 0.0
        %2788 = vmatprep.subr.mxu0 0.0
        %2789 = vmatpush1.xpose.msra.mxu0 0.0
        %2790 = vmatprep.subr.mxu0 0.0
        %2791 = vmatpush1.xpose.msra.mxu0 0.0
        %2792 = vmatprep.subr.mxu0 0.0
        %2793 = vmatpush1.xpose.msra.mxu0 0.0
        %2794 = vmatprep.subr.mxu0 0.0
        %2795 = vmatpush1.xpose.msra.mxu0 0.0
        %2796 = vmatprep.subr.mxu0 0.0
        %2797 = vmatpush1.xpose.msra.mxu0 0.0
        %2798 = vmatprep.subr.mxu0 0.0
        %2799 = vmatpush1.xpose.msra.mxu0 0.0
        %2800 = vmatprep.subr.mxu0 0.0
        %2801 = vmatpush1.xpose.msra.mxu0 0.0
        %2802 = vmatprep.subr.mxu0 0.0
        %2803 = vmatpush1.xpose.msra.mxu0 0.0
        %2804 = vmatprep.subr.mxu0 0.0
        %2805 = vmatpush1.xpose.msra.mxu0 0.0
        %2806 = vmatprep.subr.mxu0 0.0
        %2807 = vmatpush1.xpose.msra.mxu0 0.0
        %2808 = vmatprep.subr.mxu0 0.0
        %2809 = vmatpush1.xpose.msra.mxu0 0.0
        %2810 = vmatprep.subr.mxu0 0.0
        %2811 = vmatpush1.xpose.msra.mxu0 0.0
        %2812 = vmatprep.subr.mxu0 0.0
        %2813 = vmatpush1.xpose.msra.mxu0 0.0
        %2814 = vmatprep.subr.mxu0 0.0
        %2815 = vmatpush1.xpose.msra.mxu0 0.0
        %2816 = vmatprep.subr.mxu0 0.0
        %2817 = vmatpush1.xpose.msra.mxu0 0.0
        %2818 = vmatprep.subr.mxu0 0.0
        %2819 = vmatpush1.xpose.msra.mxu0 0.0
        %2820 = vmatprep.subr.mxu0 0.0
        %2821 = vmatpush1.xpose.msra.mxu0 0.0
        %2822 = vmatprep.subr.mxu0 0.0
        %2823 = vmatpush1.xpose.msra.mxu0 0.0
        %2824 = vmatprep.subr.mxu0 0.0
        %2825 = vmatpush1.xpose.msra.mxu0 0.0
        %2826 = vmatprep.subr.mxu0 0.0
        %2827 = vmatpush1.xpose.msra.mxu0 0.0
        %2828 = vmatprep.subr.mxu0 0.0
        %2829 = vmatpush1.xpose.msra.mxu0 0.0
        %2830 = vmatprep.subr.mxu0 0.0
        %2831 = vmatpush1.xpose.msra.mxu0 0.0
        %2832 = vmatprep.subr.mxu0 0.0
        %2833 = vmatpush1.xpose.msra.mxu0 0.0
        %2834 = vmatprep.subr.mxu0 0.0
        %2835 = vmatpush1.xpose.msra.mxu0 0.0
        %2836 = vmatprep.mubr.f32.mxu0 0.0
        %2837 = vmatmul.mubr.f32.gmra.mrb[0].mxu0 %v2768
        %v2838 = vpop.f32.mrb[0].mxu0
        %v2839 = vadd.f32 0.0, %v2838
        %v2840 = vpop.f32.mrb[0].mxu0
        %2841 = vdwg.mxu0
        %v2842 = vsel %vm887, %v2839, -inf
        %2843 = vmax.xlane.f32.xlu0 %v2842
        %v2844 = vpop.xlane.xlu0 %2843
        %v2845 = vsub.f32 %v2839, %v2844
        %v2846 = vmul.f32 %v2845, 1.442695
        %v2847 = vpow.pop %v2846
        %v2848 = vsel %vm887, %v2847, 0.0
        %2849 = vadd.xlane.f32.xlu0 %v2848
        %v2850 = vpop.xlane.xlu0 %2849
        %v2851 = vrcp.pop %v2850
        %v2852 = vmul.f32 %v2847, %v2851
        %2853 = vrot.lane.b32.xlu0 %v2042, 72
        %v2854 = vpop.permute.xlu0 %2853
        %v2857 = vsel %vm887, %v2852, 0
        %2859 = vmatprep.subr.mxu0 0.0
        %2860 = vmatpush1.msra.mxu0 %v2854
        %2861 = vmatprep.subr.mxu0 0.0
        %2862 = vmatpush1.msra.mxu0 0.0
        %2863 = vmatprep.subr.mxu0 0.0
        %2864 = vmatpush1.msra.mxu0 0.0
        %2865 = vmatprep.subr.mxu0 0.0
        %2866 = vmatpush1.msra.mxu0 0.0
        %2867 = vmatprep.subr.mxu0 0.0
        %2868 = vmatpush1.msra.mxu0 0.0
        %2869 = vmatprep.subr.mxu0 0.0
        %2870 = vmatpush1.msra.mxu0 0.0
        %2871 = vmatprep.subr.mxu0 0.0
        %2872 = vmatpush1.msra.mxu0 0.0
        %2873 = vmatprep.subr.mxu0 0.0
        %2874 = vmatpush1.msra.mxu0 0.0
        %2875 = vmatprep.subr.mxu0 0.0
        %2876 = vmatpush1.msra.mxu0 0.0
        %2877 = vmatprep.subr.mxu0 0.0
        %2878 = vmatpush1.msra.mxu0 0.0
        %2879 = vmatprep.subr.mxu0 0.0
        %2880 = vmatpush1.msra.mxu0 0.0
        %2881 = vmatprep.subr.mxu0 0.0
        %2882 = vmatpush1.msra.mxu0 0.0
        %2883 = vmatprep.subr.mxu0 0.0
        %2884 = vmatpush1.msra.mxu0 0.0
        %2885 = vmatprep.subr.mxu0 0.0
        %2886 = vmatpush1.msra.mxu0 0.0
        %2887 = vmatprep.subr.mxu0 0.0
        %2888 = vmatpush1.msra.mxu0 0.0
        %2889 = vmatprep.subr.mxu0 0.0
        %2890 = vmatpush1.msra.mxu0 0.0
        %2891 = vmatprep.subr.mxu0 0.0
        %2892 = vmatpush1.msra.mxu0 0.0
        %2893 = vmatprep.subr.mxu0 0.0
        %2894 = vmatpush1.msra.mxu0 0.0
        %2895 = vmatprep.subr.mxu0 0.0
        %2896 = vmatpush1.msra.mxu0 0.0
        %2897 = vmatprep.subr.mxu0 0.0
        %2898 = vmatpush1.msra.mxu0 0.0
        %2899 = vmatprep.subr.mxu0 0.0
        %2900 = vmatpush1.msra.mxu0 0.0
        %2901 = vmatprep.subr.mxu0 0.0
        %2902 = vmatpush1.msra.mxu0 0.0
        %2903 = vmatprep.subr.mxu0 0.0
        %2904 = vmatpush1.msra.mxu0 0.0
        %2905 = vmatprep.subr.mxu0 0.0
        %2906 = vmatpush1.msra.mxu0 0.0
        %2907 = vmatprep.subr.mxu0 0.0
        %2908 = vmatpush1.msra.mxu0 0.0
        %2909 = vmatprep.subr.mxu0 0.0
        %2910 = vmatpush1.msra.mxu0 0.0
        %2911 = vmatprep.subr.mxu0 0.0
        %2912 = vmatpush1.msra.mxu0 0.0
        %2913 = vmatprep.subr.mxu0 0.0
        %2914 = vmatpush1.msra.mxu0 0.0
        %2915 = vmatprep.subr.mxu0 0.0
        %2916 = vmatpush1.msra.mxu0 0.0
        %2917 = vmatprep.subr.mxu0 0.0
        %2918 = vmatpush1.msra.mxu0 0.0
        %2919 = vmatprep.subr.mxu0 0.0
        %2920 = vmatpush1.msra.mxu0 0.0
        %2921 = vmatprep.subr.mxu0 0.0
        %2922 = vmatpush1.msra.mxu0 0.0
        %2923 = vmatprep.mubr.f32.mxu0 0.0
        %2924 = vmatmul.mubr.f32.gmra.mrb[0].mxu0 %v2857
        %v2925 = vpop.f32.mrb[0].mxu0
        %v2926 = vadd.f32 0.0, %v2925
        %v2927 = vpop.f32.mrb[0].mxu0
        %2928 = vdwg.mxu0
        %v2930 = vsel %vm887, %v2926, 0
        %2932 = vmatprep.subr.mxu0 0.0
        %2933 = vmatpush1.msra.mxu0 %v2048
        %2934 = vmatprep.subr.mxu0 0.0
        %2935 = vmatpush1.msra.mxu0 0.0
        %2936 = vmatprep.subr.mxu0 0.0
        %2937 = vmatpush1.msra.mxu0 0.0
        %2938 = vmatprep.subr.mxu0 0.0
        %2939 = vmatpush1.msra.mxu0 0.0
        %2940 = vmatprep.subr.mxu0 0.0
        %2941 = vmatpush1.msra.mxu0 0.0
        %2942 = vmatprep.subr.mxu0 0.0
        %2943 = vmatpush1.msra.mxu0 0.0
        %2944 = vmatprep.subr.mxu0 0.0
        %2945 = vmatpush1.msra.mxu0 0.0
        %2946 = vmatprep.subr.mxu0 0.0
        %2947 = vmatpush1.msra.mxu0 0.0
        %2948 = vmatprep.subr.mxu0 0.0
        %2949 = vmatpush1.msra.mxu0 0.0
        %2950 = vmatprep.subr.mxu0 0.0
        %2951 = vmatpush1.msra.mxu0 0.0
        %2952 = vmatprep.subr.mxu0 0.0
        %2953 = vmatpush1.msra.mxu0 0.0
        %2954 = vmatprep.subr.mxu0 0.0
        %2955 = vmatpush1.msra.mxu0 0.0
        %2956 = vmatprep.subr.mxu0 0.0
        %2957 = vmatpush1.msra.mxu0 0.0
        %2958 = vmatprep.subr.mxu0 0.0
        %2959 = vmatpush1.msra.mxu0 0.0
        %2960 = vmatprep.subr.mxu0 0.0
        %2961 = vmatpush1.msra.mxu0 0.0
        %2962 = vmatprep.subr.mxu0 0.0
        %2963 = vmatpush1.msra.mxu0 0.0
        %2964 = vmatprep.subr.mxu0 0.0
        %2965 = vmatpush1.msra.mxu0 0.0
        %2966 = vmatprep.subr.mxu0 0.0
        %2967 = vmatpush1.msra.mxu0 0.0
        %2968 = vmatprep.subr.mxu0 0.0
        %2969 = vmatpush1.msra.mxu0 0.0
        %2970 = vmatprep.subr.mxu0 0.0
        %2971 = vmatpush1.msra.mxu0 0.0
        %2972 = vmatprep.subr.mxu0 0.0
        %2973 = vmatpush1.msra.mxu0 0.0
        %2974 = vmatprep.subr.mxu0 0.0
        %2975 = vmatpush1.msra.mxu0 0.0
        %2976 = vmatprep.subr.mxu0 0.0
        %2977 = vmatpush1.msra.mxu0 0.0
        %2978 = vmatprep.subr.mxu0 0.0
        %2979 = vmatpush1.msra.mxu0 0.0
        %2980 = vmatprep.subr.mxu0 0.0
        %2981 = vmatpush1.msra.mxu0 0.0
        %2982 = vmatprep.subr.mxu0 0.0
        %2983 = vmatpush1.msra.mxu0 0.0
        %2984 = vmatprep.subr.mxu0 0.0
        %2985 = vmatpush1.msra.mxu0 0.0
        %2986 = vmatprep.subr.mxu0 0.0
        %2987 = vmatpush1.msra.mxu0 0.0
        %2988 = vmatprep.subr.mxu0 0.0
        %2989 = vmatpush1.msra.mxu0 0.0
        %2990 = vmatprep.subr.mxu0 0.0
        %2991 = vmatpush1.msra.mxu0 0.0
        %2992 = vmatprep.subr.mxu0 0.0
        %2993 = vmatpush1.msra.mxu0 0.0
        %2994 = vmatprep.subr.mxu0 0.0
        %2995 = vmatpush1.msra.mxu0 0.0
        %2996 = vmatprep.mubr.f32.mxu0 0.0
        %2997 = vmatmul.mubr.f32.gmra.mrb[0].mxu0 %v2930
        %v2998 = vpop.f32.mrb[0].mxu0
        %v2999 = vadd.f32 0.0, %v2998
        %v3000 = vpop.f32.mrb[0].mxu0
        %3001 = vdwg.mxu0
        %v3002 = vadd.f32 %v2763, %v2999
        %v3004 = vlaneseq
        %v3005 = vshrl.u32 %v3004, 7
        %v3006 = vsub.s32 0, %v3005
        %v3007 = vrot.slane %v2049, %v3006
        %v3009 = vadd.f32 %v3002, %v3007
        %v3010 = vadd.f32 %v1876, %v3009
        %v3011 = vld [vmem:[%s19] sm:$0x1]
        %v3012 = vld [vmem:[%s20] sm:$0x1]
        %v3013 = vsel %vm804, %v3010, 0.0
        %3014 = vadd.xlane.f32.xlu0 %v3013
        %v3015 = vpop.xlane.xlu0 %3014
        %v3016 = vmul.f32 %v3015, %v1852
        %v3017 = vsub.f32 %v3010, %v3016
        %v3018 = vmul.f32 %v3017, %v3017
        %v3019 = vsel %vm804, %v3018, 0.0
        %3020 = vadd.xlane.f32.xlu0 %v3019
        %v3021 = vpop.xlane.xlu0 %3020
        %v3022 = vmul.f32 %v3021, %v1852
        %v3023 = vadd.f32 %v3022, 1e-05
        %v3024 = vrsqrt.pop %v3023
        %v3025 = vmul.f32 %v3017, %v3024
        %v3027 = vlaneseq
        %v3028 = vshrl.u32 %v3027, 7
        %v3029 = vsub.s32 0, %v3028
        %v3030 = vrot.slane %v3011, %v3029
        %v3032 = vmul.f32 %v3025, %v3030
        %v3034 = vlaneseq
        %v3035 = vshrl.u32 %v3034, 7
        %v3036 = vsub.s32 0, %v3035
        %v3037 = vrot.slane %v3012, %v3036
        %v3039 = vadd.f32 %v3032, %v3037
        %v3040 = vld [vmem:[#allocation8] sm:$0xff]
        %v3041 = vld [vmem:[#allocation8 + $0x8] sm:$0xff]
        %v3042 = vld [vmem:[#allocation8 + $0x10] sm:$0xff]
        %v3043 = vld [vmem:[#allocation8 + $0x18] sm:$0xff]
        %v3044 = vld [vmem:[%s14] sm:$0x1]
        %v3046 = vlaneseq
        %v3047 = vshrl.u32 %v3046, 7
        %v3048 = vsub.s32 0, %v3047
        %v3049 = vrot.slane %v3044, %v3048
        %v3052 = vsel %vm804, %v3039, 0
        %3054 = vmatprep.subr.mxu0 0.0
        %3055 = vmatpush1.msra.mxu0 %v3040
        %3056 = vmatprep.subr.mxu0 0.0
        %3057 = vmatpush1.msra.mxu0 %v3041
        %3058 = vmatprep.subr.mxu0 0.0
        %3059 = vmatpush1.msra.mxu0 %v3042
        %3060 = vmatprep.subr.mxu0 0.0
        %3061 = vmatpush1.msra.mxu0 %v3043
        %3062 = vmatprep.subr.mxu0 0.0
        %3063 = vmatpush1.msra.mxu0 0.0
        %3064 = vmatprep.subr.mxu0 0.0
        %3065 = vmatpush1.msra.mxu0 0.0
        %3066 = vmatprep.subr.mxu0 0.0
        %3067 = vmatpush1.msra.mxu0 0.0
        %3068 = vmatprep.subr.mxu0 0.0
        %3069 = vmatpush1.msra.mxu0 0.0
        %3070 = vmatprep.subr.mxu0 0.0
        %3071 = vmatpush1.msra.mxu0 0.0
        %3072 = vmatprep.subr.mxu0 0.0
        %3073 = vmatpush1.msra.mxu0 0.0
        %3074 = vmatprep.subr.mxu0 0.0
        %3075 = vmatpush1.msra.mxu0 0.0
        %3076 = vmatprep.subr.mxu0 0.0
        %3077 = vmatpush1.msra.mxu0 0.0
        %3078 = vmatprep.subr.mxu0 0.0
        %3079 = vmatpush1.msra.mxu0 0.0
        %3080 = vmatprep.subr.mxu0 0.0
        %3081 = vmatpush1.msra.mxu0 0.0
        %3082 = vmatprep.subr.mxu0 0.0
        %3083 = vmatpush1.msra.mxu0 0.0
        %3084 = vmatprep.subr.mxu0 0.0
        %3085 = vmatpush1.msra.mxu0 0.0
        %3086 = vmatprep.subr.mxu0 0.0
        %3087 = vmatpush1.msra.mxu0 0.0
        %3088 = vmatprep.subr.mxu0 0.0
        %3089 = vmatpush1.msra.mxu0 0.0
        %3090 = vmatprep.subr.mxu0 0.0
        %3091 = vmatpush1.msra.mxu0 0.0
        %3092 = vmatprep.subr.mxu0 0.0
        %3093 = vmatpush1.msra.mxu0 0.0
        %3094 = vmatprep.subr.mxu0 0.0
        %3095 = vmatpush1.msra.mxu0 0.0
        %3096 = vmatprep.subr.mxu0 0.0
        %3097 = vmatpush1.msra.mxu0 0.0
        %3098 = vmatprep.subr.mxu0 0.0
        %3099 = vmatpush1.msra.mxu0 0.0
        %3100 = vmatprep.subr.mxu0 0.0
        %3101 = vmatpush1.msra.mxu0 0.0
        %3102 = vmatprep.subr.mxu0 0.0
        %3103 = vmatpush1.msra.mxu0 0.0
        %3104 = vmatprep.subr.mxu0 0.0
        %3105 = vmatpush1.msra.mxu0 0.0
        %3106 = vmatprep.subr.mxu0 0.0
        %3107 = vmatpush1.msra.mxu0 0.0
        %3108 = vmatprep.subr.mxu0 0.0
        %3109 = vmatpush1.msra.mxu0 0.0
        %3110 = vmatprep.subr.mxu0 0.0
        %3111 = vmatpush1.msra.mxu0 0.0
        %3112 = vmatprep.subr.mxu0 0.0
        %3113 = vmatpush1.msra.mxu0 0.0
        %3114 = vmatprep.subr.mxu0 0.0
        %3115 = vmatpush1.msra.mxu0 0.0
        %3116 = vmatprep.subr.mxu0 0.0
        %3117 = vmatpush1.msra.mxu0 0.0
        %3118 = vmatprep.mubr.f32.mxu0 0.0
        %3119 = vmatmul.mubr.f32.gmra.mrb[0].mxu0 %v3052
        %v3120 = vpop.f32.mrb[0].mxu0
        %v3121 = vadd.f32 %v3049, %v3120
        %v3122 = vpop.f32.mrb[0].mxu0
        %3123 = vdwg.mxu0
        %v3124 = vmax.f32 %v3121, 0.0
        %v3125 = vld [vmem:[%s15] sm:$0xff]
        %v3126 = vld [vmem:[%s15 + $0x8] sm:$0xff]
        %v3127 = vld [vmem:[%s15 + $0x10] sm:$0xff]
        %v3128 = vld [vmem:[%s15 + $0x18] sm:$0xff]
        %v3129 = vld [vmem:[%s15 + $0x20] sm:$0xff]
        %v3130 = vld [vmem:[%s15 + $0x28] sm:$0xff]
        %v3131 = vld [vmem:[%s15 + $0x30] sm:$0xff]
        %v3132 = vld [vmem:[%s15 + $0x38] sm:$0xff]
        %v3133 = vld [vmem:[%s15 + $0x40] sm:$0xff]
        %v3134 = vld [vmem:[%s15 + $0x48] sm:$0xff]
        %v3135 = vld [vmem:[%s15 + $0x50] sm:$0xff]
        %v3136 = vld [vmem:[%s15 + $0x58] sm:$0xff]
        %v3137 = vld [vmem:[%s15 + $0x60] sm:$0xff]
        %v3138 = vld [vmem:[%s15 + $0x68] sm:$0xff]
        %v3139 = vld [vmem:[%s15 + $0x70] sm:$0xff]
        %v3140 = vld [vmem:[%s15 + $0x78] sm:$0xff]
        %v3141 = vld [vmem:[%s16] sm:$0x1]
        %v3143 = vlaneseq
        %v3144 = vshrl.u32 %v3143, 7
        %v3145 = vsub.s32 0, %v3144
        %v3146 = vrot.slane %v3141, %v3145
        %3148 = vmatprep.subr.mxu0 0.0
        %3149 = vmatpush1.msra.mxu0 %v3125
        %3150 = vmatprep.subr.mxu0 0.0
        %3151 = vmatpush1.msra.mxu0 %v3126
        %3152 = vmatprep.subr.mxu0 0.0
        %3153 = vmatpush1.msra.mxu0 %v3127
        %3154 = vmatprep.subr.mxu0 0.0
        %3155 = vmatpush1.msra.mxu0 %v3128
        %3156 = vmatprep.subr.mxu0 0.0
        %3157 = vmatpush1.msra.mxu0 %v3129
        %3158 = vmatprep.subr.mxu0 0.0
        %3159 = vmatpush1.msra.mxu0 %v3130
        %3160 = vmatprep.subr.mxu0 0.0
        %3161 = vmatpush1.msra.mxu0 %v3131
        %3162 = vmatprep.subr.mxu0 0.0
        %3163 = vmatpush1.msra.mxu0 %v3132
        %3164 = vmatprep.subr.mxu0 0.0
        %3165 = vmatpush1.msra.mxu0 %v3133
        %3166 = vmatprep.subr.mxu0 0.0
        %3167 = vmatpush1.msra.mxu0 %v3134
        %3168 = vmatprep.subr.mxu0 0.0
        %3169 = vmatpush1.msra.mxu0 %v3135
        %3170 = vmatprep.subr.mxu0 0.0
        %3171 = vmatpush1.msra.mxu0 %v3136
        %3172 = vmatprep.subr.mxu0 0.0
        %3173 = vmatpush1.msra.mxu0 %v3137
        %3174 = vmatprep.subr.mxu0 0.0
        %3175 = vmatpush1.msra.mxu0 %v3138
        %3176 = vmatprep.subr.mxu0 0.0
        %3177 = vmatpush1.msra.mxu0 %v3139
        %3178 = vmatprep.subr.mxu0 0.0
        %3179 = vmatpush1.msra.mxu0 %v3140
        %3180 = vmatprep.subr.mxu0 0.0
        %3181 = vmatpush1.msra.mxu0 0.0
        %3182 = vmatprep.subr.mxu0 0.0
        %3183 = vmatpush1.msra.mxu0 0.0
        %3184 = vmatprep.subr.mxu0 0.0
        %3185 = vmatpush1.msra.mxu0 0.0
        %3186 = vmatprep.subr.mxu0 0.0
        %3187 = vmatpush1.msra.mxu0 0.0
        %3188 = vmatprep.subr.mxu0 0.0
        %3189 = vmatpush1.msra.mxu0 0.0
        %3190 = vmatprep.subr.mxu0 0.0
        %3191 = vmatpush1.msra.mxu0 0.0
        %3192 = vmatprep.subr.mxu0 0.0
        %3193 = vmatpush1.msra.mxu0 0.0
        %3194 = vmatprep.subr.mxu0 0.0
        %3195 = vmatpush1.msra.mxu0 0.0
        %3196 = vmatprep.subr.mxu0 0.0
        %3197 = vmatpush1.msra.mxu0 0.0
        %3198 = vmatprep.subr.mxu0 0.0
        %3199 = vmatpush1.msra.mxu0 0.0
        %3200 = vmatprep.subr.mxu0 0.0
        %3201 = vmatpush1.msra.mxu0 0.0
        %3202 = vmatprep.subr.mxu0 0.0
        %3203 = vmatpush1.msra.mxu0 0.0
        %3204 = vmatprep.subr.mxu0 0.0
        %3205 = vmatpush1.msra.mxu0 0.0
        %3206 = vmatprep.subr.mxu0 0.0
        %3207 = vmatpush1.msra.mxu0 0.0
        %3208 = vmatprep.subr.mxu0 0.0
        %3209 = vmatpush1.msra.mxu0 0.0
        %3210 = vmatprep.subr.mxu0 0.0
        %3211 = vmatpush1.msra.mxu0 0.0
        %3212 = vmatprep.mubr.f32.mxu0 0.0
        %3213 = vmatmul.mubr.f32.gmra.mrb[0].mxu0 %v3124
        %v3214 = vpop.f32.mrb[0].mxu0
        %v3215 = vadd.f32 %v3146, %v3214
        %v3216 = vpop.f32.mrb[0].mxu0
        %3217 = vdwg.mxu0
        %v3218 = vadd.f32 %v3039, %v3215
        %v3219 = vld [vmem:[%s21] sm:$0x1]
        %v3220 = vld [vmem:[%s22] sm:$0x1]
        %v3221 = vsel %vm804, %v3218, 0.0
        %3222 = vadd.xlane.f32.xlu0 %v3221
        %v3223 = vpop.xlane.xlu0 %3222
        %v3224 = vmul.f32 %v3223, %v1852
        %v3225 = vsub.f32 %v3218, %v3224
        %v3226 = vmul.f32 %v3225, %v3225
        %v3227 = vsel %vm804, %v3226, 0.0
        %3228 = vadd.xlane.f32.xlu0 %v3227
        %v3229 = vpop.xlane.xlu0 %3228
        %v3230 = vmul.f32 %v3229, %v1852
        %v3231 = vadd.f32 %v3230, 1e-05
        %v3232 = vrsqrt.pop %v3231
        %v3233 = vmul.f32 %v3225, %v3232
        %v3235 = vlaneseq
        %v3236 = vshrl.u32 %v3235, 7
        %v3237 = vsub.s32 0, %v3236
        %v3238 = vrot.slane %v3219, %v3237
        %v3240 = vmul.f32 %v3233, %v3238
        %v3242 = vlaneseq
        %v3243 = vshrl.u32 %v3242, 7
        %v3244 = vsub.s32 0, %v3243
        %v3245 = vrot.slane %v3220, %v3244
        %v3247 = vadd.f32 %v3240, %v3245
        %3248 = vst.msk [vmem:[%s789] sm:$0xff] %vm804, %v3247
        %s3249 = sand.u32 %s545, 1
        %s3250 = scalar_lea.sflag [#allocation4], %s3249
        %s3251 = sand.u32 %s545, 1
        %s3252 = smul.addr %s3251, 8
        %s3253 = scalar_lea.vmem [#allocation10], %s3252
        // Predicated region
        $region129: #{tpu_custom_call.1} parent=111 // pred_check
          %p3254 = pneg %p555
        $region130: #{tpu_custom_call.1} parent=111 // pred_check_branch
          %3256 = sbr.rel (%p3254) target = $region132
        $region131: #{tpu_custom_call.1} parent=111 // pred_region
          %s3258 = ssub.s32 128, 128
          %3259 = vsyncadd %s3250, %s3258
          %s3260 = smul.addr %s44, 128
          %s3261 = scalar_lea.hbm %s23, %s3260
          %s3263 = sshll.u32 %s3253, 4
          %s3264 = int_to_ptr.vmem [resolvable:$true] %s3263
          %3266 = dma.vmem_to_hbm [thread:$0]  %s3264, 128, %s3261, %s3250
        $region132: #{tpu_custom_call.1} parent=111 // pred_fallthru
          _
      $region112: #{tpu_custom_call.1} parent=5 // pred_fallthru
        _
      %p3267 = scmp.le.s32.totalorder 2, %s39
      // Predicated region
      $region133: #{tpu_custom_call.1} parent=5 // pred_check
        %p3268 = pneg %p3267
      $region134: #{tpu_custom_call.1} parent=5 // pred_check_branch
        %3270 = sbr.rel (%p3268) target = $region136
      $region135: #{tpu_custom_call.1} parent=5 // pred_region
        %s3271 = ssub.s32 %s39, 2
        // Predicated region
        $region137: #{tpu_custom_call.1} parent=135 // pred_check
          %p3272 = pneg %p561
        $region138: #{tpu_custom_call.1} parent=135 // pred_check_branch
          %3274 = sbr.rel (%p3272) target = $region140
        $region139: #{tpu_custom_call.1} parent=135 // pred_region
          %s3275 = sand.u32 %s546, 1
          %s3276 = scalar_lea.sflag [#allocation4], %s3275
          %s3277 = sand.u32 %s546, 1
          %s3278 = smul.addr %s3277, 8
          %s3279 = scalar_lea.vmem [#allocation10], %s3278
          %3280 = dma.done %s3276, 128
        $region140: #{tpu_custom_call.1} parent=135 // pred_fallthru
          _
      $region136: #{tpu_custom_call.1} parent=5 // pred_fallthru
        _
    $region6: #{tpu_custom_call.1} parent=1 // loop_footer
      %s43 = sadd.s32 1, %s39
    $region7: #{tpu_custom_call.1} parent=1 // loop_footer_branch
      %38 = sbr.rel target = $region3
    $region8: #{tpu_custom_call.1} parent=1 // loop_exit
      _
    %3281 = vsyncpa [#allocation3], 1
    %s3282 = scalar_lea.sflag [#allocation3], 1
    %3283 = vsyncpa %s3282, 1
    %3284 = vsyncpa [#allocation6], 1
    %s3285 = scalar_lea.sflag [#allocation6], 1
    %3286 = vsyncpa %s3285, 1
    %3287 = vsyncpa [#allocation9], 1
    %3288 = vsyncpa [#allocation4], 1
    %s3289 = scalar_lea.sflag [#allocation4], 1
    %3290 = vsyncpa %s3289, 1

</llo_original>
